<compile_context>
chip_gen: v6e
topology: v6e:2x2x1
jax: 0.10.0
libtpu: 0.0.40
codegen_flags: <defaults>
</compile_context>

<pallas_src>
import functools
import math

import jax
import jax.numpy as jnp
from jax import lax
from jax.experimental import pallas as pl
from jax.experimental.pallas import tpu as pltpu


def column_attention_kernel(qT_ref, bt_ref, x_ref, o_ref, *, approx_recip):
    # qT_ref: (D, M)      learned queries, pre-transposed     (batch-invariant)
    # bt_ref: (N, M)      learned spatial bias, transposed    (batch-invariant)
    # x_ref:  (TB, N, D)  tile of batch elements
    # o_ref:  (TB, M*D)   lane-dense flat output tile
    tb, n, d = x_ref.shape
    m = qT_ref.shape[1]

    x = x_ref[...]                                   # (TB, N, D)
    x2 = x.reshape(tb * n, d)                        # free reshape (merge leading dims)

    # scores[t, n, m] = sum_d x[t, n, d] * q[m, d]
    # Canonical MXU contraction: (TB*N, D) x (D, M); q was transposed once in the wrapper.
    s = lax.dot_general(x2, qT_ref[...],
                        dimension_numbers=(((1,), (0,)), ((), ())),
                        preferred_element_type=jnp.float32)      # (TB*N, M) f32
    s = s.reshape(tb, n, m)                          # free reshape (split leading dim)
    s = s + bt_ref[...].astype(jnp.float32)[None]

    # Numerically stable softmax over n (axis=1); all math in f32.
    s_max = jnp.max(s, axis=1, keepdims=True)        # (TB, 1, M)
    p = jnp.exp(s - s_max)
    denom = jnp.sum(p, axis=1, keepdims=True)        # (TB, 1, M)
    p = p * pl.reciprocal(denom, approx=approx_recip)

    # out[t, m, d] = sum_n p[t, n, m] * x[t, n, d]  (batched matmul over the tile).
    out = lax.dot_general(p.astype(x.dtype), x,
                          dimension_numbers=(((1,), (1,)), ((0,), (0,))),
                          preferred_element_type=jnp.float32)    # (TB, M, D) f32
    out = out.astype(o_ref.dtype)

    # Lane-dense store: scatter each column's D-slice into its flat lane window so the
    # VMEM out block is a dense (TB, M*D) slab and the writeback DMA moves dense rows.
    for mm in range(m):                               # static unroll, M is small
        o_ref[:, mm * d:(mm + 1) * d] = out[:, mm, :]


@functools.lru_cache(maxsize=1)
def _tpu_vmem_and_cores():
    """(per-core VMEM bytes, tensorcores-per-chip) with safe fallbacks."""
    vmem = 64 * 1024 * 1024                           # conservative default (v7x per-TC)
    try:
        info = pltpu.get_tpu_info()
        vmem = int(getattr(info, "vmem_capacity_bytes", vmem))
    except Exception:
        pass
    cores = 1
    try:
        kind = jax.devices()[0].device_kind.lower()
        if "v7" in kind or "tpu7" in kind:
            cores = 2
    except Exception:
        pass
    if vmem <= 96 * 1024 * 1024:                      # v7x-class chips: 64 MiB / TC, 2 TCs
        cores = max(cores, 2)
    return vmem, cores


def _sanitize_tile(tb, batch):
    """Clamp and keep the (tb, M*D) out block's sublane dim a multiple of 8 (or == B)."""
    tb = max(1, min(int(tb), batch))
    if tb != batch and tb % 8 != 0:
        tb = min(batch, ((tb + 7) // 8) * 8)
    return tb


def _pick_batch_tile(batch, m, n, d, x_bytes, out_bytes, *,
                     vmem_budget_bytes, cap=1024, min_grid_steps=1):
    """Largest per-step batch tile fitting a conservative (padded) VMEM estimate."""
    lane = lambda v: max(128, ((v + 127) // 128) * 128)

    def sub(v, nbytes):                               # sublane rows: 8 f32 / 16 bf16 / 32 i8
        rows = 8 * max(1, 4 // max(1, nbytes))
        return ((v + rows - 1) // rows) * rows

    x_blk = 2 * sub(n, x_bytes) * lane(d) * x_bytes            # double-buffered x block
    o_blk = 2 * (m * d) * out_bytes                            # double-buffered flat out block
    tmp = (3 * sub(n, 4) * lane(m) * 4                         # f32 score/prob temporaries
           + sub(n, x_bytes) * lane(m) * x_bytes               # probs cast to matmul dtype
           + sub(m, 4) * lane(d) * 4)                          # f32 out accumulator
    per_elem = x_blk + o_blk + tmp

    tb = max(1, int(vmem_budget_bytes // per_elem))
    tb = min(tb, cap, batch)
    if min_grid_steps > 1 and batch >= min_grid_steps:
        # Keep >= min_grid_steps so the parallel batch axis shards across v7x's 2 TCs.
        tb = min(tb, (batch + min_grid_steps - 1) // min_grid_steps)
    steps = (batch + tb - 1) // tb                    # balance steps (avoid tiny tail)
    tb = (batch + steps - 1) // steps
    return _sanitize_tile(tb, batch)


def column_attention(x, query, bias, *, precise=False, batch_tile=None, out_dtype=None):
    """x: (B, N, D); query: (M, D); bias: (M, N) -> (B, M, D)."""
    B, N, D = x.shape
    M = query.shape[0]
    assert query.shape == (M, D), query.shape
    assert bias.shape == (M, N), bias.shape
    out_dtype = jnp.dtype(out_dtype) if out_dtype is not None else jnp.dtype(x.dtype)

    if precise:
        x_in = x
        qT = query.T                                   # (D, M) pre-transposed once
    else:
        # bf16 matmul inputs: MXU-native on v6e/v7x and halves the dominant x DMA.
        x_in = x.astype(jnp.bfloat16)
        qT = query.T.astype(jnp.bfloat16)
    bias_t = bias.T.astype(jnp.float32)                # (N, M), transposed once outside

    vmem_cap, cores = _tpu_vmem_and_cores()
    # ~32 MiB limit on v7x (64 MiB/TC), ~64 MiB on v5e/v6e (128 MiB); budget with headroom.
    vmem_limit = int(min(max(vmem_cap // 2, 32 * 1024 * 1024), 64 * 1024 * 1024))
    tile_budget = int(vmem_limit * 0.7)

    if batch_tile is None:
        tb = _pick_batch_tile(B, M, N, D, x_in.dtype.itemsize, out_dtype.itemsize,
                              vmem_budget_bytes=tile_budget,
                              min_grid_steps=2 if cores >= 2 else 1)
    else:
        tb = _sanitize_tile(batch_tile, B)

    grid = ((B + tb - 1) // tb,)
    kernel = functools.partial(column_attention_kernel, approx_recip=not precise)
    out_flat = pl.pallas_call(
        kernel,
        out_shape=jax.ShapeDtypeStruct((B, M * D), out_dtype),
        grid_spec=pltpu.PrefetchScalarGridSpec(
            num_scalar_prefetch=0,
            grid=grid,
            in_specs=[
                pl.BlockSpec((D, M), lambda b: (0, 0)),          # q^T  (batch-invariant)
                pl.BlockSpec((N, M), lambda b: (0, 0)),          # bias^T (batch-invariant)
                pl.BlockSpec((tb, N, D), lambda b: (b, 0, 0)),   # x batch tile
            ],
            out_specs=pl.BlockSpec((tb, M * D), lambda b: (b, 0)),  # lane-dense out slab
        ),
        compiler_params=pltpu.CompilerParams(
            dimension_semantics=("parallel",),
            vmem_limit_bytes=vmem_limit,
        ),
    )(qT, bias_t, x_in)
    return out_flat.reshape(B, M, D)                   # free HBM reshape


def column_attention_ref(x, query, bias):
    attn = jnp.einsum("md,bnd->bmn", query, x) + bias[None]
    attn = jax.nn.softmax(attn, axis=-1)
    return jnp.einsum("bmn,bnd->bmd", attn, x)


if __name__ == "__main__":
    # Module config: height=4, in_height=4, dim=32  => M=16, N=16, D=32
    height, in_height, dim = 4, 4, 32
    M, N = height * height, in_height * in_height

    key = jax.random.PRNGKey(0)
    kq, kx, kb = jax.random.split(key, 3)

    # reset_parameters(): query ~ U(-1/sqrt(dim), 1/sqrt(dim)); bias is zero-initialized,
    # but we use a small non-zero bias here so the bias-add path is actually exercised.
    bound = 1.0 / math.sqrt(dim)
    query = jax.random.uniform(kq, (M, dim), jnp.float32, minval=-bound, maxval=bound)
    bias = 0.1 * jax.random.normal(kb, (M, N), jnp.float32)

    B = 64
    x = jax.random.normal(kx, (B, N, dim), jnp.float32)
    ref = column_attention_ref(x, query, bias)

    # Fast path (bf16 matmul inputs, approx reciprocal, f32 output), auto batch tile.
    out = jax.block_until_ready(column_attention(x, query, bias))
    assert out.shape == (B, M, dim)
    assert jnp.allclose(out, ref, atol=5e-2, rtol=5e-2), "bf16 fast path mismatch"

    # Forced small batch tile -> multi-step grid (exercises the tiled/pipelined path).
    out_t = jax.block_until_ready(column_attention(x, query, bias, batch_tile=16))
    assert jnp.allclose(out_t, ref, atol=5e-2, rtol=5e-2), "tiled path mismatch"

    # Precise path (pure f32 matmuls, exact reciprocal) — tight tolerance.
    out_p = jax.block_until_ready(column_attention(x[:8], query, bias, precise=True))
    ref_p = column_attention_ref(x[:8], query, bias)
    assert jnp.allclose(out_p, ref_p, atol=1e-5, rtol=1e-5), "f32 precise path mismatch"

    # Optional bf16 output (halves writeback bytes for memory-bound deployments).
    out_b = jax.block_until_ready(
        column_attention(x, query, bias, out_dtype=jnp.bfloat16))
    assert out_b.dtype == jnp.bfloat16
    assert jnp.allclose(out_b.astype(jnp.float32), ref, atol=1e-1, rtol=1e-1), \
        "bf16 output path mismatch"

    print("KERNEL_OK")
</pallas_src>

<mosaic_0001>
module attributes {stable_mosaic.version = 11 : i64} {
  func.func @column_attention_kernel(%arg0: i32, %arg1: memref<32x16xbf16, #tpu.memory_space<vmem>>, %arg2: memref<16x16xf32, #tpu.memory_space<vmem>>, %arg3: memref<32x16x32xbf16, #tpu.memory_space<vmem>>, %arg4: memref<32x512xf32, #tpu.memory_space<vmem>>) attributes {dimension_semantics = [#tpu.dimension_semantics<parallel>], iteration_bounds = array<i64: 2>, scalar_prefetch = 0 : i64, scratch_operands = 0 : i64, tpu.core_type = #tpu.core_type<tc>, window_params = [{pipeline_mode = #tpu.pipeline_mode<synchronous>, transform_indices = @transform_0, window_bounds = array<i64: 32, 16>}, {pipeline_mode = #tpu.pipeline_mode<synchronous>, transform_indices = @transform_1, window_bounds = array<i64: 16, 16>}, {transform_indices = @transform_2, window_bounds = array<i64: 32, 16, 32>}, {transform_indices = @transform_3, window_bounds = array<i64: 32, 512>}]} {
    %c0 = arith.constant 0 : index
    %c0_0 = arith.constant 0 : index
    %c0_1 = arith.constant 0 : index
    %0 = vector.load %arg3[%c0, %c0_0, %c0_1] : memref<32x16x32xbf16, #tpu.memory_space<vmem>>, vector<32x16x32xbf16>
    %1 = vector.shape_cast %0 : vector<32x16x32xbf16> to vector<512x32xbf16>
    %c0_2 = arith.constant 0 : index
    %c0_3 = arith.constant 0 : index
    %2 = vector.load %arg1[%c0_2, %c0_3] : memref<32x16xbf16, #tpu.memory_space<vmem>>, vector<32x16xbf16>
    %cst = arith.constant dense<0.000000e+00> : vector<512x16xf32>
    %3 = tpu.matmul %1, %2, %cst {dimension_numbers = #tpu.dot_dimension_numbers<[1], [0], [0], [1], [0, 0, 1, 1], [], []>} : vector<512x32xbf16>, vector<32x16xbf16>, vector<512x16xf32> -> vector<512x16xf32>
    %4 = vector.shape_cast %3 : vector<512x16xf32> to vector<32x16x16xf32>
    %c0_4 = arith.constant 0 : index
    %c0_5 = arith.constant 0 : index
    %5 = vector.load %arg2[%c0_4, %c0_5] : memref<16x16xf32, #tpu.memory_space<vmem>>, vector<16x16xf32>
    %6 = vector.shape_cast %5 : vector<16x16xf32> to vector<1x16x16xf32>
    %7 = vector.broadcast %6 : vector<1x16x16xf32> to vector<32x16x16xf32>
    %8 = arith.addf %4, %7 : vector<32x16x16xf32>
    %cst_6 = arith.constant dense<0xFF800000> : vector<32x16xf32>
    %9 = vector.multi_reduction <maximumf>, %8, %cst_6 [1] : vector<32x16x16xf32> to vector<32x16xf32>
    %10 = vector.shape_cast %9 : vector<32x16xf32> to vector<32x1x16xf32>
    %11 = vector.broadcast %10 : vector<32x1x16xf32> to vector<32x16x16xf32>
    %12 = arith.subf %8, %11 : vector<32x16x16xf32>
    %13 = math.exp %12 : vector<32x16x16xf32>
    %cst_7 = arith.constant dense<0.000000e+00> : vector<32x16xf32>
    %14 = vector.multi_reduction <add>, %13, %cst_7 [1] : vector<32x16x16xf32> to vector<32x16xf32>
    %15 = vector.shape_cast %14 : vector<32x16xf32> to vector<32x1x16xf32>
    %16 = tpu.reciprocal %15 {approx = true} : vector<32x1x16xf32> -> vector<32x1x16xf32>
    %17 = vector.broadcast %16 : vector<32x1x16xf32> to vector<32x16x16xf32>
    %18 = arith.mulf %13, %17 : vector<32x16x16xf32>
    %19 = arith.truncf %18 : vector<32x16x16xf32> to vector<32x16x16xbf16>
    %cst_8 = arith.constant dense<0.000000e+00> : vector<32x16x32xf32>
    %20 = tpu.matmul %19, %0, %cst_8 {dimension_numbers = #tpu.dot_dimension_numbers<[1], [1], [2], [2], [0, 0, 0, 2, 1, 2], [0], [0]>} : vector<32x16x16xbf16>, vector<32x16x32xbf16>, vector<32x16x32xf32> -> vector<32x16x32xf32>
    %21 = vector.extract_strided_slice %20 {offsets = [0, 0, 0], sizes = [32, 1, 32], strides = [1, 1, 1]} : vector<32x16x32xf32> to vector<32x1x32xf32>
    %22 = vector.shape_cast %21 : vector<32x1x32xf32> to vector<32x32xf32>
    %c0_9 = arith.constant 0 : index
    %c0_10 = arith.constant 0 : index
    %23 = vector.load %arg4[%c0_9, %c0_10] : memref<32x512xf32, #tpu.memory_space<vmem>>, vector<32x32xf32>
    tpu.vector_store %arg4[%c0_9, %c0_10], %22 {strides = array<i32>} : memref<32x512xf32, #tpu.memory_space<vmem>>, vector<32x32xf32>,
    %24 = vector.extract_strided_slice %20 {offsets = [0, 1, 0], sizes = [32, 1, 32], strides = [1, 1, 1]} : vector<32x16x32xf32> to vector<32x1x32xf32>
    %25 = vector.shape_cast %24 : vector<32x1x32xf32> to vector<32x32xf32>
    %c0_11 = arith.constant 0 : index
    %c32 = arith.constant 32 : index
    %26 = vector.load %arg4[%c0_11, %c32] : memref<32x512xf32, #tpu.memory_space<vmem>>, vector<32x32xf32>
    tpu.vector_store %arg4[%c0_11, %c32], %25 {strides = array<i32>} : memref<32x512xf32, #tpu.memory_space<vmem>>, vector<32x32xf32>,
    %27 = vector.extract_strided_slice %20 {offsets = [0, 2, 0], sizes = [32, 1, 32], strides = [1, 1, 1]} : vector<32x16x32xf32> to vector<32x1x32xf32>
    %28 = vector.shape_cast %27 : vector<32x1x32xf32> to vector<32x32xf32>
    %c0_12 = arith.constant 0 : index
    %c64 = arith.constant 64 : index
    %29 = vector.load %arg4[%c0_12, %c64] : memref<32x512xf32, #tpu.memory_space<vmem>>, vector<32x32xf32>
    tpu.vector_store %arg4[%c0_12, %c64], %28 {strides = array<i32>} : memref<32x512xf32, #tpu.memory_space<vmem>>, vector<32x32xf32>,
    %30 = vector.extract_strided_slice %20 {offsets = [0, 3, 0], sizes = [32, 1, 32], strides = [1, 1, 1]} : vector<32x16x32xf32> to vector<32x1x32xf32>
    %31 = vector.shape_cast %30 : vector<32x1x32xf32> to vector<32x32xf32>
    %c0_13 = arith.constant 0 : index
    %c96 = arith.constant 96 : index
    %32 = vector.load %arg4[%c0_13, %c96] : memref<32x512xf32, #tpu.memory_space<vmem>>, vector<32x32xf32>
    tpu.vector_store %arg4[%c0_13, %c96], %31 {strides = array<i32>} : memref<32x512xf32, #tpu.memory_space<vmem>>, vector<32x32xf32>,
    %33 = vector.extract_strided_slice %20 {offsets = [0, 4, 0], sizes = [32, 1, 32], strides = [1, 1, 1]} : vector<32x16x32xf32> to vector<32x1x32xf32>
    %34 = vector.shape_cast %33 : vector<32x1x32xf32> to vector<32x32xf32>
    %c0_14 = arith.constant 0 : index
    %c128 = arith.constant 128 : index
    %35 = vector.load %arg4[%c0_14, %c128] : memref<32x512xf32, #tpu.memory_space<vmem>>, vector<32x32xf32>
    tpu.vector_store %arg4[%c0_14, %c128], %34 {strides = array<i32>} : memref<32x512xf32, #tpu.memory_space<vmem>>, vector<32x32xf32>,
    %36 = vector.extract_strided_slice %20 {offsets = [0, 5, 0], sizes = [32, 1, 32], strides = [1, 1, 1]} : vector<32x16x32xf32> to vector<32x1x32xf32>
    %37 = vector.shape_cast %36 : vector<32x1x32xf32> to vector<32x32xf32>
    %c0_15 = arith.constant 0 : index
    %c160 = arith.constant 160 : index
    %38 = vector.load %arg4[%c0_15, %c160] : memref<32x512xf32, #tpu.memory_space<vmem>>, vector<32x32xf32>
    tpu.vector_store %arg4[%c0_15, %c160], %37 {strides = array<i32>} : memref<32x512xf32, #tpu.memory_space<vmem>>, vector<32x32xf32>,
    %39 = vector.extract_strided_slice %20 {offsets = [0, 6, 0], sizes = [32, 1, 32], strides = [1, 1, 1]} : vector<32x16x32xf32> to vector<32x1x32xf32>
    %40 = vector.shape_cast %39 : vector<32x1x32xf32> to vector<32x32xf32>
    %c0_16 = arith.constant 0 : index
    %c192 = arith.constant 192 : index
    %41 = vector.load %arg4[%c0_16, %c192] : memref<32x512xf32, #tpu.memory_space<vmem>>, vector<32x32xf32>
    tpu.vector_store %arg4[%c0_16, %c192], %40 {strides = array<i32>} : memref<32x512xf32, #tpu.memory_space<vmem>>, vector<32x32xf32>,
    %42 = vector.extract_strided_slice %20 {offsets = [0, 7, 0], sizes = [32, 1, 32], strides = [1, 1, 1]} : vector<32x16x32xf32> to vector<32x1x32xf32>
    %43 = vector.shape_cast %42 : vector<32x1x32xf32> to vector<32x32xf32>
    %c0_17 = arith.constant 0 : index
    %c224 = arith.constant 224 : index
    %44 = vector.load %arg4[%c0_17, %c224] : memref<32x512xf32, #tpu.memory_space<vmem>>, vector<32x32xf32>
    tpu.vector_store %arg4[%c0_17, %c224], %43 {strides = array<i32>} : memref<32x512xf32, #tpu.memory_space<vmem>>, vector<32x32xf32>,
    %45 = vector.extract_strided_slice %20 {offsets = [0, 8, 0], sizes = [32, 1, 32], strides = [1, 1, 1]} : vector<32x16x32xf32> to vector<32x1x32xf32>
    %46 = vector.shape_cast %45 : vector<32x1x32xf32> to vector<32x32xf32>
    %c0_18 = arith.constant 0 : index
    %c256 = arith.constant 256 : index
    %47 = vector.load %arg4[%c0_18, %c256] : memref<32x512xf32, #tpu.memory_space<vmem>>, vector<32x32xf32>
    tpu.vector_store %arg4[%c0_18, %c256], %46 {strides = array<i32>} : memref<32x512xf32, #tpu.memory_space<vmem>>, vector<32x32xf32>,
    %48 = vector.extract_strided_slice %20 {offsets = [0, 9, 0], sizes = [32, 1, 32], strides = [1, 1, 1]} : vector<32x16x32xf32> to vector<32x1x32xf32>
    %49 = vector.shape_cast %48 : vector<32x1x32xf32> to vector<32x32xf32>
    %c0_19 = arith.constant 0 : index
    %c288 = arith.constant 288 : index
    %50 = vector.load %arg4[%c0_19, %c288] : memref<32x512xf32, #tpu.memory_space<vmem>>, vector<32x32xf32>
    tpu.vector_store %arg4[%c0_19, %c288], %49 {strides = array<i32>} : memref<32x512xf32, #tpu.memory_space<vmem>>, vector<32x32xf32>,
    %51 = vector.extract_strided_slice %20 {offsets = [0, 10, 0], sizes = [32, 1, 32], strides = [1, 1, 1]} : vector<32x16x32xf32> to vector<32x1x32xf32>
    %52 = vector.shape_cast %51 : vector<32x1x32xf32> to vector<32x32xf32>
    %c0_20 = arith.constant 0 : index
    %c320 = arith.constant 320 : index
    %53 = vector.load %arg4[%c0_20, %c320] : memref<32x512xf32, #tpu.memory_space<vmem>>, vector<32x32xf32>
    tpu.vector_store %arg4[%c0_20, %c320], %52 {strides = array<i32>} : memref<32x512xf32, #tpu.memory_space<vmem>>, vector<32x32xf32>,
    %54 = vector.extract_strided_slice %20 {offsets = [0, 11, 0], sizes = [32, 1, 32], strides = [1, 1, 1]} : vector<32x16x32xf32> to vector<32x1x32xf32>
    %55 = vector.shape_cast %54 : vector<32x1x32xf32> to vector<32x32xf32>
    %c0_21 = arith.constant 0 : index
    %c352 = arith.constant 352 : index
    %56 = vector.load %arg4[%c0_21, %c352] : memref<32x512xf32, #tpu.memory_space<vmem>>, vector<32x32xf32>
    tpu.vector_store %arg4[%c0_21, %c352], %55 {strides = array<i32>} : memref<32x512xf32, #tpu.memory_space<vmem>>, vector<32x32xf32>,
    %57 = vector.extract_strided_slice %20 {offsets = [0, 12, 0], sizes = [32, 1, 32], strides = [1, 1, 1]} : vector<32x16x32xf32> to vector<32x1x32xf32>
    %58 = vector.shape_cast %57 : vector<32x1x32xf32> to vector<32x32xf32>
    %c0_22 = arith.constant 0 : index
    %c384 = arith.constant 384 : index
    %59 = vector.load %arg4[%c0_22, %c384] : memref<32x512xf32, #tpu.memory_space<vmem>>, vector<32x32xf32>
    tpu.vector_store %arg4[%c0_22, %c384], %58 {strides = array<i32>} : memref<32x512xf32, #tpu.memory_space<vmem>>, vector<32x32xf32>,
    %60 = vector.extract_strided_slice %20 {offsets = [0, 13, 0], sizes = [32, 1, 32], strides = [1, 1, 1]} : vector<32x16x32xf32> to vector<32x1x32xf32>
    %61 = vector.shape_cast %60 : vector<32x1x32xf32> to vector<32x32xf32>
    %c0_23 = arith.constant 0 : index
    %c416 = arith.constant 416 : index
    %62 = vector.load %arg4[%c0_23, %c416] : memref<32x512xf32, #tpu.memory_space<vmem>>, vector<32x32xf32>
    tpu.vector_store %arg4[%c0_23, %c416], %61 {strides = array<i32>} : memref<32x512xf32, #tpu.memory_space<vmem>>, vector<32x32xf32>,
    %63 = vector.extract_strided_slice %20 {offsets = [0, 14, 0], sizes = [32, 1, 32], strides = [1, 1, 1]} : vector<32x16x32xf32> to vector<32x1x32xf32>
    %64 = vector.shape_cast %63 : vector<32x1x32xf32> to vector<32x32xf32>
    %c0_24 = arith.constant 0 : index
    %c448 = arith.constant 448 : index
    %65 = vector.load %arg4[%c0_24, %c448] : memref<32x512xf32, #tpu.memory_space<vmem>>, vector<32x32xf32>
    tpu.vector_store %arg4[%c0_24, %c448], %64 {strides = array<i32>} : memref<32x512xf32, #tpu.memory_space<vmem>>, vector<32x32xf32>,
    %66 = vector.extract_strided_slice %20 {offsets = [0, 15, 0], sizes = [32, 1, 32], strides = [1, 1, 1]} : vector<32x16x32xf32> to vector<32x1x32xf32>
    %67 = vector.shape_cast %66 : vector<32x1x32xf32> to vector<32x32xf32>
    %c0_25 = arith.constant 0 : index
    %c480 = arith.constant 480 : index
    %68 = vector.load %arg4[%c0_25, %c480] : memref<32x512xf32, #tpu.memory_space<vmem>>, vector<32x32xf32>
    tpu.vector_store %arg4[%c0_25, %c480], %67 {strides = array<i32>} : memref<32x512xf32, #tpu.memory_space<vmem>>, vector<32x32xf32>,
    return
  }
  func.func @transform_0(%arg0: i32) -> (i32, i32) {
    %c0_i32 = arith.constant 0 : i32
    %c0_i32_0 = arith.constant 0 : i32
    %c0_i32_1 = arith.constant 0 : i32
    return %c0_i32, %c0_i32_0 : i32, i32
  }
  func.func @transform_1(%arg0: i32) -> (i32, i32) {
    %c0_i32 = arith.constant 0 : i32
    %c0_i32_0 = arith.constant 0 : i32
    %c0_i32_1 = arith.constant 0 : i32
    return %c0_i32, %c0_i32_0 : i32, i32
  }
  func.func @transform_2(%arg0: i32) -> (i32, i32, i32) {
    %c0_i32 = arith.constant 0 : i32
    %c0_i32_0 = arith.constant 0 : i32
    %c0_i32_1 = arith.constant 0 : i32
    return %arg0, %c0_i32, %c0_i32_0 : i32, i32, i32
  }
  func.func @transform_3(%arg0: i32) -> (i32, i32) {
    %c0_i32 = arith.constant 0 : i32
    %c0_i32_0 = arith.constant 0 : i32
    return %arg0, %c0_i32 : i32, i32
  }
}

</mosaic_0001>

<llo_original>
// kernel: tpu_custom_call.1
$region0: #{tpu_custom_call.1}
  #allocation0 [shape = 'u32[]', space=smem, size = 0x4, offset = 0x4, fixed_abs, tag = 'smem constant byte address 0x4 - core index']
  #allocation1 [shape = 'u32[144,128]{1,0:T(1,128)}', space=vmem, size = 0x12000, scoped, tag = 'internal scratch']
  %s0 = inlined_call_operand.vmem [shape: bf16[32,16], index: 0, kind: input, shape index: {}]
  %s1 = inlined_call_operand.vmem [shape: f32[16,16], index: 1, kind: input, shape index: {}]
  %s2 = inlined_call_operand.vmem [shape: bf16[64,16,32], index: 2, kind: input, shape index: {}]
  %s3 = inlined_call_operand.hbm [shape: f32[64,512], index: 3, kind: output, shape index: {}]
  %s4 = sld [smem:[#allocation0]]
  $region45: #{tpu_custom_call.1} parent=0
    _
  %s6 = ssub.s32 1, %s4
  %s7 = scalar_select 0, %s6, %s4
  $region1: #{tpu_custom_call.1} parent=0
    #allocation2 [shape = 'u8[131072]{0}', space=vmem, size = 0x20000, scoped, tag = 'output window, operand 0']
    #allocation3 [shape = 's32[2]{0}', space=sflag, size = 0x8, scoped, tag = 'scoped memory for tpu_custom_call.1']
    %8 = vsyncpa [#allocation3], 0
    %s9 = scalar_lea.sflag [#allocation3], 1
    %10 = vsyncpa %s9, 0
    loop: start=0, step=1, limit=4
    $region2: #{tpu_custom_call.1} parent=1 // loop_pre_header
      _
    $region3: #{tpu_custom_call.1} parent=1 // loop_header
      %s12 = sphi 0, %s16
      %p13 = scmp.ge.s32.totalorder %s12, 4
      %s20 = sphi 0, %s20
      %s22 = sphi 0, %s20
      %s23 = sphi 0, %s22
      %s37 = sphi 0, %s23
      %s41 = sphi 0, %s41
      %s43 = sphi 0, %s41
      %s44 = sphi 0, %s43
      %s58 = sphi 0, %s44
      %s64 = sphi 0, %s66
      %s67 = sphi 0, %s64
      %s68 = sphi 0, %s67
      %s84 = sphi 0, %s68
      %s90 = sphi 0, %s92
      %s93 = sphi 0, %s90
      %s94 = sphi 0, %s93
      %s110 = sphi 0, %s94
    $region4: #{tpu_custom_call.1} parent=1 // loop_header_branch
      %15 = sbr.rel (%p13) target = $region8
    $region5: #{tpu_custom_call.1} parent=1 // loop_body
      %s17 = ssub.s32 %s12, 1
      %s18 = ssub.s32 %s12, 2
      %s19 = sadd.s32 %s12, 1
      %s21 = sadd.s32 %s20, 1
      %p24 = scmp.eq.s32.totalorder %s12, 1
      %p25 = scmp.ne.s32.totalorder %s20, %s22
      %p26 = scmp.eq.s32.totalorder %s12, 0
      %p27 = por %p25, %p26
      %p28 = scmp.ne.s32.totalorder %s20, %s22
      %p29 = scmp.eq.s32.totalorder %s17, 1
      %p30 = por %p28, %p29
      %p31 = scmp.ne.s32.totalorder %s22, %s23
      %p32 = scmp.eq.s32.totalorder %s17, 0
      %p33 = por %p31, %p32
      %p34 = scmp.ne.s32.totalorder %s22, %s23
      %p35 = scmp.eq.s32.totalorder %s18, 1
      %p36 = por %p34, %p35
      %p38 = scmp.ne.s32.totalorder %s23, %s37
      %p39 = scmp.eq.s32.totalorder %s18, 0
      %p40 = por %p38, %p39
      %s42 = sadd.s32 %s41, 1
      %p45 = scmp.eq.s32.totalorder %s12, 1
      %p46 = scmp.ne.s32.totalorder %s41, %s43
      %p47 = scmp.eq.s32.totalorder %s12, 0
      %p48 = por %p46, %p47
      %p49 = scmp.ne.s32.totalorder %s41, %s43
      %p50 = scmp.eq.s32.totalorder %s17, 1
      %p51 = por %p49, %p50
      %p52 = scmp.ne.s32.totalorder %s43, %s44
      %p53 = scmp.eq.s32.totalorder %s17, 0
      %p54 = por %p52, %p53
      %p55 = scmp.ne.s32.totalorder %s43, %s44
      %p56 = scmp.eq.s32.totalorder %s18, 1
      %p57 = por %p55, %p56
      %p59 = scmp.ne.s32.totalorder %s44, %s58
      %p60 = scmp.eq.s32.totalorder %s18, 0
      %p61 = por %p59, %p60
      %s62 = ssub.s32 %s12, %s19
      %p63 = scmp.eq.s32.totalorder %s62, 0
      %s65 = sadd.s32 %s64, 1
      %s66 = scalar_select %p63, %s64, %s65
      %p69 = pneg %p63
      %p70 = scmp.eq.s32.totalorder %s12, 1
      %p71 = por %p69, %p70
      %p72 = scmp.ne.s32.totalorder %s64, %s67
      %p73 = scmp.eq.s32.totalorder %s12, 0
      %p74 = por %p72, %p73
      %p75 = scmp.ne.s32.totalorder %s64, %s67
      %p76 = scmp.eq.s32.totalorder %s17, 1
      %p77 = por %p75, %p76
      %p78 = scmp.ne.s32.totalorder %s67, %s68
      %p79 = scmp.eq.s32.totalorder %s17, 0
      %p80 = por %p78, %p79
      %p81 = scmp.ne.s32.totalorder %s67, %s68
      %p82 = scmp.eq.s32.totalorder %s18, 1
      %p83 = por %p81, %p82
      %p85 = scmp.ne.s32.totalorder %s68, %s84
      %p86 = scmp.eq.s32.totalorder %s18, 0
      %p87 = por %p85, %p86
      %s88 = ssub.s32 %s12, %s19
      %p89 = scmp.eq.s32.totalorder %s88, 0
      %s91 = sadd.s32 %s90, 1
      %s92 = scalar_select %p89, %s90, %s91
      %p95 = pneg %p89
      %p96 = scmp.eq.s32.totalorder %s12, 1
      %p97 = por %p95, %p96
      %p98 = scmp.ne.s32.totalorder %s90, %s93
      %p99 = scmp.eq.s32.totalorder %s12, 0
      %p100 = por %p98, %p99
      %p101 = scmp.ne.s32.totalorder %s90, %s93
      %p102 = scmp.eq.s32.totalorder %s17, 1
      %p103 = por %p101, %p102
      %p104 = scmp.ne.s32.totalorder %s93, %s94
      %p105 = scmp.eq.s32.totalorder %s17, 0
      %p106 = por %p104, %p105
      %p107 = scmp.ne.s32.totalorder %s93, %s94
      %p108 = scmp.eq.s32.totalorder %s18, 1
      %p109 = por %p107, %p108
      %p111 = scmp.ne.s32.totalorder %s94, %s110
      %p112 = scmp.eq.s32.totalorder %s18, 0
      %p113 = por %p111, %p112
      %p114 = scmp.le.s32.totalorder 1, %s12
      %p115 = scmp.lt.s32.totalorder %s12, 3
      %p116 = pnand %p114, %p115
      %p117 = pneg %p116
      // Predicated region
      $region9: #{tpu_custom_call.1} parent=5 // pred_check
        _
      $region10: #{tpu_custom_call.1} parent=5 // pred_check_branch
        %119 = sbr.rel (%p116) target = $region12
      $region11: #{tpu_custom_call.1} parent=5 // pred_region
        %s120 = ssub.s32 %s12, 1
        // Predicated region
        $region13: #{tpu_custom_call.1} parent=11 // pred_check
          %p121 = pneg %p33
        $region14: #{tpu_custom_call.1} parent=11 // pred_check_branch
          %123 = sbr.rel (%p121) target = $region16
        $region15: #{tpu_custom_call.1} parent=11 // pred_region
          _
        $region16: #{tpu_custom_call.1} parent=11 // pred_fallthru
          _
        // Predicated region
        $region17: #{tpu_custom_call.1} parent=11 // pred_check
          %p124 = pneg %p54
        $region18: #{tpu_custom_call.1} parent=11 // pred_check_branch
          %126 = sbr.rel (%p124) target = $region20
        $region19: #{tpu_custom_call.1} parent=11 // pred_region
          _
        $region20: #{tpu_custom_call.1} parent=11 // pred_fallthru
          _
      $region12: #{tpu_custom_call.1} parent=5 // pred_fallthru
        _
      %p127 = scmp.lt.s32.totalorder %s12, 2
      // Predicated region
      $region21: #{tpu_custom_call.1} parent=5 // pred_check
        %p128 = pneg %p127
      $region22: #{tpu_custom_call.1} parent=5 // pred_check_branch
        %130 = sbr.rel (%p128) target = $region24
      $region23: #{tpu_custom_call.1} parent=5 // pred_region
        // Predicated region
        $region25: #{tpu_custom_call.1} parent=23 // pred_check
          %p131 = pneg %p74
        $region26: #{tpu_custom_call.1} parent=23 // pred_check_branch
          %133 = sbr.rel (%p131) target = $region28
        $region27: #{tpu_custom_call.1} parent=23 // pred_region
          %s134 = smul.u32 32, %s12
          %p135 = scmp.lt.s32.totalorder %s134, 63
          %s136 = scalar_select %p135, %s134, 63
          %s137 = smul.addr %s136, 2
          %s138 = smul.addr %s137, 4
          %s139 = scalar_lea.vmem %s2, %s138
          %s140 = smul.u32 32, %s12
        $region28: #{tpu_custom_call.1} parent=23 // pred_fallthru
          _
      $region24: #{tpu_custom_call.1} parent=5 // pred_fallthru
        _
      %p141 = scmp.le.s32.totalorder 1, %s12
      %p142 = scmp.lt.s32.totalorder %s12, 3
      %p143 = pnand %p141, %p142
      %p144 = pneg %p143
      // Predicated region
      $region29: #{tpu_custom_call.1} parent=5 // pred_check
        _
      $region30: #{tpu_custom_call.1} parent=5 // pred_check_branch
        %146 = sbr.rel (%p143) target = $region32
      $region31: #{tpu_custom_call.1} parent=5 // pred_region
        %s147 = ssub.s32 %s12, 1
        %p148 = pneg %p33
        %p149 = pneg %p30
        %p150 = pneg %p54
        %p151 = pneg %p51
        %s152 = smul.u32 32, %s17
        %p153 = scmp.lt.s32.totalorder %s152, 63
        %s154 = scalar_select %p153, %s152, 63
        %s155 = smul.addr %s154, 2
        %s156 = smul.addr %s155, 4
        %s157 = scalar_lea.vmem %s2, %s156
        %p158 = pneg %p80
        %p159 = pneg %p77
        %p160 = pneg %p106
        %p161 = pneg %p103
        %s162 = sand.u32 %s93, 1
        %s163 = scalar_lea.sflag [#allocation3], %s162
        %s164 = sand.u32 %s93, 1
        %s165 = smul.addr %s164, 128
        %s166 = scalar_lea.vmem [#allocation2], %s165
        %s167 = smul.u32 32, %s17
        %p168 = scmp.lt.s32.totalorder %s167, 63
        %s169 = scalar_select %p168, %s167, 63
        %s170 = smul.addr %s169, 2
        %s171 = smul.addr %s170, 4
        %s172 = scalar_lea.vmem %s2, %s171
        %s173 = smul.u32 32, %s17
        %s174 = smul.u32 4, %s17
        %v176 = vld [vmem:[%s172] sm:$0xf]
        %v177 = vld [vmem:[%s172 + $0x4] sm:$0xf]
        %v178 = vld [vmem:[%s172 + $0x8] sm:$0xf]
        %v179 = vld [vmem:[%s172 + $0xc] sm:$0xf]
        %v180 = vld [vmem:[%s172 + $0x10] sm:$0xf]
        %v181 = vld [vmem:[%s172 + $0x14] sm:$0xf]
        %v182 = vld [vmem:[%s172 + $0x18] sm:$0xf]
        %v183 = vld [vmem:[%s172 + $0x1c] sm:$0xf]
        %v184 = vld [vmem:[%s172 + $0x20] sm:$0xf]
        %v185 = vld [vmem:[%s172 + $0x24] sm:$0xf]
        %v186 = vld [vmem:[%s172 + $0x28] sm:$0xf]
        %v187 = vld [vmem:[%s172 + $0x2c] sm:$0xf]
        %v188 = vld [vmem:[%s172 + $0x30] sm:$0xf]
        %v189 = vld [vmem:[%s172 + $0x34] sm:$0xf]
        %v190 = vld [vmem:[%s172 + $0x38] sm:$0xf]
        %v191 = vld [vmem:[%s172 + $0x3c] sm:$0xf]
        %v192 = vld [vmem:[%s172 + $0x40] sm:$0xf]
        %v193 = vld [vmem:[%s172 + $0x44] sm:$0xf]
        %v194 = vld [vmem:[%s172 + $0x48] sm:$0xf]
        %v195 = vld [vmem:[%s172 + $0x4c] sm:$0xf]
        %v196 = vld [vmem:[%s172 + $0x50] sm:$0xf]
        %v197 = vld [vmem:[%s172 + $0x54] sm:$0xf]
        %v198 = vld [vmem:[%s172 + $0x58] sm:$0xf]
        %v199 = vld [vmem:[%s172 + $0x5c] sm:$0xf]
        %v200 = vld [vmem:[%s172 + $0x60] sm:$0xf]
        %v201 = vld [vmem:[%s172 + $0x64] sm:$0xf]
        %v202 = vld [vmem:[%s172 + $0x68] sm:$0xf]
        %v203 = vld [vmem:[%s172 + $0x6c] sm:$0xf]
        %v204 = vld [vmem:[%s172 + $0x70] sm:$0xf]
        %v205 = vld [vmem:[%s172 + $0x74] sm:$0xf]
        %v206 = vld [vmem:[%s172 + $0x78] sm:$0xf]
        %v207 = vld [vmem:[%s172 + $0x7c] sm:$0xf]
        %v208 = vld [vmem:[%s172 + $0x80] sm:$0xf]
        %v209 = vld [vmem:[%s172 + $0x84] sm:$0xf]
        %v210 = vld [vmem:[%s172 + $0x88] sm:$0xf]
        %v211 = vld [vmem:[%s172 + $0x8c] sm:$0xf]
        %v212 = vld [vmem:[%s172 + $0x90] sm:$0xf]
        %v213 = vld [vmem:[%s172 + $0x94] sm:$0xf]
        %v214 = vld [vmem:[%s172 + $0x98] sm:$0xf]
        %v215 = vld [vmem:[%s172 + $0x9c] sm:$0xf]
        %v216 = vld [vmem:[%s172 + $0xa0] sm:$0xf]
        %v217 = vld [vmem:[%s172 + $0xa4] sm:$0xf]
        %v218 = vld [vmem:[%s172 + $0xa8] sm:$0xf]
        %v219 = vld [vmem:[%s172 + $0xac] sm:$0xf]
        %v220 = vld [vmem:[%s172 + $0xb0] sm:$0xf]
        %v221 = vld [vmem:[%s172 + $0xb4] sm:$0xf]
        %v222 = vld [vmem:[%s172 + $0xb8] sm:$0xf]
        %v223 = vld [vmem:[%s172 + $0xbc] sm:$0xf]
        %v224 = vld [vmem:[%s172 + $0xc0] sm:$0xf]
        %v225 = vld [vmem:[%s172 + $0xc4] sm:$0xf]
        %v226 = vld [vmem:[%s172 + $0xc8] sm:$0xf]
        %v227 = vld [vmem:[%s172 + $0xcc] sm:$0xf]
        %v228 = vld [vmem:[%s172 + $0xd0] sm:$0xf]
        %v229 = vld [vmem:[%s172 + $0xd4] sm:$0xf]
        %v230 = vld [vmem:[%s172 + $0xd8] sm:$0xf]
        %v231 = vld [vmem:[%s172 + $0xdc] sm:$0xf]
        %v232 = vld [vmem:[%s172 + $0xe0] sm:$0xf]
        %v233 = vld [vmem:[%s172 + $0xe4] sm:$0xf]
        %v234 = vld [vmem:[%s172 + $0xe8] sm:$0xf]
        %v235 = vld [vmem:[%s172 + $0xec] sm:$0xf]
        %v236 = vld [vmem:[%s172 + $0xf0] sm:$0xf]
        %v237 = vld [vmem:[%s172 + $0xf4] sm:$0xf]
        %v238 = vld [vmem:[%s172 + $0xf8] sm:$0xf]
        %v239 = vld [vmem:[%s172 + $0xfc] sm:$0xf]
        %v240 = vld [vmem:[%s0] sm:$0xf]
        %v241 = vld [vmem:[%s0 + $0x4] sm:$0xf]
        %v242 = vld [vmem:[%s0 + $0x8] sm:$0xf]
        %v243 = vld [vmem:[%s0 + $0xc] sm:$0xf]
        %v308 = vunpack.c.l.b16 %v176
        %v309 = vunpack.c.l.b16 %v177
        %v310 = vunpack.c.l.b16 %v178
        %v311 = vunpack.c.l.b16 %v179
        %v312 = vunpack.c.l.b16 %v180
        %v313 = vunpack.c.l.b16 %v181
        %v314 = vunpack.c.l.b16 %v182
        %v315 = vunpack.c.l.b16 %v183
        %v316 = vunpack.c.l.b16 %v184
        %v317 = vunpack.c.l.b16 %v185
        %v318 = vunpack.c.l.b16 %v186
        %v319 = vunpack.c.l.b16 %v187
        %v320 = vunpack.c.l.b16 %v188
        %v321 = vunpack.c.l.b16 %v189
        %v322 = vunpack.c.l.b16 %v190
        %v323 = vunpack.c.l.b16 %v191
        %v324 = vunpack.c.l.b16 %v192
        %v325 = vunpack.c.l.b16 %v193
        %v326 = vunpack.c.l.b16 %v194
        %v327 = vunpack.c.l.b16 %v195
        %v328 = vunpack.c.l.b16 %v196
        %v329 = vunpack.c.l.b16 %v197
        %v330 = vunpack.c.l.b16 %v198
        %v331 = vunpack.c.l.b16 %v199
        %v332 = vunpack.c.l.b16 %v200
        %v333 = vunpack.c.l.b16 %v201
        %v334 = vunpack.c.l.b16 %v202
        %v335 = vunpack.c.l.b16 %v203
        %v336 = vunpack.c.l.b16 %v204
        %v337 = vunpack.c.l.b16 %v205
        %v338 = vunpack.c.l.b16 %v206
        %v339 = vunpack.c.l.b16 %v207
        %v340 = vunpack.c.l.b16 %v208
        %v341 = vunpack.c.l.b16 %v209
        %v342 = vunpack.c.l.b16 %v210
        %v343 = vunpack.c.l.b16 %v211
        %v344 = vunpack.c.l.b16 %v212
        %v345 = vunpack.c.l.b16 %v213
        %v346 = vunpack.c.l.b16 %v214
        %v347 = vunpack.c.l.b16 %v215
        %v348 = vunpack.c.l.b16 %v216
        %v349 = vunpack.c.l.b16 %v217
        %v350 = vunpack.c.l.b16 %v218
        %v351 = vunpack.c.l.b16 %v219
        %v352 = vunpack.c.l.b16 %v220
        %v353 = vunpack.c.l.b16 %v221
        %v354 = vunpack.c.l.b16 %v222
        %v355 = vunpack.c.l.b16 %v223
        %v356 = vunpack.c.l.b16 %v224
        %v357 = vunpack.c.l.b16 %v225
        %v358 = vunpack.c.l.b16 %v226
        %v359 = vunpack.c.l.b16 %v227
        %v360 = vunpack.c.l.b16 %v228
        %v361 = vunpack.c.l.b16 %v229
        %v362 = vunpack.c.l.b16 %v230
        %v363 = vunpack.c.l.b16 %v231
        %v364 = vunpack.c.l.b16 %v232
        %v365 = vunpack.c.l.b16 %v233
        %v366 = vunpack.c.l.b16 %v234
        %v367 = vunpack.c.l.b16 %v235
        %v368 = vunpack.c.l.b16 %v236
        %v369 = vunpack.c.l.b16 %v237
        %v370 = vunpack.c.l.b16 %v238
        %v371 = vunpack.c.l.b16 %v239
        %v372 = vpack.c.b16 %v309, %v308
        %v373 = vpack.c.b16 %v311, %v310
        %v374 = vpack.c.b16 %v313, %v312
        %v375 = vpack.c.b16 %v315, %v314
        %v376 = vpack.c.b16 %v317, %v316
        %v377 = vpack.c.b16 %v319, %v318
        %v378 = vpack.c.b16 %v321, %v320
        %v379 = vpack.c.b16 %v323, %v322
        %v380 = vpack.c.b16 %v325, %v324
        %v381 = vpack.c.b16 %v327, %v326
        %v382 = vpack.c.b16 %v329, %v328
        %v383 = vpack.c.b16 %v331, %v330
        %v384 = vpack.c.b16 %v333, %v332
        %v385 = vpack.c.b16 %v335, %v334
        %v386 = vpack.c.b16 %v337, %v336
        %v387 = vpack.c.b16 %v339, %v338
        %v388 = vpack.c.b16 %v341, %v340
        %v389 = vpack.c.b16 %v343, %v342
        %v390 = vpack.c.b16 %v345, %v344
        %v391 = vpack.c.b16 %v347, %v346
        %v392 = vpack.c.b16 %v349, %v348
        %v393 = vpack.c.b16 %v351, %v350
        %v394 = vpack.c.b16 %v353, %v352
        %v395 = vpack.c.b16 %v355, %v354
        %v396 = vpack.c.b16 %v357, %v356
        %v397 = vpack.c.b16 %v359, %v358
        %v398 = vpack.c.b16 %v361, %v360
        %v399 = vpack.c.b16 %v363, %v362
        %v400 = vpack.c.b16 %v365, %v364
        %v401 = vpack.c.b16 %v367, %v366
        %v402 = vpack.c.b16 %v369, %v368
        %v403 = vpack.c.b16 %v371, %v370
        %v408 = vunpack.c.l.b16 %v240
        %v409 = vunpack.c.l.b16 %v241
        %v410 = vunpack.c.l.b16 %v242
        %v411 = vunpack.c.l.b16 %v243
        %v412 = vpack.c.b16 %v409, %v408
        %v413 = vpack.c.b16 %v411, %v410
        %vm416 = vcmask 261120
        %v418 = vsel %vm416, %v372, 0
        %v421 = vsel %vm416, %v373, 0
        %v424 = vsel %vm416, %v374, 0
        %v427 = vsel %vm416, %v375, 0
        %v430 = vsel %vm416, %v376, 0
        %v433 = vsel %vm416, %v377, 0
        %v436 = vsel %vm416, %v378, 0
        %v439 = vsel %vm416, %v379, 0
        %v442 = vsel %vm416, %v380, 0
        %v445 = vsel %vm416, %v381, 0
        %v448 = vsel %vm416, %v382, 0
        %v451 = vsel %vm416, %v383, 0
        %v454 = vsel %vm416, %v384, 0
        %v457 = vsel %vm416, %v385, 0
        %v460 = vsel %vm416, %v386, 0
        %v463 = vsel %vm416, %v387, 0
        %v466 = vsel %vm416, %v388, 0
        %v469 = vsel %vm416, %v389, 0
        %v472 = vsel %vm416, %v390, 0
        %v475 = vsel %vm416, %v391, 0
        %v478 = vsel %vm416, %v392, 0
        %v481 = vsel %vm416, %v393, 0
        %v484 = vsel %vm416, %v394, 0
        %v487 = vsel %vm416, %v395, 0
        %v490 = vsel %vm416, %v396, 0
        %v493 = vsel %vm416, %v397, 0
        %v496 = vsel %vm416, %v398, 0
        %v499 = vsel %vm416, %v399, 0
        %v502 = vsel %vm416, %v400, 0
        %v505 = vsel %vm416, %v401, 0
        %v508 = vsel %vm416, %v402, 0
        %v511 = vsel %vm416, %v403, 0
        %513 = vmatprep.subr.bf16.mxu0 0
        %514 = vmatpush1.bf16.msra.mxu0 0
        %515 = vmatprep.subr.bf16.mxu0 0
        %516 = vmatpush1.bf16.msra.mxu0 0
        %517 = vmatprep.subr.bf16.mxu0 0
        %518 = vmatpush1.bf16.msra.mxu0 0
        %519 = vmatprep.subr.bf16.mxu0 0
        %520 = vmatpush1.bf16.msra.mxu0 0
        %521 = vmatprep.subr.bf16.mxu0 0
        %522 = vmatpush1.bf16.msra.mxu0 0
        %523 = vmatprep.subr.bf16.mxu0 0
        %524 = vmatpush1.bf16.msra.mxu0 0
        %525 = vmatprep.subr.bf16.mxu0 0
        %526 = vmatpush1.bf16.msra.mxu0 %v413
        %527 = vmatprep.subr.bf16.mxu0 0
        %528 = vmatpush1.bf16.msra.mxu0 %v412
        %529 = vmatprep.subr.bf16.mxu0 0
        %530 = vmatpush2.bf16.msra.mxu0 0
        %531 = vmatprep.subr.bf16.mxu0 0
        %532 = vmatpush2.bf16.msra.mxu0 0
        %533 = vmatprep.subr.bf16.mxu0 0
        %534 = vmatpush2.bf16.msra.mxu0 0
        %535 = vmatprep.subr.bf16.mxu0 0
        %536 = vmatpush2.bf16.msra.mxu0 0
        %537 = vmatprep.subr.bf16.mxu0 0
        %538 = vmatpush2.bf16.msra.mxu0 0
        %539 = vmatprep.subr.bf16.mxu0 0
        %540 = vmatpush2.bf16.msra.mxu0 0
        %541 = vmatprep.subr.bf16.mxu0 0
        %542 = vmatpush2.bf16.msra.mxu0 0
        %543 = vmatprep.subr.bf16.mxu0 0
        %544 = vmatpush2.bf16.msra.mxu0 0
        %545 = vmatprep.mubr.bf16.mxu0 0
        %546 = vmatmul.mubr.bf16.gmra.mxu0 %v418
        %v547 = vpop.f32.mrf.mxu0
        %v548 = vadd.f32 0.0, %v547
        %v549 = vpop.f32.mrf.mxu0
        %v550 = vpop.f32.mrf.mxu0
        %v551 = vadd.f32 0.0, %v550
        %v552 = vpop.f32.mrf.mxu0
        %553 = vmatprep.mubr.bf16.mxu0 0
        %554 = vmatmul.mubr.bf16.gmra.mxu0 %v421
        %v555 = vpop.f32.mrf.mxu0
        %v556 = vadd.f32 0.0, %v555
        %v557 = vpop.f32.mrf.mxu0
        %v558 = vpop.f32.mrf.mxu0
        %v559 = vadd.f32 0.0, %v558
        %v560 = vpop.f32.mrf.mxu0
        %561 = vmatprep.mubr.bf16.mxu0 0
        %562 = vmatmul.mubr.bf16.gmra.mxu0 %v424
        %v563 = vpop.f32.mrf.mxu0
        %v564 = vadd.f32 0.0, %v563
        %v565 = vpop.f32.mrf.mxu0
        %v566 = vpop.f32.mrf.mxu0
        %v567 = vadd.f32 0.0, %v566
        %v568 = vpop.f32.mrf.mxu0
        %569 = vmatprep.mubr.bf16.mxu0 0
        %570 = vmatmul.mubr.bf16.gmra.mxu0 %v427
        %v571 = vpop.f32.mrf.mxu0
        %v572 = vadd.f32 0.0, %v571
        %v573 = vpop.f32.mrf.mxu0
        %v574 = vpop.f32.mrf.mxu0
        %v575 = vadd.f32 0.0, %v574
        %v576 = vpop.f32.mrf.mxu0
        %577 = vmatprep.mubr.bf16.mxu0 0
        %578 = vmatmul.mubr.bf16.gmra.mxu0 %v430
        %v579 = vpop.f32.mrf.mxu0
        %v580 = vadd.f32 0.0, %v579
        %v581 = vpop.f32.mrf.mxu0
        %v582 = vpop.f32.mrf.mxu0
        %v583 = vadd.f32 0.0, %v582
        %v584 = vpop.f32.mrf.mxu0
        %585 = vmatprep.mubr.bf16.mxu0 0
        %586 = vmatmul.mubr.bf16.gmra.mxu0 %v433
        %v587 = vpop.f32.mrf.mxu0
        %v588 = vadd.f32 0.0, %v587
        %v589 = vpop.f32.mrf.mxu0
        %v590 = vpop.f32.mrf.mxu0
        %v591 = vadd.f32 0.0, %v590
        %v592 = vpop.f32.mrf.mxu0
        %593 = vmatprep.mubr.bf16.mxu0 0
        %594 = vmatmul.mubr.bf16.gmra.mxu0 %v436
        %v595 = vpop.f32.mrf.mxu0
        %v596 = vadd.f32 0.0, %v595
        %v597 = vpop.f32.mrf.mxu0
        %v598 = vpop.f32.mrf.mxu0
        %v599 = vadd.f32 0.0, %v598
        %v600 = vpop.f32.mrf.mxu0
        %601 = vmatprep.mubr.bf16.mxu0 0
        %602 = vmatmul.mubr.bf16.gmra.mxu0 %v439
        %v603 = vpop.f32.mrf.mxu0
        %v604 = vadd.f32 0.0, %v603
        %v605 = vpop.f32.mrf.mxu0
        %v606 = vpop.f32.mrf.mxu0
        %v607 = vadd.f32 0.0, %v606
        %v608 = vpop.f32.mrf.mxu0
        %609 = vmatprep.mubr.bf16.mxu0 0
        %610 = vmatmul.mubr.bf16.gmra.mxu0 %v442
        %v611 = vpop.f32.mrf.mxu0
        %v612 = vadd.f32 0.0, %v611
        %v613 = vpop.f32.mrf.mxu0
        %v614 = vpop.f32.mrf.mxu0
        %v615 = vadd.f32 0.0, %v614
        %v616 = vpop.f32.mrf.mxu0
        %617 = vmatprep.mubr.bf16.mxu0 0
        %618 = vmatmul.mubr.bf16.gmra.mxu0 %v445
        %v619 = vpop.f32.mrf.mxu0
        %v620 = vadd.f32 0.0, %v619
        %v621 = vpop.f32.mrf.mxu0
        %v622 = vpop.f32.mrf.mxu0
        %v623 = vadd.f32 0.0, %v622
        %v624 = vpop.f32.mrf.mxu0
        %625 = vmatprep.mubr.bf16.mxu0 0
        %626 = vmatmul.mubr.bf16.gmra.mxu0 %v448
        %v627 = vpop.f32.mrf.mxu0
        %v628 = vadd.f32 0.0, %v627
        %v629 = vpop.f32.mrf.mxu0
        %v630 = vpop.f32.mrf.mxu0
        %v631 = vadd.f32 0.0, %v630
        %v632 = vpop.f32.mrf.mxu0
        %633 = vmatprep.mubr.bf16.mxu0 0
        %634 = vmatmul.mubr.bf16.gmra.mxu0 %v451
        %v635 = vpop.f32.mrf.mxu0
        %v636 = vadd.f32 0.0, %v635
        %v637 = vpop.f32.mrf.mxu0
        %v638 = vpop.f32.mrf.mxu0
        %v639 = vadd.f32 0.0, %v638
        %v640 = vpop.f32.mrf.mxu0
        %641 = vmatprep.mubr.bf16.mxu0 0
        %642 = vmatmul.mubr.bf16.gmra.mxu0 %v454
        %v643 = vpop.f32.mrf.mxu0
        %v644 = vadd.f32 0.0, %v643
        %v645 = vpop.f32.mrf.mxu0
        %v646 = vpop.f32.mrf.mxu0
        %v647 = vadd.f32 0.0, %v646
        %v648 = vpop.f32.mrf.mxu0
        %649 = vmatprep.mubr.bf16.mxu0 0
        %650 = vmatmul.mubr.bf16.gmra.mxu0 %v457
        %v651 = vpop.f32.mrf.mxu0
        %v652 = vadd.f32 0.0, %v651
        %v653 = vpop.f32.mrf.mxu0
        %v654 = vpop.f32.mrf.mxu0
        %v655 = vadd.f32 0.0, %v654
        %v656 = vpop.f32.mrf.mxu0
        %657 = vmatprep.mubr.bf16.mxu0 0
        %658 = vmatmul.mubr.bf16.gmra.mxu0 %v460
        %v659 = vpop.f32.mrf.mxu0
        %v660 = vadd.f32 0.0, %v659
        %v661 = vpop.f32.mrf.mxu0
        %v662 = vpop.f32.mrf.mxu0
        %v663 = vadd.f32 0.0, %v662
        %v664 = vpop.f32.mrf.mxu0
        %665 = vmatprep.mubr.bf16.mxu0 0
        %666 = vmatmul.mubr.bf16.gmra.mxu0 %v463
        %v667 = vpop.f32.mrf.mxu0
        %v668 = vadd.f32 0.0, %v667
        %v669 = vpop.f32.mrf.mxu0
        %v670 = vpop.f32.mrf.mxu0
        %v671 = vadd.f32 0.0, %v670
        %v672 = vpop.f32.mrf.mxu0
        %673 = vmatprep.mubr.bf16.mxu0 0
        %674 = vmatmul.mubr.bf16.gmra.mxu0 %v466
        %v675 = vpop.f32.mrf.mxu0
        %v676 = vadd.f32 0.0, %v675
        %v677 = vpop.f32.mrf.mxu0
        %v678 = vpop.f32.mrf.mxu0
        %v679 = vadd.f32 0.0, %v678
        %v680 = vpop.f32.mrf.mxu0
        %681 = vmatprep.mubr.bf16.mxu0 0
        %682 = vmatmul.mubr.bf16.gmra.mxu0 %v469
        %v683 = vpop.f32.mrf.mxu0
        %v684 = vadd.f32 0.0, %v683
        %v685 = vpop.f32.mrf.mxu0
        %v686 = vpop.f32.mrf.mxu0
        %v687 = vadd.f32 0.0, %v686
        %v688 = vpop.f32.mrf.mxu0
        %689 = vmatprep.mubr.bf16.mxu0 0
        %690 = vmatmul.mubr.bf16.gmra.mxu0 %v472
        %v691 = vpop.f32.mrf.mxu0
        %v692 = vadd.f32 0.0, %v691
        %v693 = vpop.f32.mrf.mxu0
        %v694 = vpop.f32.mrf.mxu0
        %v695 = vadd.f32 0.0, %v694
        %v696 = vpop.f32.mrf.mxu0
        %697 = vmatprep.mubr.bf16.mxu0 0
        %698 = vmatmul.mubr.bf16.gmra.mxu0 %v475
        %v699 = vpop.f32.mrf.mxu0
        %v700 = vadd.f32 0.0, %v699
        %v701 = vpop.f32.mrf.mxu0
        %v702 = vpop.f32.mrf.mxu0
        %v703 = vadd.f32 0.0, %v702
        %v704 = vpop.f32.mrf.mxu0
        %705 = vmatprep.mubr.bf16.mxu0 0
        %706 = vmatmul.mubr.bf16.gmra.mxu0 %v478
        %v707 = vpop.f32.mrf.mxu0
        %v708 = vadd.f32 0.0, %v707
        %v709 = vpop.f32.mrf.mxu0
        %v710 = vpop.f32.mrf.mxu0
        %v711 = vadd.f32 0.0, %v710
        %v712 = vpop.f32.mrf.mxu0
        %713 = vmatprep.mubr.bf16.mxu0 0
        %714 = vmatmul.mubr.bf16.gmra.mxu0 %v481
        %v715 = vpop.f32.mrf.mxu0
        %v716 = vadd.f32 0.0, %v715
        %v717 = vpop.f32.mrf.mxu0
        %v718 = vpop.f32.mrf.mxu0
        %v719 = vadd.f32 0.0, %v718
        %v720 = vpop.f32.mrf.mxu0
        %721 = vmatprep.mubr.bf16.mxu0 0
        %722 = vmatmul.mubr.bf16.gmra.mxu0 %v484
        %v723 = vpop.f32.mrf.mxu0
        %v724 = vadd.f32 0.0, %v723
        %v725 = vpop.f32.mrf.mxu0
        %v726 = vpop.f32.mrf.mxu0
        %v727 = vadd.f32 0.0, %v726
        %v728 = vpop.f32.mrf.mxu0
        %729 = vmatprep.mubr.bf16.mxu0 0
        %730 = vmatmul.mubr.bf16.gmra.mxu0 %v487
        %v731 = vpop.f32.mrf.mxu0
        %v732 = vadd.f32 0.0, %v731
        %v733 = vpop.f32.mrf.mxu0
        %v734 = vpop.f32.mrf.mxu0
        %v735 = vadd.f32 0.0, %v734
        %v736 = vpop.f32.mrf.mxu0
        %737 = vmatprep.mubr.bf16.mxu0 0
        %738 = vmatmul.mubr.bf16.gmra.mxu0 %v490
        %v739 = vpop.f32.mrf.mxu0
        %v740 = vadd.f32 0.0, %v739
        %v741 = vpop.f32.mrf.mxu0
        %v742 = vpop.f32.mrf.mxu0
        %v743 = vadd.f32 0.0, %v742
        %v744 = vpop.f32.mrf.mxu0
        %745 = vmatprep.mubr.bf16.mxu0 0
        %746 = vmatmul.mubr.bf16.gmra.mxu0 %v493
        %v747 = vpop.f32.mrf.mxu0
        %v748 = vadd.f32 0.0, %v747
        %v749 = vpop.f32.mrf.mxu0
        %v750 = vpop.f32.mrf.mxu0
        %v751 = vadd.f32 0.0, %v750
        %v752 = vpop.f32.mrf.mxu0
        %753 = vmatprep.mubr.bf16.mxu0 0
        %754 = vmatmul.mubr.bf16.gmra.mxu0 %v496
        %v755 = vpop.f32.mrf.mxu0
        %v756 = vadd.f32 0.0, %v755
        %v757 = vpop.f32.mrf.mxu0
        %v758 = vpop.f32.mrf.mxu0
        %v759 = vadd.f32 0.0, %v758
        %v760 = vpop.f32.mrf.mxu0
        %761 = vmatprep.mubr.bf16.mxu0 0
        %762 = vmatmul.mubr.bf16.gmra.mxu0 %v499
        %v763 = vpop.f32.mrf.mxu0
        %v764 = vadd.f32 0.0, %v763
        %v765 = vpop.f32.mrf.mxu0
        %v766 = vpop.f32.mrf.mxu0
        %v767 = vadd.f32 0.0, %v766
        %v768 = vpop.f32.mrf.mxu0
        %769 = vmatprep.mubr.bf16.mxu0 0
        %770 = vmatmul.mubr.bf16.gmra.mxu0 %v502
        %v771 = vpop.f32.mrf.mxu0
        %v772 = vadd.f32 0.0, %v771
        %v773 = vpop.f32.mrf.mxu0
        %v774 = vpop.f32.mrf.mxu0
        %v775 = vadd.f32 0.0, %v774
        %v776 = vpop.f32.mrf.mxu0
        %777 = vmatprep.mubr.bf16.mxu0 0
        %778 = vmatmul.mubr.bf16.gmra.mxu0 %v505
        %v779 = vpop.f32.mrf.mxu0
        %v780 = vadd.f32 0.0, %v779
        %v781 = vpop.f32.mrf.mxu0
        %v782 = vpop.f32.mrf.mxu0
        %v783 = vadd.f32 0.0, %v782
        %v784 = vpop.f32.mrf.mxu0
        %785 = vmatprep.mubr.bf16.mxu0 0
        %786 = vmatmul.mubr.bf16.gmra.mxu0 %v508
        %v787 = vpop.f32.mrf.mxu0
        %v788 = vadd.f32 0.0, %v787
        %v789 = vpop.f32.mrf.mxu0
        %v790 = vpop.f32.mrf.mxu0
        %v791 = vadd.f32 0.0, %v790
        %v792 = vpop.f32.mrf.mxu0
        %793 = vmatprep.mubr.bf16.mxu0 0
        %794 = vmatmul.mubr.bf16.gmra.mxu0 %v511
        %v795 = vpop.f32.mrf.mxu0
        %v796 = vadd.f32 0.0, %v795
        %v797 = vpop.f32.mrf.mxu0
        %v798 = vpop.f32.mrf.mxu0
        %v799 = vadd.f32 0.0, %v798
        %v800 = vpop.f32.mrf.mxu0
        %801 = vdwg.mxu0
        %v802 = vld [vmem:[%s1] sm:$0xff]
        %v803 = vld [vmem:[%s1 + $0x8] sm:$0xff]
        %v804 = vadd.f32 %v548, %v802
        %v805 = vadd.f32 %v551, %v803
        %v806 = vadd.f32 %v556, %v802
        %v807 = vadd.f32 %v559, %v803
        %v808 = vadd.f32 %v564, %v802
        %v809 = vadd.f32 %v567, %v803
        %v810 = vadd.f32 %v572, %v802
        %v811 = vadd.f32 %v575, %v803
        %v812 = vadd.f32 %v580, %v802
        %v813 = vadd.f32 %v583, %v803
        %v814 = vadd.f32 %v588, %v802
        %v815 = vadd.f32 %v591, %v803
        %v816 = vadd.f32 %v596, %v802
        %v817 = vadd.f32 %v599, %v803
        %v818 = vadd.f32 %v604, %v802
        %v819 = vadd.f32 %v607, %v803
        %v820 = vadd.f32 %v612, %v802
        %v821 = vadd.f32 %v615, %v803
        %v822 = vadd.f32 %v620, %v802
        %v823 = vadd.f32 %v623, %v803
        %v824 = vadd.f32 %v628, %v802
        %v825 = vadd.f32 %v631, %v803
        %v826 = vadd.f32 %v636, %v802
        %v827 = vadd.f32 %v639, %v803
        %v828 = vadd.f32 %v644, %v802
        %v829 = vadd.f32 %v647, %v803
        %v830 = vadd.f32 %v652, %v802
        %v831 = vadd.f32 %v655, %v803
        %v832 = vadd.f32 %v660, %v802
        %v833 = vadd.f32 %v663, %v803
        %v834 = vadd.f32 %v668, %v802
        %v835 = vadd.f32 %v671, %v803
        %v836 = vadd.f32 %v676, %v802
        %v837 = vadd.f32 %v679, %v803
        %v838 = vadd.f32 %v684, %v802
        %v839 = vadd.f32 %v687, %v803
        %v840 = vadd.f32 %v692, %v802
        %v841 = vadd.f32 %v695, %v803
        %v842 = vadd.f32 %v700, %v802
        %v843 = vadd.f32 %v703, %v803
        %v844 = vadd.f32 %v708, %v802
        %v845 = vadd.f32 %v711, %v803
        %v846 = vadd.f32 %v716, %v802
        %v847 = vadd.f32 %v719, %v803
        %v848 = vadd.f32 %v724, %v802
        %v849 = vadd.f32 %v727, %v803
        %v850 = vadd.f32 %v732, %v802
        %v851 = vadd.f32 %v735, %v803
        %v852 = vadd.f32 %v740, %v802
        %v853 = vadd.f32 %v743, %v803
        %v854 = vadd.f32 %v748, %v802
        %v855 = vadd.f32 %v751, %v803
        %v856 = vadd.f32 %v756, %v802
        %v857 = vadd.f32 %v759, %v803
        %v858 = vadd.f32 %v764, %v802
        %v859 = vadd.f32 %v767, %v803
        %v860 = vadd.f32 %v772, %v802
        %v861 = vadd.f32 %v775, %v803
        %v862 = vadd.f32 %v780, %v802
        %v863 = vadd.f32 %v783, %v803
        %v864 = vadd.f32 %v788, %v802
        %v865 = vadd.f32 %v791, %v803
        %v866 = vadd.f32 %v796, %v802
        %v867 = vadd.f32 %v799, %v803
        %vm868 = vcmask 130048
        %v869 = vsel %vm868, %v804, -inf
        %v870 = vsel %vm868, %v805, -inf
        %v871 = vmax.f32 %v869, %v870
        %v872 = vrot.slane %v871, 4
        %v873 = vmax.f32 %v871, %v872
        %v874 = vrot.slane %v873, 2
        %v875 = vmax.f32 %v873, %v874
        %v876 = vrot.slane %v875, 1
        %v877 = vmax.f32 %v875, %v876
        %v878 = vsel %vm868, %v806, -inf
        %v879 = vsel %vm868, %v807, -inf
        %v880 = vmax.f32 %v878, %v879
        %v881 = vrot.slane %v880, 4
        %v882 = vmax.f32 %v880, %v881
        %v883 = vrot.slane %v882, 2
        %v884 = vmax.f32 %v882, %v883
        %v885 = vrot.slane %v884, 1
        %v886 = vmax.f32 %v884, %v885
        %v887 = vsel %vm868, %v808, -inf
        %v888 = vsel %vm868, %v809, -inf
        %v889 = vmax.f32 %v887, %v888
        %v890 = vrot.slane %v889, 4
        %v891 = vmax.f32 %v889, %v890
        %v892 = vrot.slane %v891, 2
        %v893 = vmax.f32 %v891, %v892
        %v894 = vrot.slane %v893, 1
        %v895 = vmax.f32 %v893, %v894
        %v896 = vsel %vm868, %v810, -inf
        %v897 = vsel %vm868, %v811, -inf
        %v898 = vmax.f32 %v896, %v897
        %v899 = vrot.slane %v898, 4
        %v900 = vmax.f32 %v898, %v899
        %v901 = vrot.slane %v900, 2
        %v902 = vmax.f32 %v900, %v901
        %v903 = vrot.slane %v902, 1
        %v904 = vmax.f32 %v902, %v903
        %v905 = vsel %vm868, %v812, -inf
        %v906 = vsel %vm868, %v813, -inf
        %v907 = vmax.f32 %v905, %v906
        %v908 = vrot.slane %v907, 4
        %v909 = vmax.f32 %v907, %v908
        %v910 = vrot.slane %v909, 2
        %v911 = vmax.f32 %v909, %v910
        %v912 = vrot.slane %v911, 1
        %v913 = vmax.f32 %v911, %v912
        %v914 = vsel %vm868, %v814, -inf
        %v915 = vsel %vm868, %v815, -inf
        %v916 = vmax.f32 %v914, %v915
        %v917 = vrot.slane %v916, 4
        %v918 = vmax.f32 %v916, %v917
        %v919 = vrot.slane %v918, 2
        %v920 = vmax.f32 %v918, %v919
        %v921 = vrot.slane %v920, 1
        %v922 = vmax.f32 %v920, %v921
        %v923 = vsel %vm868, %v816, -inf
        %v924 = vsel %vm868, %v817, -inf
        %v925 = vmax.f32 %v923, %v924
        %v926 = vrot.slane %v925, 4
        %v927 = vmax.f32 %v925, %v926
        %v928 = vrot.slane %v927, 2
        %v929 = vmax.f32 %v927, %v928
        %v930 = vrot.slane %v929, 1
        %v931 = vmax.f32 %v929, %v930
        %v932 = vsel %vm868, %v818, -inf
        %v933 = vsel %vm868, %v819, -inf
        %v934 = vmax.f32 %v932, %v933
        %v935 = vrot.slane %v934, 4
        %v936 = vmax.f32 %v934, %v935
        %v937 = vrot.slane %v936, 2
        %v938 = vmax.f32 %v936, %v937
        %v939 = vrot.slane %v938, 1
        %v940 = vmax.f32 %v938, %v939
        %v941 = vsel %vm868, %v820, -inf
        %v942 = vsel %vm868, %v821, -inf
        %v943 = vmax.f32 %v941, %v942
        %v944 = vrot.slane %v943, 4
        %v945 = vmax.f32 %v943, %v944
        %v946 = vrot.slane %v945, 2
        %v947 = vmax.f32 %v945, %v946
        %v948 = vrot.slane %v947, 1
        %v949 = vmax.f32 %v947, %v948
        %v950 = vsel %vm868, %v822, -inf
        %v951 = vsel %vm868, %v823, -inf
        %v952 = vmax.f32 %v950, %v951
        %v953 = vrot.slane %v952, 4
        %v954 = vmax.f32 %v952, %v953
        %v955 = vrot.slane %v954, 2
        %v956 = vmax.f32 %v954, %v955
        %v957 = vrot.slane %v956, 1
        %v958 = vmax.f32 %v956, %v957
        %v959 = vsel %vm868, %v824, -inf
        %v960 = vsel %vm868, %v825, -inf
        %v961 = vmax.f32 %v959, %v960
        %v962 = vrot.slane %v961, 4
        %v963 = vmax.f32 %v961, %v962
        %v964 = vrot.slane %v963, 2
        %v965 = vmax.f32 %v963, %v964
        %v966 = vrot.slane %v965, 1
        %v967 = vmax.f32 %v965, %v966
        %v968 = vsel %vm868, %v826, -inf
        %v969 = vsel %vm868, %v827, -inf
        %v970 = vmax.f32 %v968, %v969
        %v971 = vrot.slane %v970, 4
        %v972 = vmax.f32 %v970, %v971
        %v973 = vrot.slane %v972, 2
        %v974 = vmax.f32 %v972, %v973
        %v975 = vrot.slane %v974, 1
        %v976 = vmax.f32 %v974, %v975
        %v977 = vsel %vm868, %v828, -inf
        %v978 = vsel %vm868, %v829, -inf
        %v979 = vmax.f32 %v977, %v978
        %v980 = vrot.slane %v979, 4
        %v981 = vmax.f32 %v979, %v980
        %v982 = vrot.slane %v981, 2
        %v983 = vmax.f32 %v981, %v982
        %v984 = vrot.slane %v983, 1
        %v985 = vmax.f32 %v983, %v984
        %v986 = vsel %vm868, %v830, -inf
        %v987 = vsel %vm868, %v831, -inf
        %v988 = vmax.f32 %v986, %v987
        %v989 = vrot.slane %v988, 4
        %v990 = vmax.f32 %v988, %v989
        %v991 = vrot.slane %v990, 2
        %v992 = vmax.f32 %v990, %v991
        %v993 = vrot.slane %v992, 1
        %v994 = vmax.f32 %v992, %v993
        %v995 = vsel %vm868, %v832, -inf
        %v996 = vsel %vm868, %v833, -inf
        %v997 = vmax.f32 %v995, %v996
        %v998 = vrot.slane %v997, 4
        %v999 = vmax.f32 %v997, %v998
        %v1000 = vrot.slane %v999, 2
        %v1001 = vmax.f32 %v999, %v1000
        %v1002 = vrot.slane %v1001, 1
        %v1003 = vmax.f32 %v1001, %v1002
        %v1004 = vsel %vm868, %v834, -inf
        %v1005 = vsel %vm868, %v835, -inf
        %v1006 = vmax.f32 %v1004, %v1005
        %v1007 = vrot.slane %v1006, 4
        %v1008 = vmax.f32 %v1006, %v1007
        %v1009 = vrot.slane %v1008, 2
        %v1010 = vmax.f32 %v1008, %v1009
        %v1011 = vrot.slane %v1010, 1
        %v1012 = vmax.f32 %v1010, %v1011
        %v1013 = vsel %vm868, %v836, -inf
        %v1014 = vsel %vm868, %v837, -inf
        %v1015 = vmax.f32 %v1013, %v1014
        %v1016 = vrot.slane %v1015, 4
        %v1017 = vmax.f32 %v1015, %v1016
        %v1018 = vrot.slane %v1017, 2
        %v1019 = vmax.f32 %v1017, %v1018
        %v1020 = vrot.slane %v1019, 1
        %v1021 = vmax.f32 %v1019, %v1020
        %v1022 = vsel %vm868, %v838, -inf
        %v1023 = vsel %vm868, %v839, -inf
        %v1024 = vmax.f32 %v1022, %v1023
        %v1025 = vrot.slane %v1024, 4
        %v1026 = vmax.f32 %v1024, %v1025
        %v1027 = vrot.slane %v1026, 2
        %v1028 = vmax.f32 %v1026, %v1027
        %v1029 = vrot.slane %v1028, 1
        %v1030 = vmax.f32 %v1028, %v1029
        %v1031 = vsel %vm868, %v840, -inf
        %v1032 = vsel %vm868, %v841, -inf
        %v1033 = vmax.f32 %v1031, %v1032
        %v1034 = vrot.slane %v1033, 4
        %v1035 = vmax.f32 %v1033, %v1034
        %v1036 = vrot.slane %v1035, 2
        %v1037 = vmax.f32 %v1035, %v1036
        %v1038 = vrot.slane %v1037, 1
        %v1039 = vmax.f32 %v1037, %v1038
        %v1040 = vsel %vm868, %v842, -inf
        %v1041 = vsel %vm868, %v843, -inf
        %v1042 = vmax.f32 %v1040, %v1041
        %v1043 = vrot.slane %v1042, 4
        %v1044 = vmax.f32 %v1042, %v1043
        %v1045 = vrot.slane %v1044, 2
        %v1046 = vmax.f32 %v1044, %v1045
        %v1047 = vrot.slane %v1046, 1
        %v1048 = vmax.f32 %v1046, %v1047
        %v1049 = vsel %vm868, %v844, -inf
        %v1050 = vsel %vm868, %v845, -inf
        %v1051 = vmax.f32 %v1049, %v1050
        %v1052 = vrot.slane %v1051, 4
        %v1053 = vmax.f32 %v1051, %v1052
        %v1054 = vrot.slane %v1053, 2
        %v1055 = vmax.f32 %v1053, %v1054
        %v1056 = vrot.slane %v1055, 1
        %v1057 = vmax.f32 %v1055, %v1056
        %v1058 = vsel %vm868, %v846, -inf
        %v1059 = vsel %vm868, %v847, -inf
        %v1060 = vmax.f32 %v1058, %v1059
        %v1061 = vrot.slane %v1060, 4
        %v1062 = vmax.f32 %v1060, %v1061
        %v1063 = vrot.slane %v1062, 2
        %v1064 = vmax.f32 %v1062, %v1063
        %v1065 = vrot.slane %v1064, 1
        %v1066 = vmax.f32 %v1064, %v1065
        %v1067 = vsel %vm868, %v848, -inf
        %v1068 = vsel %vm868, %v849, -inf
        %v1069 = vmax.f32 %v1067, %v1068
        %v1070 = vrot.slane %v1069, 4
        %v1071 = vmax.f32 %v1069, %v1070
        %v1072 = vrot.slane %v1071, 2
        %v1073 = vmax.f32 %v1071, %v1072
        %v1074 = vrot.slane %v1073, 1
        %v1075 = vmax.f32 %v1073, %v1074
        %v1076 = vsel %vm868, %v850, -inf
        %v1077 = vsel %vm868, %v851, -inf
        %v1078 = vmax.f32 %v1076, %v1077
        %v1079 = vrot.slane %v1078, 4
        %v1080 = vmax.f32 %v1078, %v1079
        %v1081 = vrot.slane %v1080, 2
        %v1082 = vmax.f32 %v1080, %v1081
        %v1083 = vrot.slane %v1082, 1
        %v1084 = vmax.f32 %v1082, %v1083
        %v1085 = vsel %vm868, %v852, -inf
        %v1086 = vsel %vm868, %v853, -inf
        %v1087 = vmax.f32 %v1085, %v1086
        %v1088 = vrot.slane %v1087, 4
        %v1089 = vmax.f32 %v1087, %v1088
        %v1090 = vrot.slane %v1089, 2
        %v1091 = vmax.f32 %v1089, %v1090
        %v1092 = vrot.slane %v1091, 1
        %v1093 = vmax.f32 %v1091, %v1092
        %v1094 = vsel %vm868, %v854, -inf
        %v1095 = vsel %vm868, %v855, -inf
        %v1096 = vmax.f32 %v1094, %v1095
        %v1097 = vrot.slane %v1096, 4
        %v1098 = vmax.f32 %v1096, %v1097
        %v1099 = vrot.slane %v1098, 2
        %v1100 = vmax.f32 %v1098, %v1099
        %v1101 = vrot.slane %v1100, 1
        %v1102 = vmax.f32 %v1100, %v1101
        %v1103 = vsel %vm868, %v856, -inf
        %v1104 = vsel %vm868, %v857, -inf
        %v1105 = vmax.f32 %v1103, %v1104
        %v1106 = vrot.slane %v1105, 4
        %v1107 = vmax.f32 %v1105, %v1106
        %v1108 = vrot.slane %v1107, 2
        %v1109 = vmax.f32 %v1107, %v1108
        %v1110 = vrot.slane %v1109, 1
        %v1111 = vmax.f32 %v1109, %v1110
        %v1112 = vsel %vm868, %v858, -inf
        %v1113 = vsel %vm868, %v859, -inf
        %v1114 = vmax.f32 %v1112, %v1113
        %v1115 = vrot.slane %v1114, 4
        %v1116 = vmax.f32 %v1114, %v1115
        %v1117 = vrot.slane %v1116, 2
        %v1118 = vmax.f32 %v1116, %v1117
        %v1119 = vrot.slane %v1118, 1
        %v1120 = vmax.f32 %v1118, %v1119
        %v1121 = vsel %vm868, %v860, -inf
        %v1122 = vsel %vm868, %v861, -inf
        %v1123 = vmax.f32 %v1121, %v1122
        %v1124 = vrot.slane %v1123, 4
        %v1125 = vmax.f32 %v1123, %v1124
        %v1126 = vrot.slane %v1125, 2
        %v1127 = vmax.f32 %v1125, %v1126
        %v1128 = vrot.slane %v1127, 1
        %v1129 = vmax.f32 %v1127, %v1128
        %v1130 = vsel %vm868, %v862, -inf
        %v1131 = vsel %vm868, %v863, -inf
        %v1132 = vmax.f32 %v1130, %v1131
        %v1133 = vrot.slane %v1132, 4
        %v1134 = vmax.f32 %v1132, %v1133
        %v1135 = vrot.slane %v1134, 2
        %v1136 = vmax.f32 %v1134, %v1135
        %v1137 = vrot.slane %v1136, 1
        %v1138 = vmax.f32 %v1136, %v1137
        %v1139 = vsel %vm868, %v864, -inf
        %v1140 = vsel %vm868, %v865, -inf
        %v1141 = vmax.f32 %v1139, %v1140
        %v1142 = vrot.slane %v1141, 4
        %v1143 = vmax.f32 %v1141, %v1142
        %v1144 = vrot.slane %v1143, 2
        %v1145 = vmax.f32 %v1143, %v1144
        %v1146 = vrot.slane %v1145, 1
        %v1147 = vmax.f32 %v1145, %v1146
        %v1148 = vsel %vm868, %v866, -inf
        %v1149 = vsel %vm868, %v867, -inf
        %v1150 = vmax.f32 %v1148, %v1149
        %v1151 = vrot.slane %v1150, 4
        %v1152 = vmax.f32 %v1150, %v1151
        %v1153 = vrot.slane %v1152, 2
        %v1154 = vmax.f32 %v1152, %v1153
        %v1155 = vrot.slane %v1154, 1
        %v1156 = vmax.f32 %v1154, %v1155
        %v1157 = vsub.f32 %v804, %v877
        %v1158 = vsub.f32 %v805, %v877
        %v1159 = vsub.f32 %v806, %v886
        %v1160 = vsub.f32 %v807, %v886
        %v1161 = vsub.f32 %v808, %v895
        %v1162 = vsub.f32 %v809, %v895
        %v1163 = vsub.f32 %v810, %v904
        %v1164 = vsub.f32 %v811, %v904
        %v1165 = vsub.f32 %v812, %v913
        %v1166 = vsub.f32 %v813, %v913
        %v1167 = vsub.f32 %v814, %v922
        %v1168 = vsub.f32 %v815, %v922
        %v1169 = vsub.f32 %v816, %v931
        %v1170 = vsub.f32 %v817, %v931
        %v1171 = vsub.f32 %v818, %v940
        %v1172 = vsub.f32 %v819, %v940
        %v1173 = vsub.f32 %v820, %v949
        %v1174 = vsub.f32 %v821, %v949
        %v1175 = vsub.f32 %v822, %v958
        %v1176 = vsub.f32 %v823, %v958
        %v1177 = vsub.f32 %v824, %v967
        %v1178 = vsub.f32 %v825, %v967
        %v1179 = vsub.f32 %v826, %v976
        %v1180 = vsub.f32 %v827, %v976
        %v1181 = vsub.f32 %v828, %v985
        %v1182 = vsub.f32 %v829, %v985
        %v1183 = vsub.f32 %v830, %v994
        %v1184 = vsub.f32 %v831, %v994
        %v1185 = vsub.f32 %v832, %v1003
        %v1186 = vsub.f32 %v833, %v1003
        %v1187 = vsub.f32 %v834, %v1012
        %v1188 = vsub.f32 %v835, %v1012
        %v1189 = vsub.f32 %v836, %v1021
        %v1190 = vsub.f32 %v837, %v1021
        %v1191 = vsub.f32 %v838, %v1030
        %v1192 = vsub.f32 %v839, %v1030
        %v1193 = vsub.f32 %v840, %v1039
        %v1194 = vsub.f32 %v841, %v1039
        %v1195 = vsub.f32 %v842, %v1048
        %v1196 = vsub.f32 %v843, %v1048
        %v1197 = vsub.f32 %v844, %v1057
        %v1198 = vsub.f32 %v845, %v1057
        %v1199 = vsub.f32 %v846, %v1066
        %v1200 = vsub.f32 %v847, %v1066
        %v1201 = vsub.f32 %v848, %v1075
        %v1202 = vsub.f32 %v849, %v1075
        %v1203 = vsub.f32 %v850, %v1084
        %v1204 = vsub.f32 %v851, %v1084
        %v1205 = vsub.f32 %v852, %v1093
        %v1206 = vsub.f32 %v853, %v1093
        %v1207 = vsub.f32 %v854, %v1102
        %v1208 = vsub.f32 %v855, %v1102
        %v1209 = vsub.f32 %v856, %v1111
        %v1210 = vsub.f32 %v857, %v1111
        %v1211 = vsub.f32 %v858, %v1120
        %v1212 = vsub.f32 %v859, %v1120
        %v1213 = vsub.f32 %v860, %v1129
        %v1214 = vsub.f32 %v861, %v1129
        %v1215 = vsub.f32 %v862, %v1138
        %v1216 = vsub.f32 %v863, %v1138
        %v1217 = vsub.f32 %v864, %v1147
        %v1218 = vsub.f32 %v865, %v1147
        %v1219 = vsub.f32 %v866, %v1156
        %v1220 = vsub.f32 %v867, %v1156
        %v1221 = vmul.f32 %v1157, 1.442695
        %v1222 = vpow.pop %v1221
        %v1223 = vmul.f32 %v1158, 1.442695
        %v1224 = vpow.pop %v1223
        %v1225 = vmul.f32 %v1159, 1.442695
        %v1226 = vpow.pop %v1225
        %v1227 = vmul.f32 %v1160, 1.442695
        %v1228 = vpow.pop %v1227
        %v1229 = vmul.f32 %v1161, 1.442695
        %v1230 = vpow.pop %v1229
        %v1231 = vmul.f32 %v1162, 1.442695
        %v1232 = vpow.pop %v1231
        %v1233 = vmul.f32 %v1163, 1.442695
        %v1234 = vpow.pop %v1233
        %v1235 = vmul.f32 %v1164, 1.442695
        %v1236 = vpow.pop %v1235
        %v1237 = vmul.f32 %v1165, 1.442695
        %v1238 = vpow.pop %v1237
        %v1239 = vmul.f32 %v1166, 1.442695
        %v1240 = vpow.pop %v1239
        %v1241 = vmul.f32 %v1167, 1.442695
        %v1242 = vpow.pop %v1241
        %v1243 = vmul.f32 %v1168, 1.442695
        %v1244 = vpow.pop %v1243
        %v1245 = vmul.f32 %v1169, 1.442695
        %v1246 = vpow.pop %v1245
        %v1247 = vmul.f32 %v1170, 1.442695
        %v1248 = vpow.pop %v1247
        %v1249 = vmul.f32 %v1171, 1.442695
        %v1250 = vpow.pop %v1249
        %v1251 = vmul.f32 %v1172, 1.442695
        %v1252 = vpow.pop %v1251
        %v1253 = vmul.f32 %v1173, 1.442695
        %v1254 = vpow.pop %v1253
        %v1255 = vmul.f32 %v1174, 1.442695
        %v1256 = vpow.pop %v1255
        %v1257 = vmul.f32 %v1175, 1.442695
        %v1258 = vpow.pop %v1257
        %v1259 = vmul.f32 %v1176, 1.442695
        %v1260 = vpow.pop %v1259
        %v1261 = vmul.f32 %v1177, 1.442695
        %v1262 = vpow.pop %v1261
        %v1263 = vmul.f32 %v1178, 1.442695
        %v1264 = vpow.pop %v1263
        %v1265 = vmul.f32 %v1179, 1.442695
        %v1266 = vpow.pop %v1265
        %v1267 = vmul.f32 %v1180, 1.442695
        %v1268 = vpow.pop %v1267
        %v1269 = vmul.f32 %v1181, 1.442695
        %v1270 = vpow.pop %v1269
        %v1271 = vmul.f32 %v1182, 1.442695
        %v1272 = vpow.pop %v1271
        %v1273 = vmul.f32 %v1183, 1.442695
        %v1274 = vpow.pop %v1273
        %v1275 = vmul.f32 %v1184, 1.442695
        %v1276 = vpow.pop %v1275
        %v1277 = vmul.f32 %v1185, 1.442695
        %v1278 = vpow.pop %v1277
        %v1279 = vmul.f32 %v1186, 1.442695
        %v1280 = vpow.pop %v1279
        %v1281 = vmul.f32 %v1187, 1.442695
        %v1282 = vpow.pop %v1281
        %v1283 = vmul.f32 %v1188, 1.442695
        %v1284 = vpow.pop %v1283
        %v1285 = vmul.f32 %v1189, 1.442695
        %v1286 = vpow.pop %v1285
        %v1287 = vmul.f32 %v1190, 1.442695
        %v1288 = vpow.pop %v1287
        %v1289 = vmul.f32 %v1191, 1.442695
        %v1290 = vpow.pop %v1289
        %v1291 = vmul.f32 %v1192, 1.442695
        %v1292 = vpow.pop %v1291
        %v1293 = vmul.f32 %v1193, 1.442695
        %v1294 = vpow.pop %v1293
        %v1295 = vmul.f32 %v1194, 1.442695
        %v1296 = vpow.pop %v1295
        %v1297 = vmul.f32 %v1195, 1.442695
        %v1298 = vpow.pop %v1297
        %v1299 = vmul.f32 %v1196, 1.442695
        %v1300 = vpow.pop %v1299
        %v1301 = vmul.f32 %v1197, 1.442695
        %v1302 = vpow.pop %v1301
        %v1303 = vmul.f32 %v1198, 1.442695
        %v1304 = vpow.pop %v1303
        %v1305 = vmul.f32 %v1199, 1.442695
        %v1306 = vpow.pop %v1305
        %v1307 = vmul.f32 %v1200, 1.442695
        %v1308 = vpow.pop %v1307
        %v1309 = vmul.f32 %v1201, 1.442695
        %v1310 = vpow.pop %v1309
        %v1311 = vmul.f32 %v1202, 1.442695
        %v1312 = vpow.pop %v1311
        %v1313 = vmul.f32 %v1203, 1.442695
        %v1314 = vpow.pop %v1313
        %v1315 = vmul.f32 %v1204, 1.442695
        %v1316 = vpow.pop %v1315
        %v1317 = vmul.f32 %v1205, 1.442695
        %v1318 = vpow.pop %v1317
        %v1319 = vmul.f32 %v1206, 1.442695
        %v1320 = vpow.pop %v1319
        %v1321 = vmul.f32 %v1207, 1.442695
        %v1322 = vpow.pop %v1321
        %v1323 = vmul.f32 %v1208, 1.442695
        %v1324 = vpow.pop %v1323
        %v1325 = vmul.f32 %v1209, 1.442695
        %v1326 = vpow.pop %v1325
        %v1327 = vmul.f32 %v1210, 1.442695
        %v1328 = vpow.pop %v1327
        %v1329 = vmul.f32 %v1211, 1.442695
        %v1330 = vpow.pop %v1329
        %v1331 = vmul.f32 %v1212, 1.442695
        %v1332 = vpow.pop %v1331
        %v1333 = vmul.f32 %v1213, 1.442695
        %v1334 = vpow.pop %v1333
        %v1335 = vmul.f32 %v1214, 1.442695
        %v1336 = vpow.pop %v1335
        %v1337 = vmul.f32 %v1215, 1.442695
        %v1338 = vpow.pop %v1337
        %v1339 = vmul.f32 %v1216, 1.442695
        %v1340 = vpow.pop %v1339
        %v1341 = vmul.f32 %v1217, 1.442695
        %v1342 = vpow.pop %v1341
        %v1343 = vmul.f32 %v1218, 1.442695
        %v1344 = vpow.pop %v1343
        %v1345 = vmul.f32 %v1219, 1.442695
        %v1346 = vpow.pop %v1345
        %v1347 = vmul.f32 %v1220, 1.442695
        %v1348 = vpow.pop %v1347
        %v1349 = vsel %vm868, %v1222, 0.0
        %v1350 = vsel %vm868, %v1224, 0.0
        %v1351 = vadd.f32 %v1349, %v1350
        %v1352 = vrot.slane %v1351, 4
        %v1353 = vadd.f32 %v1351, %v1352
        %v1354 = vrot.slane %v1353, 2
        %v1355 = vadd.f32 %v1353, %v1354
        %v1356 = vrot.slane %v1355, 1
        %v1357 = vadd.f32 %v1355, %v1356
        %v1358 = vsel %vm868, %v1226, 0.0
        %v1359 = vsel %vm868, %v1228, 0.0
        %v1360 = vadd.f32 %v1358, %v1359
        %v1361 = vrot.slane %v1360, 4
        %v1362 = vadd.f32 %v1360, %v1361
        %v1363 = vrot.slane %v1362, 2
        %v1364 = vadd.f32 %v1362, %v1363
        %v1365 = vrot.slane %v1364, 1
        %v1366 = vadd.f32 %v1364, %v1365
        %v1367 = vsel %vm868, %v1230, 0.0
        %v1368 = vsel %vm868, %v1232, 0.0
        %v1369 = vadd.f32 %v1367, %v1368
        %v1370 = vrot.slane %v1369, 4
        %v1371 = vadd.f32 %v1369, %v1370
        %v1372 = vrot.slane %v1371, 2
        %v1373 = vadd.f32 %v1371, %v1372
        %v1374 = vrot.slane %v1373, 1
        %v1375 = vadd.f32 %v1373, %v1374
        %v1376 = vsel %vm868, %v1234, 0.0
        %v1377 = vsel %vm868, %v1236, 0.0
        %v1378 = vadd.f32 %v1376, %v1377
        %v1379 = vrot.slane %v1378, 4
        %v1380 = vadd.f32 %v1378, %v1379
        %v1381 = vrot.slane %v1380, 2
        %v1382 = vadd.f32 %v1380, %v1381
        %v1383 = vrot.slane %v1382, 1
        %v1384 = vadd.f32 %v1382, %v1383
        %v1385 = vsel %vm868, %v1238, 0.0
        %v1386 = vsel %vm868, %v1240, 0.0
        %v1387 = vadd.f32 %v1385, %v1386
        %v1388 = vrot.slane %v1387, 4
        %v1389 = vadd.f32 %v1387, %v1388
        %v1390 = vrot.slane %v1389, 2
        %v1391 = vadd.f32 %v1389, %v1390
        %v1392 = vrot.slane %v1391, 1
        %v1393 = vadd.f32 %v1391, %v1392
        %v1394 = vsel %vm868, %v1242, 0.0
        %v1395 = vsel %vm868, %v1244, 0.0
        %v1396 = vadd.f32 %v1394, %v1395
        %v1397 = vrot.slane %v1396, 4
        %v1398 = vadd.f32 %v1396, %v1397
        %v1399 = vrot.slane %v1398, 2
        %v1400 = vadd.f32 %v1398, %v1399
        %v1401 = vrot.slane %v1400, 1
        %v1402 = vadd.f32 %v1400, %v1401
        %v1403 = vsel %vm868, %v1246, 0.0
        %v1404 = vsel %vm868, %v1248, 0.0
        %v1405 = vadd.f32 %v1403, %v1404
        %v1406 = vrot.slane %v1405, 4
        %v1407 = vadd.f32 %v1405, %v1406
        %v1408 = vrot.slane %v1407, 2
        %v1409 = vadd.f32 %v1407, %v1408
        %v1410 = vrot.slane %v1409, 1
        %v1411 = vadd.f32 %v1409, %v1410
        %v1412 = vsel %vm868, %v1250, 0.0
        %v1413 = vsel %vm868, %v1252, 0.0
        %v1414 = vadd.f32 %v1412, %v1413
        %v1415 = vrot.slane %v1414, 4
        %v1416 = vadd.f32 %v1414, %v1415
        %v1417 = vrot.slane %v1416, 2
        %v1418 = vadd.f32 %v1416, %v1417
        %v1419 = vrot.slane %v1418, 1
        %v1420 = vadd.f32 %v1418, %v1419
        %v1421 = vsel %vm868, %v1254, 0.0
        %v1422 = vsel %vm868, %v1256, 0.0
        %v1423 = vadd.f32 %v1421, %v1422
        %v1424 = vrot.slane %v1423, 4
        %v1425 = vadd.f32 %v1423, %v1424
        %v1426 = vrot.slane %v1425, 2
        %v1427 = vadd.f32 %v1425, %v1426
        %v1428 = vrot.slane %v1427, 1
        %v1429 = vadd.f32 %v1427, %v1428
        %v1430 = vsel %vm868, %v1258, 0.0
        %v1431 = vsel %vm868, %v1260, 0.0
        %v1432 = vadd.f32 %v1430, %v1431
        %v1433 = vrot.slane %v1432, 4
        %v1434 = vadd.f32 %v1432, %v1433
        %v1435 = vrot.slane %v1434, 2
        %v1436 = vadd.f32 %v1434, %v1435
        %v1437 = vrot.slane %v1436, 1
        %v1438 = vadd.f32 %v1436, %v1437
        %v1439 = vsel %vm868, %v1262, 0.0
        %v1440 = vsel %vm868, %v1264, 0.0
        %v1441 = vadd.f32 %v1439, %v1440
        %v1442 = vrot.slane %v1441, 4
        %v1443 = vadd.f32 %v1441, %v1442
        %v1444 = vrot.slane %v1443, 2
        %v1445 = vadd.f32 %v1443, %v1444
        %v1446 = vrot.slane %v1445, 1
        %v1447 = vadd.f32 %v1445, %v1446
        %v1448 = vsel %vm868, %v1266, 0.0
        %v1449 = vsel %vm868, %v1268, 0.0
        %v1450 = vadd.f32 %v1448, %v1449
        %v1451 = vrot.slane %v1450, 4
        %v1452 = vadd.f32 %v1450, %v1451
        %v1453 = vrot.slane %v1452, 2
        %v1454 = vadd.f32 %v1452, %v1453
        %v1455 = vrot.slane %v1454, 1
        %v1456 = vadd.f32 %v1454, %v1455
        %v1457 = vsel %vm868, %v1270, 0.0
        %v1458 = vsel %vm868, %v1272, 0.0
        %v1459 = vadd.f32 %v1457, %v1458
        %v1460 = vrot.slane %v1459, 4
        %v1461 = vadd.f32 %v1459, %v1460
        %v1462 = vrot.slane %v1461, 2
        %v1463 = vadd.f32 %v1461, %v1462
        %v1464 = vrot.slane %v1463, 1
        %v1465 = vadd.f32 %v1463, %v1464
        %v1466 = vsel %vm868, %v1274, 0.0
        %v1467 = vsel %vm868, %v1276, 0.0
        %v1468 = vadd.f32 %v1466, %v1467
        %v1469 = vrot.slane %v1468, 4
        %v1470 = vadd.f32 %v1468, %v1469
        %v1471 = vrot.slane %v1470, 2
        %v1472 = vadd.f32 %v1470, %v1471
        %v1473 = vrot.slane %v1472, 1
        %v1474 = vadd.f32 %v1472, %v1473
        %v1475 = vsel %vm868, %v1278, 0.0
        %v1476 = vsel %vm868, %v1280, 0.0
        %v1477 = vadd.f32 %v1475, %v1476
        %v1478 = vrot.slane %v1477, 4
        %v1479 = vadd.f32 %v1477, %v1478
        %v1480 = vrot.slane %v1479, 2
        %v1481 = vadd.f32 %v1479, %v1480
        %v1482 = vrot.slane %v1481, 1
        %v1483 = vadd.f32 %v1481, %v1482
        %v1484 = vsel %vm868, %v1282, 0.0
        %v1485 = vsel %vm868, %v1284, 0.0
        %v1486 = vadd.f32 %v1484, %v1485
        %v1487 = vrot.slane %v1486, 4
        %v1488 = vadd.f32 %v1486, %v1487
        %v1489 = vrot.slane %v1488, 2
        %v1490 = vadd.f32 %v1488, %v1489
        %v1491 = vrot.slane %v1490, 1
        %v1492 = vadd.f32 %v1490, %v1491
        %v1493 = vsel %vm868, %v1286, 0.0
        %v1494 = vsel %vm868, %v1288, 0.0
        %v1495 = vadd.f32 %v1493, %v1494
        %v1496 = vrot.slane %v1495, 4
        %v1497 = vadd.f32 %v1495, %v1496
        %v1498 = vrot.slane %v1497, 2
        %v1499 = vadd.f32 %v1497, %v1498
        %v1500 = vrot.slane %v1499, 1
        %v1501 = vadd.f32 %v1499, %v1500
        %v1502 = vsel %vm868, %v1290, 0.0
        %v1503 = vsel %vm868, %v1292, 0.0
        %v1504 = vadd.f32 %v1502, %v1503
        %v1505 = vrot.slane %v1504, 4
        %v1506 = vadd.f32 %v1504, %v1505
        %v1507 = vrot.slane %v1506, 2
        %v1508 = vadd.f32 %v1506, %v1507
        %v1509 = vrot.slane %v1508, 1
        %v1510 = vadd.f32 %v1508, %v1509
        %v1511 = vsel %vm868, %v1294, 0.0
        %v1512 = vsel %vm868, %v1296, 0.0
        %v1513 = vadd.f32 %v1511, %v1512
        %v1514 = vrot.slane %v1513, 4
        %v1515 = vadd.f32 %v1513, %v1514
        %v1516 = vrot.slane %v1515, 2
        %v1517 = vadd.f32 %v1515, %v1516
        %v1518 = vrot.slane %v1517, 1
        %v1519 = vadd.f32 %v1517, %v1518
        %v1520 = vsel %vm868, %v1298, 0.0
        %v1521 = vsel %vm868, %v1300, 0.0
        %v1522 = vadd.f32 %v1520, %v1521
        %v1523 = vrot.slane %v1522, 4
        %v1524 = vadd.f32 %v1522, %v1523
        %v1525 = vrot.slane %v1524, 2
        %v1526 = vadd.f32 %v1524, %v1525
        %v1527 = vrot.slane %v1526, 1
        %v1528 = vadd.f32 %v1526, %v1527
        %v1529 = vsel %vm868, %v1302, 0.0
        %v1530 = vsel %vm868, %v1304, 0.0
        %v1531 = vadd.f32 %v1529, %v1530
        %v1532 = vrot.slane %v1531, 4
        %v1533 = vadd.f32 %v1531, %v1532
        %v1534 = vrot.slane %v1533, 2
        %v1535 = vadd.f32 %v1533, %v1534
        %v1536 = vrot.slane %v1535, 1
        %v1537 = vadd.f32 %v1535, %v1536
        %v1538 = vsel %vm868, %v1306, 0.0
        %v1539 = vsel %vm868, %v1308, 0.0
        %v1540 = vadd.f32 %v1538, %v1539
        %v1541 = vrot.slane %v1540, 4
        %v1542 = vadd.f32 %v1540, %v1541
        %v1543 = vrot.slane %v1542, 2
        %v1544 = vadd.f32 %v1542, %v1543
        %v1545 = vrot.slane %v1544, 1
        %v1546 = vadd.f32 %v1544, %v1545
        %v1547 = vsel %vm868, %v1310, 0.0
        %v1548 = vsel %vm868, %v1312, 0.0
        %v1549 = vadd.f32 %v1547, %v1548
        %v1550 = vrot.slane %v1549, 4
        %v1551 = vadd.f32 %v1549, %v1550
        %v1552 = vrot.slane %v1551, 2
        %v1553 = vadd.f32 %v1551, %v1552
        %v1554 = vrot.slane %v1553, 1
        %v1555 = vadd.f32 %v1553, %v1554
        %v1556 = vsel %vm868, %v1314, 0.0
        %v1557 = vsel %vm868, %v1316, 0.0
        %v1558 = vadd.f32 %v1556, %v1557
        %v1559 = vrot.slane %v1558, 4
        %v1560 = vadd.f32 %v1558, %v1559
        %v1561 = vrot.slane %v1560, 2
        %v1562 = vadd.f32 %v1560, %v1561
        %v1563 = vrot.slane %v1562, 1
        %v1564 = vadd.f32 %v1562, %v1563
        %v1565 = vsel %vm868, %v1318, 0.0
        %v1566 = vsel %vm868, %v1320, 0.0
        %v1567 = vadd.f32 %v1565, %v1566
        %v1568 = vrot.slane %v1567, 4
        %v1569 = vadd.f32 %v1567, %v1568
        %v1570 = vrot.slane %v1569, 2
        %v1571 = vadd.f32 %v1569, %v1570
        %v1572 = vrot.slane %v1571, 1
        %v1573 = vadd.f32 %v1571, %v1572
        %v1574 = vsel %vm868, %v1322, 0.0
        %v1575 = vsel %vm868, %v1324, 0.0
        %v1576 = vadd.f32 %v1574, %v1575
        %v1577 = vrot.slane %v1576, 4
        %v1578 = vadd.f32 %v1576, %v1577
        %v1579 = vrot.slane %v1578, 2
        %v1580 = vadd.f32 %v1578, %v1579
        %v1581 = vrot.slane %v1580, 1
        %v1582 = vadd.f32 %v1580, %v1581
        %v1583 = vsel %vm868, %v1326, 0.0
        %v1584 = vsel %vm868, %v1328, 0.0
        %v1585 = vadd.f32 %v1583, %v1584
        %v1586 = vrot.slane %v1585, 4
        %v1587 = vadd.f32 %v1585, %v1586
        %v1588 = vrot.slane %v1587, 2
        %v1589 = vadd.f32 %v1587, %v1588
        %v1590 = vrot.slane %v1589, 1
        %v1591 = vadd.f32 %v1589, %v1590
        %v1592 = vsel %vm868, %v1330, 0.0
        %v1593 = vsel %vm868, %v1332, 0.0
        %v1594 = vadd.f32 %v1592, %v1593
        %v1595 = vrot.slane %v1594, 4
        %v1596 = vadd.f32 %v1594, %v1595
        %v1597 = vrot.slane %v1596, 2
        %v1598 = vadd.f32 %v1596, %v1597
        %v1599 = vrot.slane %v1598, 1
        %v1600 = vadd.f32 %v1598, %v1599
        %v1601 = vsel %vm868, %v1334, 0.0
        %v1602 = vsel %vm868, %v1336, 0.0
        %v1603 = vadd.f32 %v1601, %v1602
        %v1604 = vrot.slane %v1603, 4
        %v1605 = vadd.f32 %v1603, %v1604
        %v1606 = vrot.slane %v1605, 2
        %v1607 = vadd.f32 %v1605, %v1606
        %v1608 = vrot.slane %v1607, 1
        %v1609 = vadd.f32 %v1607, %v1608
        %v1610 = vsel %vm868, %v1338, 0.0
        %v1611 = vsel %vm868, %v1340, 0.0
        %v1612 = vadd.f32 %v1610, %v1611
        %v1613 = vrot.slane %v1612, 4
        %v1614 = vadd.f32 %v1612, %v1613
        %v1615 = vrot.slane %v1614, 2
        %v1616 = vadd.f32 %v1614, %v1615
        %v1617 = vrot.slane %v1616, 1
        %v1618 = vadd.f32 %v1616, %v1617
        %v1619 = vsel %vm868, %v1342, 0.0
        %v1620 = vsel %vm868, %v1344, 0.0
        %v1621 = vadd.f32 %v1619, %v1620
        %v1622 = vrot.slane %v1621, 4
        %v1623 = vadd.f32 %v1621, %v1622
        %v1624 = vrot.slane %v1623, 2
        %v1625 = vadd.f32 %v1623, %v1624
        %v1626 = vrot.slane %v1625, 1
        %v1627 = vadd.f32 %v1625, %v1626
        %v1628 = vsel %vm868, %v1346, 0.0
        %v1629 = vsel %vm868, %v1348, 0.0
        %v1630 = vadd.f32 %v1628, %v1629
        %v1631 = vrot.slane %v1630, 4
        %v1632 = vadd.f32 %v1630, %v1631
        %v1633 = vrot.slane %v1632, 2
        %v1634 = vadd.f32 %v1632, %v1633
        %v1635 = vrot.slane %v1634, 1
        %v1636 = vadd.f32 %v1634, %v1635
        %v1637 = vrcp.pop %v1357
        %v1638 = vrcp.pop %v1366
        %v1639 = vrcp.pop %v1375
        %v1640 = vrcp.pop %v1384
        %v1641 = vrcp.pop %v1393
        %v1642 = vrcp.pop %v1402
        %v1643 = vrcp.pop %v1411
        %v1644 = vrcp.pop %v1420
        %v1645 = vrcp.pop %v1429
        %v1646 = vrcp.pop %v1438
        %v1647 = vrcp.pop %v1447
        %v1648 = vrcp.pop %v1456
        %v1649 = vrcp.pop %v1465
        %v1650 = vrcp.pop %v1474
        %v1651 = vrcp.pop %v1483
        %v1652 = vrcp.pop %v1492
        %v1653 = vrcp.pop %v1501
        %v1654 = vrcp.pop %v1510
        %v1655 = vrcp.pop %v1519
        %v1656 = vrcp.pop %v1528
        %v1657 = vrcp.pop %v1537
        %v1658 = vrcp.pop %v1546
        %v1659 = vrcp.pop %v1555
        %v1660 = vrcp.pop %v1564
        %v1661 = vrcp.pop %v1573
        %v1662 = vrcp.pop %v1582
        %v1663 = vrcp.pop %v1591
        %v1664 = vrcp.pop %v1600
        %v1665 = vrcp.pop %v1609
        %v1666 = vrcp.pop %v1618
        %v1667 = vrcp.pop %v1627
        %v1668 = vrcp.pop %v1636
        %v1669 = vmul.f32 %v1222, %v1637
        %v1670 = vmul.f32 %v1224, %v1637
        %v1671 = vmul.f32 %v1226, %v1638
        %v1672 = vmul.f32 %v1228, %v1638
        %v1673 = vmul.f32 %v1230, %v1639
        %v1674 = vmul.f32 %v1232, %v1639
        %v1675 = vmul.f32 %v1234, %v1640
        %v1676 = vmul.f32 %v1236, %v1640
        %v1677 = vmul.f32 %v1238, %v1641
        %v1678 = vmul.f32 %v1240, %v1641
        %v1679 = vmul.f32 %v1242, %v1642
        %v1680 = vmul.f32 %v1244, %v1642
        %v1681 = vmul.f32 %v1246, %v1643
        %v1682 = vmul.f32 %v1248, %v1643
        %v1683 = vmul.f32 %v1250, %v1644
        %v1684 = vmul.f32 %v1252, %v1644
        %v1685 = vmul.f32 %v1254, %v1645
        %v1686 = vmul.f32 %v1256, %v1645
        %v1687 = vmul.f32 %v1258, %v1646
        %v1688 = vmul.f32 %v1260, %v1646
        %v1689 = vmul.f32 %v1262, %v1647
        %v1690 = vmul.f32 %v1264, %v1647
        %v1691 = vmul.f32 %v1266, %v1648
        %v1692 = vmul.f32 %v1268, %v1648
        %v1693 = vmul.f32 %v1270, %v1649
        %v1694 = vmul.f32 %v1272, %v1649
        %v1695 = vmul.f32 %v1274, %v1650
        %v1696 = vmul.f32 %v1276, %v1650
        %v1697 = vmul.f32 %v1278, %v1651
        %v1698 = vmul.f32 %v1280, %v1651
        %v1699 = vmul.f32 %v1282, %v1652
        %v1700 = vmul.f32 %v1284, %v1652
        %v1701 = vmul.f32 %v1286, %v1653
        %v1702 = vmul.f32 %v1288, %v1653
        %v1703 = vmul.f32 %v1290, %v1654
        %v1704 = vmul.f32 %v1292, %v1654
        %v1705 = vmul.f32 %v1294, %v1655
        %v1706 = vmul.f32 %v1296, %v1655
        %v1707 = vmul.f32 %v1298, %v1656
        %v1708 = vmul.f32 %v1300, %v1656
        %v1709 = vmul.f32 %v1302, %v1657
        %v1710 = vmul.f32 %v1304, %v1657
        %v1711 = vmul.f32 %v1306, %v1658
        %v1712 = vmul.f32 %v1308, %v1658
        %v1713 = vmul.f32 %v1310, %v1659
        %v1714 = vmul.f32 %v1312, %v1659
        %v1715 = vmul.f32 %v1314, %v1660
        %v1716 = vmul.f32 %v1316, %v1660
        %v1717 = vmul.f32 %v1318, %v1661
        %v1718 = vmul.f32 %v1320, %v1661
        %v1719 = vmul.f32 %v1322, %v1662
        %v1720 = vmul.f32 %v1324, %v1662
        %v1721 = vmul.f32 %v1326, %v1663
        %v1722 = vmul.f32 %v1328, %v1663
        %v1723 = vmul.f32 %v1330, %v1664
        %v1724 = vmul.f32 %v1332, %v1664
        %v1725 = vmul.f32 %v1334, %v1665
        %v1726 = vmul.f32 %v1336, %v1665
        %v1727 = vmul.f32 %v1338, %v1666
        %v1728 = vmul.f32 %v1340, %v1666
        %v1729 = vmul.f32 %v1342, %v1667
        %v1730 = vmul.f32 %v1344, %v1667
        %v1731 = vmul.f32 %v1346, %v1668
        %v1732 = vmul.f32 %v1348, %v1668
        %v1733 = vpack.c.bf16 %v1670, %v1669
        %v1734 = vpack.c.bf16 %v1672, %v1671
        %v1735 = vpack.c.bf16 %v1674, %v1673
        %v1736 = vpack.c.bf16 %v1676, %v1675
        %v1737 = vpack.c.bf16 %v1678, %v1677
        %v1738 = vpack.c.bf16 %v1680, %v1679
        %v1739 = vpack.c.bf16 %v1682, %v1681
        %v1740 = vpack.c.bf16 %v1684, %v1683
        %v1741 = vpack.c.bf16 %v1686, %v1685
        %v1742 = vpack.c.bf16 %v1688, %v1687
        %v1743 = vpack.c.bf16 %v1690, %v1689
        %v1744 = vpack.c.bf16 %v1692, %v1691
        %v1745 = vpack.c.bf16 %v1694, %v1693
        %v1746 = vpack.c.bf16 %v1696, %v1695
        %v1747 = vpack.c.bf16 %v1698, %v1697
        %v1748 = vpack.c.bf16 %v1700, %v1699
        %v1749 = vpack.c.bf16 %v1702, %v1701
        %v1750 = vpack.c.bf16 %v1704, %v1703
        %v1751 = vpack.c.bf16 %v1706, %v1705
        %v1752 = vpack.c.bf16 %v1708, %v1707
        %v1753 = vpack.c.bf16 %v1710, %v1709
        %v1754 = vpack.c.bf16 %v1712, %v1711
        %v1755 = vpack.c.bf16 %v1714, %v1713
        %v1756 = vpack.c.bf16 %v1716, %v1715
        %v1757 = vpack.c.bf16 %v1718, %v1717
        %v1758 = vpack.c.bf16 %v1720, %v1719
        %v1759 = vpack.c.bf16 %v1722, %v1721
        %v1760 = vpack.c.bf16 %v1724, %v1723
        %v1761 = vpack.c.bf16 %v1726, %v1725
        %v1762 = vpack.c.bf16 %v1728, %v1727
        %v1763 = vpack.c.bf16 %v1730, %v1729
        %v1764 = vpack.c.bf16 %v1732, %v1731
        %1765 = vxpose.xlu0.c.b16.start [1/8] %v1733, 128
        %1766 = vxpose.xlu0.c.b16.cont [2/8] 0, 128
        %1767 = vxpose.xlu0.c.b16.cont [3/8] 0, 128
        %1768 = vxpose.xlu0.c.b16.cont [4/8] 0, 128
        %1769 = vxpose.xlu0.c.b16.cont [5/8] 0, 128
        %1770 = vxpose.xlu0.c.b16.cont [6/8] 0, 128
        %1771 = vxpose.xlu0.c.b16.cont [7/8] 0, 128
        %1772 = vxpose.xlu0.c.b16.end [8/8] 0, 128
        %v1773 = vpop.trf.xlu0
        %v1774 = vpop.trf.xlu0
        %v1775 = vpop.trf.xlu0
        %v1776 = vpop.trf.xlu0
        %v1777 = vpop.trf.xlu0
        %v1778 = vpop.trf.xlu0
        %v1779 = vpop.trf.xlu0
        %v1780 = vpop.trf.xlu0
        %v1783 = vsel %vm868, %v1773, 0
        %1785 = vmatprep.subr.bf16.mxu0 0
        %1786 = vmatpush1.bf16.msra.mxu0 0
        %1787 = vmatprep.subr.bf16.mxu0 0
        %1788 = vmatpush1.bf16.msra.mxu0 0
        %1789 = vmatprep.subr.bf16.mxu0 0
        %1790 = vmatpush1.bf16.msra.mxu0 0
        %1791 = vmatprep.subr.bf16.mxu0 0
        %1792 = vmatpush1.bf16.msra.mxu0 0
        %1793 = vmatprep.subr.bf16.mxu0 0
        %1794 = vmatpush1.bf16.msra.mxu0 0
        %1795 = vmatprep.subr.bf16.mxu0 0
        %1796 = vmatpush1.bf16.msra.mxu0 0
        %1797 = vmatprep.subr.bf16.mxu0 0
        %1798 = vmatpush1.bf16.msra.mxu0 0
        %1799 = vmatprep.subr.bf16.mxu0 0
        %1800 = vmatpush1.bf16.msra.mxu0 %v372
        %1801 = vmatprep.subr.bf16.mxu0 0
        %1802 = vmatpush2.bf16.msra.mxu0 0
        %1803 = vmatprep.subr.bf16.mxu0 0
        %1804 = vmatpush2.bf16.msra.mxu0 0
        %1805 = vmatprep.subr.bf16.mxu0 0
        %1806 = vmatpush2.bf16.msra.mxu0 0
        %1807 = vmatprep.subr.bf16.mxu0 0
        %1808 = vmatpush2.bf16.msra.mxu0 0
        %1809 = vmatprep.subr.bf16.mxu0 0
        %1810 = vmatpush2.bf16.msra.mxu0 0
        %1811 = vmatprep.subr.bf16.mxu0 0
        %1812 = vmatpush2.bf16.msra.mxu0 0
        %1813 = vmatprep.subr.bf16.mxu0 0
        %1814 = vmatpush2.bf16.msra.mxu0 0
        %1815 = vmatprep.subr.bf16.mxu0 0
        %1816 = vmatpush2.bf16.msra.mxu0 0
        %1817 = vmatprep.mubr.bf16.mxu0 0
        %1818 = vmatmul.mubr.bf16.gmra.mxu0 %v1783
        %v1819 = vpop.f32.mrf.mxu0
        %v1820 = vadd.f32 0.0, %v1819
        %v1821 = vpop.f32.mrf.mxu0
        %v1822 = vpop.f32.mrf.mxu0
        %v1823 = vadd.f32 0.0, %v1822
        %v1824 = vpop.f32.mrf.mxu0
        %1825 = vdwg.mxu0
        %1826 = vxpose.xlu0.c.b16.start [1/8] %v1734, 128
        %1827 = vxpose.xlu0.c.b16.cont [2/8] 0, 128
        %1828 = vxpose.xlu0.c.b16.cont [3/8] 0, 128
        %1829 = vxpose.xlu0.c.b16.cont [4/8] 0, 128
        %1830 = vxpose.xlu0.c.b16.cont [5/8] 0, 128
        %1831 = vxpose.xlu0.c.b16.cont [6/8] 0, 128
        %1832 = vxpose.xlu0.c.b16.cont [7/8] 0, 128
        %1833 = vxpose.xlu0.c.b16.end [8/8] 0, 128
        %v1834 = vpop.trf.xlu0
        %v1835 = vpop.trf.xlu0
        %v1836 = vpop.trf.xlu0
        %v1837 = vpop.trf.xlu0
        %v1838 = vpop.trf.xlu0
        %v1839 = vpop.trf.xlu0
        %v1840 = vpop.trf.xlu0
        %v1841 = vpop.trf.xlu0
        %v1844 = vsel %vm868, %v1834, 0
        %1846 = vmatprep.subr.bf16.mxu0 0
        %1847 = vmatpush1.bf16.msra.mxu0 0
        %1848 = vmatprep.subr.bf16.mxu0 0
        %1849 = vmatpush1.bf16.msra.mxu0 0
        %1850 = vmatprep.subr.bf16.mxu0 0
        %1851 = vmatpush1.bf16.msra.mxu0 0
        %1852 = vmatprep.subr.bf16.mxu0 0
        %1853 = vmatpush1.bf16.msra.mxu0 0
        %1854 = vmatprep.subr.bf16.mxu0 0
        %1855 = vmatpush1.bf16.msra.mxu0 0
        %1856 = vmatprep.subr.bf16.mxu0 0
        %1857 = vmatpush1.bf16.msra.mxu0 0
        %1858 = vmatprep.subr.bf16.mxu0 0
        %1859 = vmatpush1.bf16.msra.mxu0 0
        %1860 = vmatprep.subr.bf16.mxu0 0
        %1861 = vmatpush1.bf16.msra.mxu0 %v373
        %1862 = vmatprep.subr.bf16.mxu0 0
        %1863 = vmatpush2.bf16.msra.mxu0 0
        %1864 = vmatprep.subr.bf16.mxu0 0
        %1865 = vmatpush2.bf16.msra.mxu0 0
        %1866 = vmatprep.subr.bf16.mxu0 0
        %1867 = vmatpush2.bf16.msra.mxu0 0
        %1868 = vmatprep.subr.bf16.mxu0 0
        %1869 = vmatpush2.bf16.msra.mxu0 0
        %1870 = vmatprep.subr.bf16.mxu0 0
        %1871 = vmatpush2.bf16.msra.mxu0 0
        %1872 = vmatprep.subr.bf16.mxu0 0
        %1873 = vmatpush2.bf16.msra.mxu0 0
        %1874 = vmatprep.subr.bf16.mxu0 0
        %1875 = vmatpush2.bf16.msra.mxu0 0
        %1876 = vmatprep.subr.bf16.mxu0 0
        %1877 = vmatpush2.bf16.msra.mxu0 0
        %1878 = vmatprep.mubr.bf16.mxu0 0
        %1879 = vmatmul.mubr.bf16.gmra.mxu0 %v1844
        %v1880 = vpop.f32.mrf.mxu0
        %v1881 = vadd.f32 0.0, %v1880
        %v1882 = vpop.f32.mrf.mxu0
        %v1883 = vpop.f32.mrf.mxu0
        %v1884 = vadd.f32 0.0, %v1883
        %v1885 = vpop.f32.mrf.mxu0
        %1886 = vdwg.mxu0
        %1887 = vxpose.xlu0.c.b16.start [1/8] %v1735, 128
        %1888 = vxpose.xlu0.c.b16.cont [2/8] 0, 128
        %1889 = vxpose.xlu0.c.b16.cont [3/8] 0, 128
        %1890 = vxpose.xlu0.c.b16.cont [4/8] 0, 128
        %1891 = vxpose.xlu0.c.b16.cont [5/8] 0, 128
        %1892 = vxpose.xlu0.c.b16.cont [6/8] 0, 128
        %1893 = vxpose.xlu0.c.b16.cont [7/8] 0, 128
        %1894 = vxpose.xlu0.c.b16.end [8/8] 0, 128
        %v1895 = vpop.trf.xlu0
        %v1896 = vpop.trf.xlu0
        %v1897 = vpop.trf.xlu0
        %v1898 = vpop.trf.xlu0
        %v1899 = vpop.trf.xlu0
        %v1900 = vpop.trf.xlu0
        %v1901 = vpop.trf.xlu0
        %v1902 = vpop.trf.xlu0
        %v1905 = vsel %vm868, %v1895, 0
        %1907 = vmatprep.subr.bf16.mxu0 0
        %1908 = vmatpush1.bf16.msra.mxu0 0
        %1909 = vmatprep.subr.bf16.mxu0 0
        %1910 = vmatpush1.bf16.msra.mxu0 0
        %1911 = vmatprep.subr.bf16.mxu0 0
        %1912 = vmatpush1.bf16.msra.mxu0 0
        %1913 = vmatprep.subr.bf16.mxu0 0
        %1914 = vmatpush1.bf16.msra.mxu0 0
        %1915 = vmatprep.subr.bf16.mxu0 0
        %1916 = vmatpush1.bf16.msra.mxu0 0
        %1917 = vmatprep.subr.bf16.mxu0 0
        %1918 = vmatpush1.bf16.msra.mxu0 0
        %1919 = vmatprep.subr.bf16.mxu0 0
        %1920 = vmatpush1.bf16.msra.mxu0 0
        %1921 = vmatprep.subr.bf16.mxu0 0
        %1922 = vmatpush1.bf16.msra.mxu0 %v374
        %1923 = vmatprep.subr.bf16.mxu0 0
        %1924 = vmatpush2.bf16.msra.mxu0 0
        %1925 = vmatprep.subr.bf16.mxu0 0
        %1926 = vmatpush2.bf16.msra.mxu0 0
        %1927 = vmatprep.subr.bf16.mxu0 0
        %1928 = vmatpush2.bf16.msra.mxu0 0
        %1929 = vmatprep.subr.bf16.mxu0 0
        %1930 = vmatpush2.bf16.msra.mxu0 0
        %1931 = vmatprep.subr.bf16.mxu0 0
        %1932 = vmatpush2.bf16.msra.mxu0 0
        %1933 = vmatprep.subr.bf16.mxu0 0
        %1934 = vmatpush2.bf16.msra.mxu0 0
        %1935 = vmatprep.subr.bf16.mxu0 0
        %1936 = vmatpush2.bf16.msra.mxu0 0
        %1937 = vmatprep.subr.bf16.mxu0 0
        %1938 = vmatpush2.bf16.msra.mxu0 0
        %1939 = vmatprep.mubr.bf16.mxu0 0
        %1940 = vmatmul.mubr.bf16.gmra.mxu0 %v1905
        %v1941 = vpop.f32.mrf.mxu0
        %v1942 = vadd.f32 0.0, %v1941
        %v1943 = vpop.f32.mrf.mxu0
        %v1944 = vpop.f32.mrf.mxu0
        %v1945 = vadd.f32 0.0, %v1944
        %v1946 = vpop.f32.mrf.mxu0
        %1947 = vdwg.mxu0
        %1948 = vxpose.xlu0.c.b16.start [1/8] %v1736, 128
        %1949 = vxpose.xlu0.c.b16.cont [2/8] 0, 128
        %1950 = vxpose.xlu0.c.b16.cont [3/8] 0, 128
        %1951 = vxpose.xlu0.c.b16.cont [4/8] 0, 128
        %1952 = vxpose.xlu0.c.b16.cont [5/8] 0, 128
        %1953 = vxpose.xlu0.c.b16.cont [6/8] 0, 128
        %1954 = vxpose.xlu0.c.b16.cont [7/8] 0, 128
        %1955 = vxpose.xlu0.c.b16.end [8/8] 0, 128
        %v1956 = vpop.trf.xlu0
        %v1957 = vpop.trf.xlu0
        %v1958 = vpop.trf.xlu0
        %v1959 = vpop.trf.xlu0
        %v1960 = vpop.trf.xlu0
        %v1961 = vpop.trf.xlu0
        %v1962 = vpop.trf.xlu0
        %v1963 = vpop.trf.xlu0
        %v1966 = vsel %vm868, %v1956, 0
        %1968 = vmatprep.subr.bf16.mxu0 0
        %1969 = vmatpush1.bf16.msra.mxu0 0
        %1970 = vmatprep.subr.bf16.mxu0 0
        %1971 = vmatpush1.bf16.msra.mxu0 0
        %1972 = vmatprep.subr.bf16.mxu0 0
        %1973 = vmatpush1.bf16.msra.mxu0 0
        %1974 = vmatprep.subr.bf16.mxu0 0
        %1975 = vmatpush1.bf16.msra.mxu0 0
        %1976 = vmatprep.subr.bf16.mxu0 0
        %1977 = vmatpush1.bf16.msra.mxu0 0
        %1978 = vmatprep.subr.bf16.mxu0 0
        %1979 = vmatpush1.bf16.msra.mxu0 0
        %1980 = vmatprep.subr.bf16.mxu0 0
        %1981 = vmatpush1.bf16.msra.mxu0 0
        %1982 = vmatprep.subr.bf16.mxu0 0
        %1983 = vmatpush1.bf16.msra.mxu0 %v375
        %1984 = vmatprep.subr.bf16.mxu0 0
        %1985 = vmatpush2.bf16.msra.mxu0 0
        %1986 = vmatprep.subr.bf16.mxu0 0
        %1987 = vmatpush2.bf16.msra.mxu0 0
        %1988 = vmatprep.subr.bf16.mxu0 0
        %1989 = vmatpush2.bf16.msra.mxu0 0
        %1990 = vmatprep.subr.bf16.mxu0 0
        %1991 = vmatpush2.bf16.msra.mxu0 0
        %1992 = vmatprep.subr.bf16.mxu0 0
        %1993 = vmatpush2.bf16.msra.mxu0 0
        %1994 = vmatprep.subr.bf16.mxu0 0
        %1995 = vmatpush2.bf16.msra.mxu0 0
        %1996 = vmatprep.subr.bf16.mxu0 0
        %1997 = vmatpush2.bf16.msra.mxu0 0
        %1998 = vmatprep.subr.bf16.mxu0 0
        %1999 = vmatpush2.bf16.msra.mxu0 0
        %2000 = vmatprep.mubr.bf16.mxu0 0
        %2001 = vmatmul.mubr.bf16.gmra.mxu0 %v1966
        %v2002 = vpop.f32.mrf.mxu0
        %v2003 = vadd.f32 0.0, %v2002
        %v2004 = vpop.f32.mrf.mxu0
        %v2005 = vpop.f32.mrf.mxu0
        %v2006 = vadd.f32 0.0, %v2005
        %v2007 = vpop.f32.mrf.mxu0
        %2008 = vdwg.mxu0
        %2009 = vxpose.xlu0.c.b16.start [1/8] %v1737, 128
        %2010 = vxpose.xlu0.c.b16.cont [2/8] 0, 128
        %2011 = vxpose.xlu0.c.b16.cont [3/8] 0, 128
        %2012 = vxpose.xlu0.c.b16.cont [4/8] 0, 128
        %2013 = vxpose.xlu0.c.b16.cont [5/8] 0, 128
        %2014 = vxpose.xlu0.c.b16.cont [6/8] 0, 128
        %2015 = vxpose.xlu0.c.b16.cont [7/8] 0, 128
        %2016 = vxpose.xlu0.c.b16.end [8/8] 0, 128
        %v2017 = vpop.trf.xlu0
        %v2018 = vpop.trf.xlu0
        %v2019 = vpop.trf.xlu0
        %v2020 = vpop.trf.xlu0
        %v2021 = vpop.trf.xlu0
        %v2022 = vpop.trf.xlu0
        %v2023 = vpop.trf.xlu0
        %v2024 = vpop.trf.xlu0
        %v2027 = vsel %vm868, %v2017, 0
        %2029 = vmatprep.subr.bf16.mxu0 0
        %2030 = vmatpush1.bf16.msra.mxu0 0
        %2031 = vmatprep.subr.bf16.mxu0 0
        %2032 = vmatpush1.bf16.msra.mxu0 0
        %2033 = vmatprep.subr.bf16.mxu0 0
        %2034 = vmatpush1.bf16.msra.mxu0 0
        %2035 = vmatprep.subr.bf16.mxu0 0
        %2036 = vmatpush1.bf16.msra.mxu0 0
        %2037 = vmatprep.subr.bf16.mxu0 0
        %2038 = vmatpush1.bf16.msra.mxu0 0
        %2039 = vmatprep.subr.bf16.mxu0 0
        %2040 = vmatpush1.bf16.msra.mxu0 0
        %2041 = vmatprep.subr.bf16.mxu0 0
        %2042 = vmatpush1.bf16.msra.mxu0 0
        %2043 = vmatprep.subr.bf16.mxu0 0
        %2044 = vmatpush1.bf16.msra.mxu0 %v376
        %2045 = vmatprep.subr.bf16.mxu0 0
        %2046 = vmatpush2.bf16.msra.mxu0 0
        %2047 = vmatprep.subr.bf16.mxu0 0
        %2048 = vmatpush2.bf16.msra.mxu0 0
        %2049 = vmatprep.subr.bf16.mxu0 0
        %2050 = vmatpush2.bf16.msra.mxu0 0
        %2051 = vmatprep.subr.bf16.mxu0 0
        %2052 = vmatpush2.bf16.msra.mxu0 0
        %2053 = vmatprep.subr.bf16.mxu0 0
        %2054 = vmatpush2.bf16.msra.mxu0 0
        %2055 = vmatprep.subr.bf16.mxu0 0
        %2056 = vmatpush2.bf16.msra.mxu0 0
        %2057 = vmatprep.subr.bf16.mxu0 0
        %2058 = vmatpush2.bf16.msra.mxu0 0
        %2059 = vmatprep.subr.bf16.mxu0 0
        %2060 = vmatpush2.bf16.msra.mxu0 0
        %2061 = vmatprep.mubr.bf16.mxu0 0
        %2062 = vmatmul.mubr.bf16.gmra.mxu0 %v2027
        %v2063 = vpop.f32.mrf.mxu0
        %v2064 = vadd.f32 0.0, %v2063
        %v2065 = vpop.f32.mrf.mxu0
        %v2066 = vpop.f32.mrf.mxu0
        %v2067 = vadd.f32 0.0, %v2066
        %v2068 = vpop.f32.mrf.mxu0
        %2069 = vdwg.mxu0
        %2070 = vxpose.xlu0.c.b16.start [1/8] %v1738, 128
        %2071 = vxpose.xlu0.c.b16.cont [2/8] 0, 128
        %2072 = vxpose.xlu0.c.b16.cont [3/8] 0, 128
        %2073 = vxpose.xlu0.c.b16.cont [4/8] 0, 128
        %2074 = vxpose.xlu0.c.b16.cont [5/8] 0, 128
        %2075 = vxpose.xlu0.c.b16.cont [6/8] 0, 128
        %2076 = vxpose.xlu0.c.b16.cont [7/8] 0, 128
        %2077 = vxpose.xlu0.c.b16.end [8/8] 0, 128
        %v2078 = vpop.trf.xlu0
        %v2079 = vpop.trf.xlu0
        %v2080 = vpop.trf.xlu0
        %v2081 = vpop.trf.xlu0
        %v2082 = vpop.trf.xlu0
        %v2083 = vpop.trf.xlu0
        %v2084 = vpop.trf.xlu0
        %v2085 = vpop.trf.xlu0
        %v2088 = vsel %vm868, %v2078, 0
        %2090 = vmatprep.subr.bf16.mxu0 0
        %2091 = vmatpush1.bf16.msra.mxu0 0
        %2092 = vmatprep.subr.bf16.mxu0 0
        %2093 = vmatpush1.bf16.msra.mxu0 0
        %2094 = vmatprep.subr.bf16.mxu0 0
        %2095 = vmatpush1.bf16.msra.mxu0 0
        %2096 = vmatprep.subr.bf16.mxu0 0
        %2097 = vmatpush1.bf16.msra.mxu0 0
        %2098 = vmatprep.subr.bf16.mxu0 0
        %2099 = vmatpush1.bf16.msra.mxu0 0
        %2100 = vmatprep.subr.bf16.mxu0 0
        %2101 = vmatpush1.bf16.msra.mxu0 0
        %2102 = vmatprep.subr.bf16.mxu0 0
        %2103 = vmatpush1.bf16.msra.mxu0 0
        %2104 = vmatprep.subr.bf16.mxu0 0
        %2105 = vmatpush1.bf16.msra.mxu0 %v377
        %2106 = vmatprep.subr.bf16.mxu0 0
        %2107 = vmatpush2.bf16.msra.mxu0 0
        %2108 = vmatprep.subr.bf16.mxu0 0
        %2109 = vmatpush2.bf16.msra.mxu0 0
        %2110 = vmatprep.subr.bf16.mxu0 0
        %2111 = vmatpush2.bf16.msra.mxu0 0
        %2112 = vmatprep.subr.bf16.mxu0 0
        %2113 = vmatpush2.bf16.msra.mxu0 0
        %2114 = vmatprep.subr.bf16.mxu0 0
        %2115 = vmatpush2.bf16.msra.mxu0 0
        %2116 = vmatprep.subr.bf16.mxu0 0
        %2117 = vmatpush2.bf16.msra.mxu0 0
        %2118 = vmatprep.subr.bf16.mxu0 0
        %2119 = vmatpush2.bf16.msra.mxu0 0
        %2120 = vmatprep.subr.bf16.mxu0 0
        %2121 = vmatpush2.bf16.msra.mxu0 0
        %2122 = vmatprep.mubr.bf16.mxu0 0
        %2123 = vmatmul.mubr.bf16.gmra.mxu0 %v2088
        %v2124 = vpop.f32.mrf.mxu0
        %v2125 = vadd.f32 0.0, %v2124
        %v2126 = vpop.f32.mrf.mxu0
        %v2127 = vpop.f32.mrf.mxu0
        %v2128 = vadd.f32 0.0, %v2127
        %v2129 = vpop.f32.mrf.mxu0
        %2130 = vdwg.mxu0
        %2131 = vxpose.xlu0.c.b16.start [1/8] %v1739, 128
        %2132 = vxpose.xlu0.c.b16.cont [2/8] 0, 128
        %2133 = vxpose.xlu0.c.b16.cont [3/8] 0, 128
        %2134 = vxpose.xlu0.c.b16.cont [4/8] 0, 128
        %2135 = vxpose.xlu0.c.b16.cont [5/8] 0, 128
        %2136 = vxpose.xlu0.c.b16.cont [6/8] 0, 128
        %2137 = vxpose.xlu0.c.b16.cont [7/8] 0, 128
        %2138 = vxpose.xlu0.c.b16.end [8/8] 0, 128
        %v2139 = vpop.trf.xlu0
        %v2140 = vpop.trf.xlu0
        %v2141 = vpop.trf.xlu0
        %v2142 = vpop.trf.xlu0
        %v2143 = vpop.trf.xlu0
        %v2144 = vpop.trf.xlu0
        %v2145 = vpop.trf.xlu0
        %v2146 = vpop.trf.xlu0
        %v2149 = vsel %vm868, %v2139, 0
        %2151 = vmatprep.subr.bf16.mxu0 0
        %2152 = vmatpush1.bf16.msra.mxu0 0
        %2153 = vmatprep.subr.bf16.mxu0 0
        %2154 = vmatpush1.bf16.msra.mxu0 0
        %2155 = vmatprep.subr.bf16.mxu0 0
        %2156 = vmatpush1.bf16.msra.mxu0 0
        %2157 = vmatprep.subr.bf16.mxu0 0
        %2158 = vmatpush1.bf16.msra.mxu0 0
        %2159 = vmatprep.subr.bf16.mxu0 0
        %2160 = vmatpush1.bf16.msra.mxu0 0
        %2161 = vmatprep.subr.bf16.mxu0 0
        %2162 = vmatpush1.bf16.msra.mxu0 0
        %2163 = vmatprep.subr.bf16.mxu0 0
        %2164 = vmatpush1.bf16.msra.mxu0 0
        %2165 = vmatprep.subr.bf16.mxu0 0
        %2166 = vmatpush1.bf16.msra.mxu0 %v378
        %2167 = vmatprep.subr.bf16.mxu0 0
        %2168 = vmatpush2.bf16.msra.mxu0 0
        %2169 = vmatprep.subr.bf16.mxu0 0
        %2170 = vmatpush2.bf16.msra.mxu0 0
        %2171 = vmatprep.subr.bf16.mxu0 0
        %2172 = vmatpush2.bf16.msra.mxu0 0
        %2173 = vmatprep.subr.bf16.mxu0 0
        %2174 = vmatpush2.bf16.msra.mxu0 0
        %2175 = vmatprep.subr.bf16.mxu0 0
        %2176 = vmatpush2.bf16.msra.mxu0 0
        %2177 = vmatprep.subr.bf16.mxu0 0
        %2178 = vmatpush2.bf16.msra.mxu0 0
        %2179 = vmatprep.subr.bf16.mxu0 0
        %2180 = vmatpush2.bf16.msra.mxu0 0
        %2181 = vmatprep.subr.bf16.mxu0 0
        %2182 = vmatpush2.bf16.msra.mxu0 0
        %2183 = vmatprep.mubr.bf16.mxu0 0
        %2184 = vmatmul.mubr.bf16.gmra.mxu0 %v2149
        %v2185 = vpop.f32.mrf.mxu0
        %v2186 = vadd.f32 0.0, %v2185
        %v2187 = vpop.f32.mrf.mxu0
        %v2188 = vpop.f32.mrf.mxu0
        %v2189 = vadd.f32 0.0, %v2188
        %v2190 = vpop.f32.mrf.mxu0
        %2191 = vdwg.mxu0
        %2192 = vxpose.xlu0.c.b16.start [1/8] %v1740, 128
        %2193 = vxpose.xlu0.c.b16.cont [2/8] 0, 128
        %2194 = vxpose.xlu0.c.b16.cont [3/8] 0, 128
        %2195 = vxpose.xlu0.c.b16.cont [4/8] 0, 128
        %2196 = vxpose.xlu0.c.b16.cont [5/8] 0, 128
        %2197 = vxpose.xlu0.c.b16.cont [6/8] 0, 128
        %2198 = vxpose.xlu0.c.b16.cont [7/8] 0, 128
        %2199 = vxpose.xlu0.c.b16.end [8/8] 0, 128
        %v2200 = vpop.trf.xlu0
        %v2201 = vpop.trf.xlu0
        %v2202 = vpop.trf.xlu0
        %v2203 = vpop.trf.xlu0
        %v2204 = vpop.trf.xlu0
        %v2205 = vpop.trf.xlu0
        %v2206 = vpop.trf.xlu0
        %v2207 = vpop.trf.xlu0
        %v2210 = vsel %vm868, %v2200, 0
        %2212 = vmatprep.subr.bf16.mxu0 0
        %2213 = vmatpush1.bf16.msra.mxu0 0
        %2214 = vmatprep.subr.bf16.mxu0 0
        %2215 = vmatpush1.bf16.msra.mxu0 0
        %2216 = vmatprep.subr.bf16.mxu0 0
        %2217 = vmatpush1.bf16.msra.mxu0 0
        %2218 = vmatprep.subr.bf16.mxu0 0
        %2219 = vmatpush1.bf16.msra.mxu0 0
        %2220 = vmatprep.subr.bf16.mxu0 0
        %2221 = vmatpush1.bf16.msra.mxu0 0
        %2222 = vmatprep.subr.bf16.mxu0 0
        %2223 = vmatpush1.bf16.msra.mxu0 0
        %2224 = vmatprep.subr.bf16.mxu0 0
        %2225 = vmatpush1.bf16.msra.mxu0 0
        %2226 = vmatprep.subr.bf16.mxu0 0
        %2227 = vmatpush1.bf16.msra.mxu0 %v379
        %2228 = vmatprep.subr.bf16.mxu0 0
        %2229 = vmatpush2.bf16.msra.mxu0 0
        %2230 = vmatprep.subr.bf16.mxu0 0
        %2231 = vmatpush2.bf16.msra.mxu0 0
        %2232 = vmatprep.subr.bf16.mxu0 0
        %2233 = vmatpush2.bf16.msra.mxu0 0
        %2234 = vmatprep.subr.bf16.mxu0 0
        %2235 = vmatpush2.bf16.msra.mxu0 0
        %2236 = vmatprep.subr.bf16.mxu0 0
        %2237 = vmatpush2.bf16.msra.mxu0 0
        %2238 = vmatprep.subr.bf16.mxu0 0
        %2239 = vmatpush2.bf16.msra.mxu0 0
        %2240 = vmatprep.subr.bf16.mxu0 0
        %2241 = vmatpush2.bf16.msra.mxu0 0
        %2242 = vmatprep.subr.bf16.mxu0 0
        %2243 = vmatpush2.bf16.msra.mxu0 0
        %2244 = vmatprep.mubr.bf16.mxu0 0
        %2245 = vmatmul.mubr.bf16.gmra.mxu0 %v2210
        %v2246 = vpop.f32.mrf.mxu0
        %v2247 = vadd.f32 0.0, %v2246
        %v2248 = vpop.f32.mrf.mxu0
        %v2249 = vpop.f32.mrf.mxu0
        %v2250 = vadd.f32 0.0, %v2249
        %v2251 = vpop.f32.mrf.mxu0
        %2252 = vdwg.mxu0
        %2253 = vxpose.xlu0.c.b16.start [1/8] %v1741, 128
        %2254 = vxpose.xlu0.c.b16.cont [2/8] 0, 128
        %2255 = vxpose.xlu0.c.b16.cont [3/8] 0, 128
        %2256 = vxpose.xlu0.c.b16.cont [4/8] 0, 128
        %2257 = vxpose.xlu0.c.b16.cont [5/8] 0, 128
        %2258 = vxpose.xlu0.c.b16.cont [6/8] 0, 128
        %2259 = vxpose.xlu0.c.b16.cont [7/8] 0, 128
        %2260 = vxpose.xlu0.c.b16.end [8/8] 0, 128
        %v2261 = vpop.trf.xlu0
        %v2262 = vpop.trf.xlu0
        %v2263 = vpop.trf.xlu0
        %v2264 = vpop.trf.xlu0
        %v2265 = vpop.trf.xlu0
        %v2266 = vpop.trf.xlu0
        %v2267 = vpop.trf.xlu0
        %v2268 = vpop.trf.xlu0
        %v2271 = vsel %vm868, %v2261, 0
        %2273 = vmatprep.subr.bf16.mxu0 0
        %2274 = vmatpush1.bf16.msra.mxu0 0
        %2275 = vmatprep.subr.bf16.mxu0 0
        %2276 = vmatpush1.bf16.msra.mxu0 0
        %2277 = vmatprep.subr.bf16.mxu0 0
        %2278 = vmatpush1.bf16.msra.mxu0 0
        %2279 = vmatprep.subr.bf16.mxu0 0
        %2280 = vmatpush1.bf16.msra.mxu0 0
        %2281 = vmatprep.subr.bf16.mxu0 0
        %2282 = vmatpush1.bf16.msra.mxu0 0
        %2283 = vmatprep.subr.bf16.mxu0 0
        %2284 = vmatpush1.bf16.msra.mxu0 0
        %2285 = vmatprep.subr.bf16.mxu0 0
        %2286 = vmatpush1.bf16.msra.mxu0 0
        %2287 = vmatprep.subr.bf16.mxu0 0
        %2288 = vmatpush1.bf16.msra.mxu0 %v380
        %2289 = vmatprep.subr.bf16.mxu0 0
        %2290 = vmatpush2.bf16.msra.mxu0 0
        %2291 = vmatprep.subr.bf16.mxu0 0
        %2292 = vmatpush2.bf16.msra.mxu0 0
        %2293 = vmatprep.subr.bf16.mxu0 0
        %2294 = vmatpush2.bf16.msra.mxu0 0
        %2295 = vmatprep.subr.bf16.mxu0 0
        %2296 = vmatpush2.bf16.msra.mxu0 0
        %2297 = vmatprep.subr.bf16.mxu0 0
        %2298 = vmatpush2.bf16.msra.mxu0 0
        %2299 = vmatprep.subr.bf16.mxu0 0
        %2300 = vmatpush2.bf16.msra.mxu0 0
        %2301 = vmatprep.subr.bf16.mxu0 0
        %2302 = vmatpush2.bf16.msra.mxu0 0
        %2303 = vmatprep.subr.bf16.mxu0 0
        %2304 = vmatpush2.bf16.msra.mxu0 0
        %2305 = vmatprep.mubr.bf16.mxu0 0
        %2306 = vmatmul.mubr.bf16.gmra.mxu0 %v2271
        %v2307 = vpop.f32.mrf.mxu0
        %v2308 = vadd.f32 0.0, %v2307
        %v2309 = vpop.f32.mrf.mxu0
        %v2310 = vpop.f32.mrf.mxu0
        %v2311 = vadd.f32 0.0, %v2310
        %v2312 = vpop.f32.mrf.mxu0
        %2313 = vdwg.mxu0
        %2314 = vxpose.xlu0.c.b16.start [1/8] %v1742, 128
        %2315 = vxpose.xlu0.c.b16.cont [2/8] 0, 128
        %2316 = vxpose.xlu0.c.b16.cont [3/8] 0, 128
        %2317 = vxpose.xlu0.c.b16.cont [4/8] 0, 128
        %2318 = vxpose.xlu0.c.b16.cont [5/8] 0, 128
        %2319 = vxpose.xlu0.c.b16.cont [6/8] 0, 128
        %2320 = vxpose.xlu0.c.b16.cont [7/8] 0, 128
        %2321 = vxpose.xlu0.c.b16.end [8/8] 0, 128
        %v2322 = vpop.trf.xlu0
        %v2323 = vpop.trf.xlu0
        %v2324 = vpop.trf.xlu0
        %v2325 = vpop.trf.xlu0
        %v2326 = vpop.trf.xlu0
        %v2327 = vpop.trf.xlu0
        %v2328 = vpop.trf.xlu0
        %v2329 = vpop.trf.xlu0
        %v2332 = vsel %vm868, %v2322, 0
        %2334 = vmatprep.subr.bf16.mxu0 0
        %2335 = vmatpush1.bf16.msra.mxu0 0
        %2336 = vmatprep.subr.bf16.mxu0 0
        %2337 = vmatpush1.bf16.msra.mxu0 0
        %2338 = vmatprep.subr.bf16.mxu0 0
        %2339 = vmatpush1.bf16.msra.mxu0 0
        %2340 = vmatprep.subr.bf16.mxu0 0
        %2341 = vmatpush1.bf16.msra.mxu0 0
        %2342 = vmatprep.subr.bf16.mxu0 0
        %2343 = vmatpush1.bf16.msra.mxu0 0
        %2344 = vmatprep.subr.bf16.mxu0 0
        %2345 = vmatpush1.bf16.msra.mxu0 0
        %2346 = vmatprep.subr.bf16.mxu0 0
        %2347 = vmatpush1.bf16.msra.mxu0 0
        %2348 = vmatprep.subr.bf16.mxu0 0
        %2349 = vmatpush1.bf16.msra.mxu0 %v381
        %2350 = vmatprep.subr.bf16.mxu0 0
        %2351 = vmatpush2.bf16.msra.mxu0 0
        %2352 = vmatprep.subr.bf16.mxu0 0
        %2353 = vmatpush2.bf16.msra.mxu0 0
        %2354 = vmatprep.subr.bf16.mxu0 0
        %2355 = vmatpush2.bf16.msra.mxu0 0
        %2356 = vmatprep.subr.bf16.mxu0 0
        %2357 = vmatpush2.bf16.msra.mxu0 0
        %2358 = vmatprep.subr.bf16.mxu0 0
        %2359 = vmatpush2.bf16.msra.mxu0 0
        %2360 = vmatprep.subr.bf16.mxu0 0
        %2361 = vmatpush2.bf16.msra.mxu0 0
        %2362 = vmatprep.subr.bf16.mxu0 0
        %2363 = vmatpush2.bf16.msra.mxu0 0
        %2364 = vmatprep.subr.bf16.mxu0 0
        %2365 = vmatpush2.bf16.msra.mxu0 0
        %2366 = vmatprep.mubr.bf16.mxu0 0
        %2367 = vmatmul.mubr.bf16.gmra.mxu0 %v2332
        %v2368 = vpop.f32.mrf.mxu0
        %v2369 = vadd.f32 0.0, %v2368
        %v2370 = vpop.f32.mrf.mxu0
        %v2371 = vpop.f32.mrf.mxu0
        %v2372 = vadd.f32 0.0, %v2371
        %v2373 = vpop.f32.mrf.mxu0
        %2374 = vdwg.mxu0
        %2375 = vxpose.xlu0.c.b16.start [1/8] %v1743, 128
        %2376 = vxpose.xlu0.c.b16.cont [2/8] 0, 128
        %2377 = vxpose.xlu0.c.b16.cont [3/8] 0, 128
        %2378 = vxpose.xlu0.c.b16.cont [4/8] 0, 128
        %2379 = vxpose.xlu0.c.b16.cont [5/8] 0, 128
        %2380 = vxpose.xlu0.c.b16.cont [6/8] 0, 128
        %2381 = vxpose.xlu0.c.b16.cont [7/8] 0, 128
        %2382 = vxpose.xlu0.c.b16.end [8/8] 0, 128
        %v2383 = vpop.trf.xlu0
        %v2384 = vpop.trf.xlu0
        %v2385 = vpop.trf.xlu0
        %v2386 = vpop.trf.xlu0
        %v2387 = vpop.trf.xlu0
        %v2388 = vpop.trf.xlu0
        %v2389 = vpop.trf.xlu0
        %v2390 = vpop.trf.xlu0
        %v2393 = vsel %vm868, %v2383, 0
        %2395 = vmatprep.subr.bf16.mxu0 0
        %2396 = vmatpush1.bf16.msra.mxu0 0
        %2397 = vmatprep.subr.bf16.mxu0 0
        %2398 = vmatpush1.bf16.msra.mxu0 0
        %2399 = vmatprep.subr.bf16.mxu0 0
        %2400 = vmatpush1.bf16.msra.mxu0 0
        %2401 = vmatprep.subr.bf16.mxu0 0
        %2402 = vmatpush1.bf16.msra.mxu0 0
        %2403 = vmatprep.subr.bf16.mxu0 0
        %2404 = vmatpush1.bf16.msra.mxu0 0
        %2405 = vmatprep.subr.bf16.mxu0 0
        %2406 = vmatpush1.bf16.msra.mxu0 0
        %2407 = vmatprep.subr.bf16.mxu0 0
        %2408 = vmatpush1.bf16.msra.mxu0 0
        %2409 = vmatprep.subr.bf16.mxu0 0
        %2410 = vmatpush1.bf16.msra.mxu0 %v382
        %2411 = vmatprep.subr.bf16.mxu0 0
        %2412 = vmatpush2.bf16.msra.mxu0 0
        %2413 = vmatprep.subr.bf16.mxu0 0
        %2414 = vmatpush2.bf16.msra.mxu0 0
        %2415 = vmatprep.subr.bf16.mxu0 0
        %2416 = vmatpush2.bf16.msra.mxu0 0
        %2417 = vmatprep.subr.bf16.mxu0 0
        %2418 = vmatpush2.bf16.msra.mxu0 0
        %2419 = vmatprep.subr.bf16.mxu0 0
        %2420 = vmatpush2.bf16.msra.mxu0 0
        %2421 = vmatprep.subr.bf16.mxu0 0
        %2422 = vmatpush2.bf16.msra.mxu0 0
        %2423 = vmatprep.subr.bf16.mxu0 0
        %2424 = vmatpush2.bf16.msra.mxu0 0
        %2425 = vmatprep.subr.bf16.mxu0 0
        %2426 = vmatpush2.bf16.msra.mxu0 0
        %2427 = vmatprep.mubr.bf16.mxu0 0
        %2428 = vmatmul.mubr.bf16.gmra.mxu0 %v2393
        %v2429 = vpop.f32.mrf.mxu0
        %v2430 = vadd.f32 0.0, %v2429
        %v2431 = vpop.f32.mrf.mxu0
        %v2432 = vpop.f32.mrf.mxu0
        %v2433 = vadd.f32 0.0, %v2432
        %v2434 = vpop.f32.mrf.mxu0
        %2435 = vdwg.mxu0
        %2436 = vxpose.xlu0.c.b16.start [1/8] %v1744, 128
        %2437 = vxpose.xlu0.c.b16.cont [2/8] 0, 128
        %2438 = vxpose.xlu0.c.b16.cont [3/8] 0, 128
        %2439 = vxpose.xlu0.c.b16.cont [4/8] 0, 128
        %2440 = vxpose.xlu0.c.b16.cont [5/8] 0, 128
        %2441 = vxpose.xlu0.c.b16.cont [6/8] 0, 128
        %2442 = vxpose.xlu0.c.b16.cont [7/8] 0, 128
        %2443 = vxpose.xlu0.c.b16.end [8/8] 0, 128
        %v2444 = vpop.trf.xlu0
        %v2445 = vpop.trf.xlu0
        %v2446 = vpop.trf.xlu0
        %v2447 = vpop.trf.xlu0
        %v2448 = vpop.trf.xlu0
        %v2449 = vpop.trf.xlu0
        %v2450 = vpop.trf.xlu0
        %v2451 = vpop.trf.xlu0
        %v2454 = vsel %vm868, %v2444, 0
        %2456 = vmatprep.subr.bf16.mxu0 0
        %2457 = vmatpush1.bf16.msra.mxu0 0
        %2458 = vmatprep.subr.bf16.mxu0 0
        %2459 = vmatpush1.bf16.msra.mxu0 0
        %2460 = vmatprep.subr.bf16.mxu0 0
        %2461 = vmatpush1.bf16.msra.mxu0 0
        %2462 = vmatprep.subr.bf16.mxu0 0
        %2463 = vmatpush1.bf16.msra.mxu0 0
        %2464 = vmatprep.subr.bf16.mxu0 0
        %2465 = vmatpush1.bf16.msra.mxu0 0
        %2466 = vmatprep.subr.bf16.mxu0 0
        %2467 = vmatpush1.bf16.msra.mxu0 0
        %2468 = vmatprep.subr.bf16.mxu0 0
        %2469 = vmatpush1.bf16.msra.mxu0 0
        %2470 = vmatprep.subr.bf16.mxu0 0
        %2471 = vmatpush1.bf16.msra.mxu0 %v383
        %2472 = vmatprep.subr.bf16.mxu0 0
        %2473 = vmatpush2.bf16.msra.mxu0 0
        %2474 = vmatprep.subr.bf16.mxu0 0
        %2475 = vmatpush2.bf16.msra.mxu0 0
        %2476 = vmatprep.subr.bf16.mxu0 0
        %2477 = vmatpush2.bf16.msra.mxu0 0
        %2478 = vmatprep.subr.bf16.mxu0 0
        %2479 = vmatpush2.bf16.msra.mxu0 0
        %2480 = vmatprep.subr.bf16.mxu0 0
        %2481 = vmatpush2.bf16.msra.mxu0 0
        %2482 = vmatprep.subr.bf16.mxu0 0
        %2483 = vmatpush2.bf16.msra.mxu0 0
        %2484 = vmatprep.subr.bf16.mxu0 0
        %2485 = vmatpush2.bf16.msra.mxu0 0
        %2486 = vmatprep.subr.bf16.mxu0 0
        %2487 = vmatpush2.bf16.msra.mxu0 0
        %2488 = vmatprep.mubr.bf16.mxu0 0
        %2489 = vmatmul.mubr.bf16.gmra.mxu0 %v2454
        %v2490 = vpop.f32.mrf.mxu0
        %v2491 = vadd.f32 0.0, %v2490
        %v2492 = vpop.f32.mrf.mxu0
        %v2493 = vpop.f32.mrf.mxu0
        %v2494 = vadd.f32 0.0, %v2493
        %v2495 = vpop.f32.mrf.mxu0
        %2496 = vdwg.mxu0
        %2497 = vxpose.xlu0.c.b16.start [1/8] %v1745, 128
        %2498 = vxpose.xlu0.c.b16.cont [2/8] 0, 128
        %2499 = vxpose.xlu0.c.b16.cont [3/8] 0, 128
        %2500 = vxpose.xlu0.c.b16.cont [4/8] 0, 128
        %2501 = vxpose.xlu0.c.b16.cont [5/8] 0, 128
        %2502 = vxpose.xlu0.c.b16.cont [6/8] 0, 128
        %2503 = vxpose.xlu0.c.b16.cont [7/8] 0, 128
        %2504 = vxpose.xlu0.c.b16.end [8/8] 0, 128
        %v2505 = vpop.trf.xlu0
        %v2506 = vpop.trf.xlu0
        %v2507 = vpop.trf.xlu0
        %v2508 = vpop.trf.xlu0
        %v2509 = vpop.trf.xlu0
        %v2510 = vpop.trf.xlu0
        %v2511 = vpop.trf.xlu0
        %v2512 = vpop.trf.xlu0
        %v2515 = vsel %vm868, %v2505, 0
        %2517 = vmatprep.subr.bf16.mxu0 0
        %2518 = vmatpush1.bf16.msra.mxu0 0
        %2519 = vmatprep.subr.bf16.mxu0 0
        %2520 = vmatpush1.bf16.msra.mxu0 0
        %2521 = vmatprep.subr.bf16.mxu0 0
        %2522 = vmatpush1.bf16.msra.mxu0 0
        %2523 = vmatprep.subr.bf16.mxu0 0
        %2524 = vmatpush1.bf16.msra.mxu0 0
        %2525 = vmatprep.subr.bf16.mxu0 0
        %2526 = vmatpush1.bf16.msra.mxu0 0
        %2527 = vmatprep.subr.bf16.mxu0 0
        %2528 = vmatpush1.bf16.msra.mxu0 0
        %2529 = vmatprep.subr.bf16.mxu0 0
        %2530 = vmatpush1.bf16.msra.mxu0 0
        %2531 = vmatprep.subr.bf16.mxu0 0
        %2532 = vmatpush1.bf16.msra.mxu0 %v384
        %2533 = vmatprep.subr.bf16.mxu0 0
        %2534 = vmatpush2.bf16.msra.mxu0 0
        %2535 = vmatprep.subr.bf16.mxu0 0
        %2536 = vmatpush2.bf16.msra.mxu0 0
        %2537 = vmatprep.subr.bf16.mxu0 0
        %2538 = vmatpush2.bf16.msra.mxu0 0
        %2539 = vmatprep.subr.bf16.mxu0 0
        %2540 = vmatpush2.bf16.msra.mxu0 0
        %2541 = vmatprep.subr.bf16.mxu0 0
        %2542 = vmatpush2.bf16.msra.mxu0 0
        %2543 = vmatprep.subr.bf16.mxu0 0
        %2544 = vmatpush2.bf16.msra.mxu0 0
        %2545 = vmatprep.subr.bf16.mxu0 0
        %2546 = vmatpush2.bf16.msra.mxu0 0
        %2547 = vmatprep.subr.bf16.mxu0 0
        %2548 = vmatpush2.bf16.msra.mxu0 0
        %2549 = vmatprep.mubr.bf16.mxu0 0
        %2550 = vmatmul.mubr.bf16.gmra.mxu0 %v2515
        %v2551 = vpop.f32.mrf.mxu0
        %v2552 = vadd.f32 0.0, %v2551
        %v2553 = vpop.f32.mrf.mxu0
        %v2554 = vpop.f32.mrf.mxu0
        %v2555 = vadd.f32 0.0, %v2554
        %v2556 = vpop.f32.mrf.mxu0
        %2557 = vdwg.mxu0
        %2558 = vxpose.xlu0.c.b16.start [1/8] %v1746, 128
        %2559 = vxpose.xlu0.c.b16.cont [2/8] 0, 128
        %2560 = vxpose.xlu0.c.b16.cont [3/8] 0, 128
        %2561 = vxpose.xlu0.c.b16.cont [4/8] 0, 128
        %2562 = vxpose.xlu0.c.b16.cont [5/8] 0, 128
        %2563 = vxpose.xlu0.c.b16.cont [6/8] 0, 128
        %2564 = vxpose.xlu0.c.b16.cont [7/8] 0, 128
        %2565 = vxpose.xlu0.c.b16.end [8/8] 0, 128
        %v2566 = vpop.trf.xlu0
        %v2567 = vpop.trf.xlu0
        %v2568 = vpop.trf.xlu0
        %v2569 = vpop.trf.xlu0
        %v2570 = vpop.trf.xlu0
        %v2571 = vpop.trf.xlu0
        %v2572 = vpop.trf.xlu0
        %v2573 = vpop.trf.xlu0
        %v2576 = vsel %vm868, %v2566, 0
        %2578 = vmatprep.subr.bf16.mxu0 0
        %2579 = vmatpush1.bf16.msra.mxu0 0
        %2580 = vmatprep.subr.bf16.mxu0 0
        %2581 = vmatpush1.bf16.msra.mxu0 0
        %2582 = vmatprep.subr.bf16.mxu0 0
        %2583 = vmatpush1.bf16.msra.mxu0 0
        %2584 = vmatprep.subr.bf16.mxu0 0
        %2585 = vmatpush1.bf16.msra.mxu0 0
        %2586 = vmatprep.subr.bf16.mxu0 0
        %2587 = vmatpush1.bf16.msra.mxu0 0
        %2588 = vmatprep.subr.bf16.mxu0 0
        %2589 = vmatpush1.bf16.msra.mxu0 0
        %2590 = vmatprep.subr.bf16.mxu0 0
        %2591 = vmatpush1.bf16.msra.mxu0 0
        %2592 = vmatprep.subr.bf16.mxu0 0
        %2593 = vmatpush1.bf16.msra.mxu0 %v385
        %2594 = vmatprep.subr.bf16.mxu0 0
        %2595 = vmatpush2.bf16.msra.mxu0 0
        %2596 = vmatprep.subr.bf16.mxu0 0
        %2597 = vmatpush2.bf16.msra.mxu0 0
        %2598 = vmatprep.subr.bf16.mxu0 0
        %2599 = vmatpush2.bf16.msra.mxu0 0
        %2600 = vmatprep.subr.bf16.mxu0 0
        %2601 = vmatpush2.bf16.msra.mxu0 0
        %2602 = vmatprep.subr.bf16.mxu0 0
        %2603 = vmatpush2.bf16.msra.mxu0 0
        %2604 = vmatprep.subr.bf16.mxu0 0
        %2605 = vmatpush2.bf16.msra.mxu0 0
        %2606 = vmatprep.subr.bf16.mxu0 0
        %2607 = vmatpush2.bf16.msra.mxu0 0
        %2608 = vmatprep.subr.bf16.mxu0 0
        %2609 = vmatpush2.bf16.msra.mxu0 0
        %2610 = vmatprep.mubr.bf16.mxu0 0
        %2611 = vmatmul.mubr.bf16.gmra.mxu0 %v2576
        %v2612 = vpop.f32.mrf.mxu0
        %v2613 = vadd.f32 0.0, %v2612
        %v2614 = vpop.f32.mrf.mxu0
        %v2615 = vpop.f32.mrf.mxu0
        %v2616 = vadd.f32 0.0, %v2615
        %v2617 = vpop.f32.mrf.mxu0
        %2618 = vdwg.mxu0
        %2619 = vxpose.xlu0.c.b16.start [1/8] %v1747, 128
        %2620 = vxpose.xlu0.c.b16.cont [2/8] 0, 128
        %2621 = vxpose.xlu0.c.b16.cont [3/8] 0, 128
        %2622 = vxpose.xlu0.c.b16.cont [4/8] 0, 128
        %2623 = vxpose.xlu0.c.b16.cont [5/8] 0, 128
        %2624 = vxpose.xlu0.c.b16.cont [6/8] 0, 128
        %2625 = vxpose.xlu0.c.b16.cont [7/8] 0, 128
        %2626 = vxpose.xlu0.c.b16.end [8/8] 0, 128
        %v2627 = vpop.trf.xlu0
        %v2628 = vpop.trf.xlu0
        %v2629 = vpop.trf.xlu0
        %v2630 = vpop.trf.xlu0
        %v2631 = vpop.trf.xlu0
        %v2632 = vpop.trf.xlu0
        %v2633 = vpop.trf.xlu0
        %v2634 = vpop.trf.xlu0
        %v2637 = vsel %vm868, %v2627, 0
        %2639 = vmatprep.subr.bf16.mxu0 0
        %2640 = vmatpush1.bf16.msra.mxu0 0
        %2641 = vmatprep.subr.bf16.mxu0 0
        %2642 = vmatpush1.bf16.msra.mxu0 0
        %2643 = vmatprep.subr.bf16.mxu0 0
        %2644 = vmatpush1.bf16.msra.mxu0 0
        %2645 = vmatprep.subr.bf16.mxu0 0
        %2646 = vmatpush1.bf16.msra.mxu0 0
        %2647 = vmatprep.subr.bf16.mxu0 0
        %2648 = vmatpush1.bf16.msra.mxu0 0
        %2649 = vmatprep.subr.bf16.mxu0 0
        %2650 = vmatpush1.bf16.msra.mxu0 0
        %2651 = vmatprep.subr.bf16.mxu0 0
        %2652 = vmatpush1.bf16.msra.mxu0 0
        %2653 = vmatprep.subr.bf16.mxu0 0
        %2654 = vmatpush1.bf16.msra.mxu0 %v386
        %2655 = vmatprep.subr.bf16.mxu0 0
        %2656 = vmatpush2.bf16.msra.mxu0 0
        %2657 = vmatprep.subr.bf16.mxu0 0
        %2658 = vmatpush2.bf16.msra.mxu0 0
        %2659 = vmatprep.subr.bf16.mxu0 0
        %2660 = vmatpush2.bf16.msra.mxu0 0
        %2661 = vmatprep.subr.bf16.mxu0 0
        %2662 = vmatpush2.bf16.msra.mxu0 0
        %2663 = vmatprep.subr.bf16.mxu0 0
        %2664 = vmatpush2.bf16.msra.mxu0 0
        %2665 = vmatprep.subr.bf16.mxu0 0
        %2666 = vmatpush2.bf16.msra.mxu0 0
        %2667 = vmatprep.subr.bf16.mxu0 0
        %2668 = vmatpush2.bf16.msra.mxu0 0
        %2669 = vmatprep.subr.bf16.mxu0 0
        %2670 = vmatpush2.bf16.msra.mxu0 0
        %2671 = vmatprep.mubr.bf16.mxu0 0
        %2672 = vmatmul.mubr.bf16.gmra.mxu0 %v2637
        %v2673 = vpop.f32.mrf.mxu0
        %v2674 = vadd.f32 0.0, %v2673
        %v2675 = vpop.f32.mrf.mxu0
        %v2676 = vpop.f32.mrf.mxu0
        %v2677 = vadd.f32 0.0, %v2676
        %v2678 = vpop.f32.mrf.mxu0
        %2679 = vdwg.mxu0
        %2680 = vxpose.xlu0.c.b16.start [1/8] %v1748, 128
        %2681 = vxpose.xlu0.c.b16.cont [2/8] 0, 128
        %2682 = vxpose.xlu0.c.b16.cont [3/8] 0, 128
        %2683 = vxpose.xlu0.c.b16.cont [4/8] 0, 128
        %2684 = vxpose.xlu0.c.b16.cont [5/8] 0, 128
        %2685 = vxpose.xlu0.c.b16.cont [6/8] 0, 128
        %2686 = vxpose.xlu0.c.b16.cont [7/8] 0, 128
        %2687 = vxpose.xlu0.c.b16.end [8/8] 0, 128
        %v2688 = vpop.trf.xlu0
        %v2689 = vpop.trf.xlu0
        %v2690 = vpop.trf.xlu0
        %v2691 = vpop.trf.xlu0
        %v2692 = vpop.trf.xlu0
        %v2693 = vpop.trf.xlu0
        %v2694 = vpop.trf.xlu0
        %v2695 = vpop.trf.xlu0
        %v2698 = vsel %vm868, %v2688, 0
        %2700 = vmatprep.subr.bf16.mxu0 0
        %2701 = vmatpush1.bf16.msra.mxu0 0
        %2702 = vmatprep.subr.bf16.mxu0 0
        %2703 = vmatpush1.bf16.msra.mxu0 0
        %2704 = vmatprep.subr.bf16.mxu0 0
        %2705 = vmatpush1.bf16.msra.mxu0 0
        %2706 = vmatprep.subr.bf16.mxu0 0
        %2707 = vmatpush1.bf16.msra.mxu0 0
        %2708 = vmatprep.subr.bf16.mxu0 0
        %2709 = vmatpush1.bf16.msra.mxu0 0
        %2710 = vmatprep.subr.bf16.mxu0 0
        %2711 = vmatpush1.bf16.msra.mxu0 0
        %2712 = vmatprep.subr.bf16.mxu0 0
        %2713 = vmatpush1.bf16.msra.mxu0 0
        %2714 = vmatprep.subr.bf16.mxu0 0
        %2715 = vmatpush1.bf16.msra.mxu0 %v387
        %2716 = vmatprep.subr.bf16.mxu0 0
        %2717 = vmatpush2.bf16.msra.mxu0 0
        %2718 = vmatprep.subr.bf16.mxu0 0
        %2719 = vmatpush2.bf16.msra.mxu0 0
        %2720 = vmatprep.subr.bf16.mxu0 0
        %2721 = vmatpush2.bf16.msra.mxu0 0
        %2722 = vmatprep.subr.bf16.mxu0 0
        %2723 = vmatpush2.bf16.msra.mxu0 0
        %2724 = vmatprep.subr.bf16.mxu0 0
        %2725 = vmatpush2.bf16.msra.mxu0 0
        %2726 = vmatprep.subr.bf16.mxu0 0
        %2727 = vmatpush2.bf16.msra.mxu0 0
        %2728 = vmatprep.subr.bf16.mxu0 0
        %2729 = vmatpush2.bf16.msra.mxu0 0
        %2730 = vmatprep.subr.bf16.mxu0 0
        %2731 = vmatpush2.bf16.msra.mxu0 0
        %2732 = vmatprep.mubr.bf16.mxu0 0
        %2733 = vmatmul.mubr.bf16.gmra.mxu0 %v2698
        %v2734 = vpop.f32.mrf.mxu0
        %v2735 = vadd.f32 0.0, %v2734
        %v2736 = vpop.f32.mrf.mxu0
        %v2737 = vpop.f32.mrf.mxu0
        %v2738 = vadd.f32 0.0, %v2737
        %v2739 = vpop.f32.mrf.mxu0
        %2740 = vdwg.mxu0
        %2741 = vxpose.xlu0.c.b16.start [1/8] %v1749, 128
        %2742 = vxpose.xlu0.c.b16.cont [2/8] 0, 128
        %2743 = vxpose.xlu0.c.b16.cont [3/8] 0, 128
        %2744 = vxpose.xlu0.c.b16.cont [4/8] 0, 128
        %2745 = vxpose.xlu0.c.b16.cont [5/8] 0, 128
        %2746 = vxpose.xlu0.c.b16.cont [6/8] 0, 128
        %2747 = vxpose.xlu0.c.b16.cont [7/8] 0, 128
        %2748 = vxpose.xlu0.c.b16.end [8/8] 0, 128
        %v2749 = vpop.trf.xlu0
        %v2750 = vpop.trf.xlu0
        %v2751 = vpop.trf.xlu0
        %v2752 = vpop.trf.xlu0
        %v2753 = vpop.trf.xlu0
        %v2754 = vpop.trf.xlu0
        %v2755 = vpop.trf.xlu0
        %v2756 = vpop.trf.xlu0
        %v2759 = vsel %vm868, %v2749, 0
        %2761 = vmatprep.subr.bf16.mxu0 0
        %2762 = vmatpush1.bf16.msra.mxu0 0
        %2763 = vmatprep.subr.bf16.mxu0 0
        %2764 = vmatpush1.bf16.msra.mxu0 0
        %2765 = vmatprep.subr.bf16.mxu0 0
        %2766 = vmatpush1.bf16.msra.mxu0 0
        %2767 = vmatprep.subr.bf16.mxu0 0
        %2768 = vmatpush1.bf16.msra.mxu0 0
        %2769 = vmatprep.subr.bf16.mxu0 0
        %2770 = vmatpush1.bf16.msra.mxu0 0
        %2771 = vmatprep.subr.bf16.mxu0 0
        %2772 = vmatpush1.bf16.msra.mxu0 0
        %2773 = vmatprep.subr.bf16.mxu0 0
        %2774 = vmatpush1.bf16.msra.mxu0 0
        %2775 = vmatprep.subr.bf16.mxu0 0
        %2776 = vmatpush1.bf16.msra.mxu0 %v388
        %2777 = vmatprep.subr.bf16.mxu0 0
        %2778 = vmatpush2.bf16.msra.mxu0 0
        %2779 = vmatprep.subr.bf16.mxu0 0
        %2780 = vmatpush2.bf16.msra.mxu0 0
        %2781 = vmatprep.subr.bf16.mxu0 0
        %2782 = vmatpush2.bf16.msra.mxu0 0
        %2783 = vmatprep.subr.bf16.mxu0 0
        %2784 = vmatpush2.bf16.msra.mxu0 0
        %2785 = vmatprep.subr.bf16.mxu0 0
        %2786 = vmatpush2.bf16.msra.mxu0 0
        %2787 = vmatprep.subr.bf16.mxu0 0
        %2788 = vmatpush2.bf16.msra.mxu0 0
        %2789 = vmatprep.subr.bf16.mxu0 0
        %2790 = vmatpush2.bf16.msra.mxu0 0
        %2791 = vmatprep.subr.bf16.mxu0 0
        %2792 = vmatpush2.bf16.msra.mxu0 0
        %2793 = vmatprep.mubr.bf16.mxu0 0
        %2794 = vmatmul.mubr.bf16.gmra.mxu0 %v2759
        %v2795 = vpop.f32.mrf.mxu0
        %v2796 = vadd.f32 0.0, %v2795
        %v2797 = vpop.f32.mrf.mxu0
        %v2798 = vpop.f32.mrf.mxu0
        %v2799 = vadd.f32 0.0, %v2798
        %v2800 = vpop.f32.mrf.mxu0
        %2801 = vdwg.mxu0
        %2802 = vxpose.xlu0.c.b16.start [1/8] %v1750, 128
        %2803 = vxpose.xlu0.c.b16.cont [2/8] 0, 128
        %2804 = vxpose.xlu0.c.b16.cont [3/8] 0, 128
        %2805 = vxpose.xlu0.c.b16.cont [4/8] 0, 128
        %2806 = vxpose.xlu0.c.b16.cont [5/8] 0, 128
        %2807 = vxpose.xlu0.c.b16.cont [6/8] 0, 128
        %2808 = vxpose.xlu0.c.b16.cont [7/8] 0, 128
        %2809 = vxpose.xlu0.c.b16.end [8/8] 0, 128
        %v2810 = vpop.trf.xlu0
        %v2811 = vpop.trf.xlu0
        %v2812 = vpop.trf.xlu0
        %v2813 = vpop.trf.xlu0
        %v2814 = vpop.trf.xlu0
        %v2815 = vpop.trf.xlu0
        %v2816 = vpop.trf.xlu0
        %v2817 = vpop.trf.xlu0
        %v2820 = vsel %vm868, %v2810, 0
        %2822 = vmatprep.subr.bf16.mxu0 0
        %2823 = vmatpush1.bf16.msra.mxu0 0
        %2824 = vmatprep.subr.bf16.mxu0 0
        %2825 = vmatpush1.bf16.msra.mxu0 0
        %2826 = vmatprep.subr.bf16.mxu0 0
        %2827 = vmatpush1.bf16.msra.mxu0 0
        %2828 = vmatprep.subr.bf16.mxu0 0
        %2829 = vmatpush1.bf16.msra.mxu0 0
        %2830 = vmatprep.subr.bf16.mxu0 0
        %2831 = vmatpush1.bf16.msra.mxu0 0
        %2832 = vmatprep.subr.bf16.mxu0 0
        %2833 = vmatpush1.bf16.msra.mxu0 0
        %2834 = vmatprep.subr.bf16.mxu0 0
        %2835 = vmatpush1.bf16.msra.mxu0 0
        %2836 = vmatprep.subr.bf16.mxu0 0
        %2837 = vmatpush1.bf16.msra.mxu0 %v389
        %2838 = vmatprep.subr.bf16.mxu0 0
        %2839 = vmatpush2.bf16.msra.mxu0 0
        %2840 = vmatprep.subr.bf16.mxu0 0
        %2841 = vmatpush2.bf16.msra.mxu0 0
        %2842 = vmatprep.subr.bf16.mxu0 0
        %2843 = vmatpush2.bf16.msra.mxu0 0
        %2844 = vmatprep.subr.bf16.mxu0 0
        %2845 = vmatpush2.bf16.msra.mxu0 0
        %2846 = vmatprep.subr.bf16.mxu0 0
        %2847 = vmatpush2.bf16.msra.mxu0 0
        %2848 = vmatprep.subr.bf16.mxu0 0
        %2849 = vmatpush2.bf16.msra.mxu0 0
        %2850 = vmatprep.subr.bf16.mxu0 0
        %2851 = vmatpush2.bf16.msra.mxu0 0
        %2852 = vmatprep.subr.bf16.mxu0 0
        %2853 = vmatpush2.bf16.msra.mxu0 0
        %2854 = vmatprep.mubr.bf16.mxu0 0
        %2855 = vmatmul.mubr.bf16.gmra.mxu0 %v2820
        %v2856 = vpop.f32.mrf.mxu0
        %v2857 = vadd.f32 0.0, %v2856
        %v2858 = vpop.f32.mrf.mxu0
        %v2859 = vpop.f32.mrf.mxu0
        %v2860 = vadd.f32 0.0, %v2859
        %v2861 = vpop.f32.mrf.mxu0
        %2862 = vdwg.mxu0
        %2863 = vxpose.xlu0.c.b16.start [1/8] %v1751, 128
        %2864 = vxpose.xlu0.c.b16.cont [2/8] 0, 128
        %2865 = vxpose.xlu0.c.b16.cont [3/8] 0, 128
        %2866 = vxpose.xlu0.c.b16.cont [4/8] 0, 128
        %2867 = vxpose.xlu0.c.b16.cont [5/8] 0, 128
        %2868 = vxpose.xlu0.c.b16.cont [6/8] 0, 128
        %2869 = vxpose.xlu0.c.b16.cont [7/8] 0, 128
        %2870 = vxpose.xlu0.c.b16.end [8/8] 0, 128
        %v2871 = vpop.trf.xlu0
        %v2872 = vpop.trf.xlu0
        %v2873 = vpop.trf.xlu0
        %v2874 = vpop.trf.xlu0
        %v2875 = vpop.trf.xlu0
        %v2876 = vpop.trf.xlu0
        %v2877 = vpop.trf.xlu0
        %v2878 = vpop.trf.xlu0
        %v2881 = vsel %vm868, %v2871, 0
        %2883 = vmatprep.subr.bf16.mxu0 0
        %2884 = vmatpush1.bf16.msra.mxu0 0
        %2885 = vmatprep.subr.bf16.mxu0 0
        %2886 = vmatpush1.bf16.msra.mxu0 0
        %2887 = vmatprep.subr.bf16.mxu0 0
        %2888 = vmatpush1.bf16.msra.mxu0 0
        %2889 = vmatprep.subr.bf16.mxu0 0
        %2890 = vmatpush1.bf16.msra.mxu0 0
        %2891 = vmatprep.subr.bf16.mxu0 0
        %2892 = vmatpush1.bf16.msra.mxu0 0
        %2893 = vmatprep.subr.bf16.mxu0 0
        %2894 = vmatpush1.bf16.msra.mxu0 0
        %2895 = vmatprep.subr.bf16.mxu0 0
        %2896 = vmatpush1.bf16.msra.mxu0 0
        %2897 = vmatprep.subr.bf16.mxu0 0
        %2898 = vmatpush1.bf16.msra.mxu0 %v390
        %2899 = vmatprep.subr.bf16.mxu0 0
        %2900 = vmatpush2.bf16.msra.mxu0 0
        %2901 = vmatprep.subr.bf16.mxu0 0
        %2902 = vmatpush2.bf16.msra.mxu0 0
        %2903 = vmatprep.subr.bf16.mxu0 0
        %2904 = vmatpush2.bf16.msra.mxu0 0
        %2905 = vmatprep.subr.bf16.mxu0 0
        %2906 = vmatpush2.bf16.msra.mxu0 0
        %2907 = vmatprep.subr.bf16.mxu0 0
        %2908 = vmatpush2.bf16.msra.mxu0 0
        %2909 = vmatprep.subr.bf16.mxu0 0
        %2910 = vmatpush2.bf16.msra.mxu0 0
        %2911 = vmatprep.subr.bf16.mxu0 0
        %2912 = vmatpush2.bf16.msra.mxu0 0
        %2913 = vmatprep.subr.bf16.mxu0 0
        %2914 = vmatpush2.bf16.msra.mxu0 0
        %2915 = vmatprep.mubr.bf16.mxu0 0
        %2916 = vmatmul.mubr.bf16.gmra.mxu0 %v2881
        %v2917 = vpop.f32.mrf.mxu0
        %v2918 = vadd.f32 0.0, %v2917
        %v2919 = vpop.f32.mrf.mxu0
        %v2920 = vpop.f32.mrf.mxu0
        %v2921 = vadd.f32 0.0, %v2920
        %v2922 = vpop.f32.mrf.mxu0
        %2923 = vdwg.mxu0
        %2924 = vxpose.xlu0.c.b16.start [1/8] %v1752, 128
        %2925 = vxpose.xlu0.c.b16.cont [2/8] 0, 128
        %2926 = vxpose.xlu0.c.b16.cont [3/8] 0, 128
        %2927 = vxpose.xlu0.c.b16.cont [4/8] 0, 128
        %2928 = vxpose.xlu0.c.b16.cont [5/8] 0, 128
        %2929 = vxpose.xlu0.c.b16.cont [6/8] 0, 128
        %2930 = vxpose.xlu0.c.b16.cont [7/8] 0, 128
        %2931 = vxpose.xlu0.c.b16.end [8/8] 0, 128
        %v2932 = vpop.trf.xlu0
        %v2933 = vpop.trf.xlu0
        %v2934 = vpop.trf.xlu0
        %v2935 = vpop.trf.xlu0
        %v2936 = vpop.trf.xlu0
        %v2937 = vpop.trf.xlu0
        %v2938 = vpop.trf.xlu0
        %v2939 = vpop.trf.xlu0
        %v2942 = vsel %vm868, %v2932, 0
        %2944 = vmatprep.subr.bf16.mxu0 0
        %2945 = vmatpush1.bf16.msra.mxu0 0
        %2946 = vmatprep.subr.bf16.mxu0 0
        %2947 = vmatpush1.bf16.msra.mxu0 0
        %2948 = vmatprep.subr.bf16.mxu0 0
        %2949 = vmatpush1.bf16.msra.mxu0 0
        %2950 = vmatprep.subr.bf16.mxu0 0
        %2951 = vmatpush1.bf16.msra.mxu0 0
        %2952 = vmatprep.subr.bf16.mxu0 0
        %2953 = vmatpush1.bf16.msra.mxu0 0
        %2954 = vmatprep.subr.bf16.mxu0 0
        %2955 = vmatpush1.bf16.msra.mxu0 0
        %2956 = vmatprep.subr.bf16.mxu0 0
        %2957 = vmatpush1.bf16.msra.mxu0 0
        %2958 = vmatprep.subr.bf16.mxu0 0
        %2959 = vmatpush1.bf16.msra.mxu0 %v391
        %2960 = vmatprep.subr.bf16.mxu0 0
        %2961 = vmatpush2.bf16.msra.mxu0 0
        %2962 = vmatprep.subr.bf16.mxu0 0
        %2963 = vmatpush2.bf16.msra.mxu0 0
        %2964 = vmatprep.subr.bf16.mxu0 0
        %2965 = vmatpush2.bf16.msra.mxu0 0
        %2966 = vmatprep.subr.bf16.mxu0 0
        %2967 = vmatpush2.bf16.msra.mxu0 0
        %2968 = vmatprep.subr.bf16.mxu0 0
        %2969 = vmatpush2.bf16.msra.mxu0 0
        %2970 = vmatprep.subr.bf16.mxu0 0
        %2971 = vmatpush2.bf16.msra.mxu0 0
        %2972 = vmatprep.subr.bf16.mxu0 0
        %2973 = vmatpush2.bf16.msra.mxu0 0
        %2974 = vmatprep.subr.bf16.mxu0 0
        %2975 = vmatpush2.bf16.msra.mxu0 0
        %2976 = vmatprep.mubr.bf16.mxu0 0
        %2977 = vmatmul.mubr.bf16.gmra.mxu0 %v2942
        %v2978 = vpop.f32.mrf.mxu0
        %v2979 = vadd.f32 0.0, %v2978
        %v2980 = vpop.f32.mrf.mxu0
        %v2981 = vpop.f32.mrf.mxu0
        %v2982 = vadd.f32 0.0, %v2981
        %v2983 = vpop.f32.mrf.mxu0
        %2984 = vdwg.mxu0
        %2985 = vxpose.xlu0.c.b16.start [1/8] %v1753, 128
        %2986 = vxpose.xlu0.c.b16.cont [2/8] 0, 128
        %2987 = vxpose.xlu0.c.b16.cont [3/8] 0, 128
        %2988 = vxpose.xlu0.c.b16.cont [4/8] 0, 128
        %2989 = vxpose.xlu0.c.b16.cont [5/8] 0, 128
        %2990 = vxpose.xlu0.c.b16.cont [6/8] 0, 128
        %2991 = vxpose.xlu0.c.b16.cont [7/8] 0, 128
        %2992 = vxpose.xlu0.c.b16.end [8/8] 0, 128
        %v2993 = vpop.trf.xlu0
        %v2994 = vpop.trf.xlu0
        %v2995 = vpop.trf.xlu0
        %v2996 = vpop.trf.xlu0
        %v2997 = vpop.trf.xlu0
        %v2998 = vpop.trf.xlu0
        %v2999 = vpop.trf.xlu0
        %v3000 = vpop.trf.xlu0
        %v3003 = vsel %vm868, %v2993, 0
        %3005 = vmatprep.subr.bf16.mxu0 0
        %3006 = vmatpush1.bf16.msra.mxu0 0
        %3007 = vmatprep.subr.bf16.mxu0 0
        %3008 = vmatpush1.bf16.msra.mxu0 0
        %3009 = vmatprep.subr.bf16.mxu0 0
        %3010 = vmatpush1.bf16.msra.mxu0 0
        %3011 = vmatprep.subr.bf16.mxu0 0
        %3012 = vmatpush1.bf16.msra.mxu0 0
        %3013 = vmatprep.subr.bf16.mxu0 0
        %3014 = vmatpush1.bf16.msra.mxu0 0
        %3015 = vmatprep.subr.bf16.mxu0 0
        %3016 = vmatpush1.bf16.msra.mxu0 0
        %3017 = vmatprep.subr.bf16.mxu0 0
        %3018 = vmatpush1.bf16.msra.mxu0 0
        %3019 = vmatprep.subr.bf16.mxu0 0
        %3020 = vmatpush1.bf16.msra.mxu0 %v392
        %3021 = vmatprep.subr.bf16.mxu0 0
        %3022 = vmatpush2.bf16.msra.mxu0 0
        %3023 = vmatprep.subr.bf16.mxu0 0
        %3024 = vmatpush2.bf16.msra.mxu0 0
        %3025 = vmatprep.subr.bf16.mxu0 0
        %3026 = vmatpush2.bf16.msra.mxu0 0
        %3027 = vmatprep.subr.bf16.mxu0 0
        %3028 = vmatpush2.bf16.msra.mxu0 0
        %3029 = vmatprep.subr.bf16.mxu0 0
        %3030 = vmatpush2.bf16.msra.mxu0 0
        %3031 = vmatprep.subr.bf16.mxu0 0
        %3032 = vmatpush2.bf16.msra.mxu0 0
        %3033 = vmatprep.subr.bf16.mxu0 0
        %3034 = vmatpush2.bf16.msra.mxu0 0
        %3035 = vmatprep.subr.bf16.mxu0 0
        %3036 = vmatpush2.bf16.msra.mxu0 0
        %3037 = vmatprep.mubr.bf16.mxu0 0
        %3038 = vmatmul.mubr.bf16.gmra.mxu0 %v3003
        %v3039 = vpop.f32.mrf.mxu0
        %v3040 = vadd.f32 0.0, %v3039
        %v3041 = vpop.f32.mrf.mxu0
        %v3042 = vpop.f32.mrf.mxu0
        %v3043 = vadd.f32 0.0, %v3042
        %v3044 = vpop.f32.mrf.mxu0
        %3045 = vdwg.mxu0
        %3046 = vxpose.xlu0.c.b16.start [1/8] %v1754, 128
        %3047 = vxpose.xlu0.c.b16.cont [2/8] 0, 128
        %3048 = vxpose.xlu0.c.b16.cont [3/8] 0, 128
        %3049 = vxpose.xlu0.c.b16.cont [4/8] 0, 128
        %3050 = vxpose.xlu0.c.b16.cont [5/8] 0, 128
        %3051 = vxpose.xlu0.c.b16.cont [6/8] 0, 128
        %3052 = vxpose.xlu0.c.b16.cont [7/8] 0, 128
        %3053 = vxpose.xlu0.c.b16.end [8/8] 0, 128
        %v3054 = vpop.trf.xlu0
        %v3055 = vpop.trf.xlu0
        %v3056 = vpop.trf.xlu0
        %v3057 = vpop.trf.xlu0
        %v3058 = vpop.trf.xlu0
        %v3059 = vpop.trf.xlu0
        %v3060 = vpop.trf.xlu0
        %v3061 = vpop.trf.xlu0
        %v3064 = vsel %vm868, %v3054, 0
        %3066 = vmatprep.subr.bf16.mxu0 0
        %3067 = vmatpush1.bf16.msra.mxu0 0
        %3068 = vmatprep.subr.bf16.mxu0 0
        %3069 = vmatpush1.bf16.msra.mxu0 0
        %3070 = vmatprep.subr.bf16.mxu0 0
        %3071 = vmatpush1.bf16.msra.mxu0 0
        %3072 = vmatprep.subr.bf16.mxu0 0
        %3073 = vmatpush1.bf16.msra.mxu0 0
        %3074 = vmatprep.subr.bf16.mxu0 0
        %3075 = vmatpush1.bf16.msra.mxu0 0
        %3076 = vmatprep.subr.bf16.mxu0 0
        %3077 = vmatpush1.bf16.msra.mxu0 0
        %3078 = vmatprep.subr.bf16.mxu0 0
        %3079 = vmatpush1.bf16.msra.mxu0 0
        %3080 = vmatprep.subr.bf16.mxu0 0
        %3081 = vmatpush1.bf16.msra.mxu0 %v393
        %3082 = vmatprep.subr.bf16.mxu0 0
        %3083 = vmatpush2.bf16.msra.mxu0 0
        %3084 = vmatprep.subr.bf16.mxu0 0
        %3085 = vmatpush2.bf16.msra.mxu0 0
        %3086 = vmatprep.subr.bf16.mxu0 0
        %3087 = vmatpush2.bf16.msra.mxu0 0
        %3088 = vmatprep.subr.bf16.mxu0 0
        %3089 = vmatpush2.bf16.msra.mxu0 0
        %3090 = vmatprep.subr.bf16.mxu0 0
        %3091 = vmatpush2.bf16.msra.mxu0 0
        %3092 = vmatprep.subr.bf16.mxu0 0
        %3093 = vmatpush2.bf16.msra.mxu0 0
        %3094 = vmatprep.subr.bf16.mxu0 0
        %3095 = vmatpush2.bf16.msra.mxu0 0
        %3096 = vmatprep.subr.bf16.mxu0 0
        %3097 = vmatpush2.bf16.msra.mxu0 0
        %3098 = vmatprep.mubr.bf16.mxu0 0
        %3099 = vmatmul.mubr.bf16.gmra.mxu0 %v3064
        %v3100 = vpop.f32.mrf.mxu0
        %v3101 = vadd.f32 0.0, %v3100
        %v3102 = vpop.f32.mrf.mxu0
        %v3103 = vpop.f32.mrf.mxu0
        %v3104 = vadd.f32 0.0, %v3103
        %v3105 = vpop.f32.mrf.mxu0
        %3106 = vdwg.mxu0
        %3107 = vxpose.xlu0.c.b16.start [1/8] %v1755, 128
        %3108 = vxpose.xlu0.c.b16.cont [2/8] 0, 128
        %3109 = vxpose.xlu0.c.b16.cont [3/8] 0, 128
        %3110 = vxpose.xlu0.c.b16.cont [4/8] 0, 128
        %3111 = vxpose.xlu0.c.b16.cont [5/8] 0, 128
        %3112 = vxpose.xlu0.c.b16.cont [6/8] 0, 128
        %3113 = vxpose.xlu0.c.b16.cont [7/8] 0, 128
        %3114 = vxpose.xlu0.c.b16.end [8/8] 0, 128
        %v3115 = vpop.trf.xlu0
        %v3116 = vpop.trf.xlu0
        %v3117 = vpop.trf.xlu0
        %v3118 = vpop.trf.xlu0
        %v3119 = vpop.trf.xlu0
        %v3120 = vpop.trf.xlu0
        %v3121 = vpop.trf.xlu0
        %v3122 = vpop.trf.xlu0
        %v3125 = vsel %vm868, %v3115, 0
        %3127 = vmatprep.subr.bf16.mxu0 0
        %3128 = vmatpush1.bf16.msra.mxu0 0
        %3129 = vmatprep.subr.bf16.mxu0 0
        %3130 = vmatpush1.bf16.msra.mxu0 0
        %3131 = vmatprep.subr.bf16.mxu0 0
        %3132 = vmatpush1.bf16.msra.mxu0 0
        %3133 = vmatprep.subr.bf16.mxu0 0
        %3134 = vmatpush1.bf16.msra.mxu0 0
        %3135 = vmatprep.subr.bf16.mxu0 0
        %3136 = vmatpush1.bf16.msra.mxu0 0
        %3137 = vmatprep.subr.bf16.mxu0 0
        %3138 = vmatpush1.bf16.msra.mxu0 0
        %3139 = vmatprep.subr.bf16.mxu0 0
        %3140 = vmatpush1.bf16.msra.mxu0 0
        %3141 = vmatprep.subr.bf16.mxu0 0
        %3142 = vmatpush1.bf16.msra.mxu0 %v394
        %3143 = vmatprep.subr.bf16.mxu0 0
        %3144 = vmatpush2.bf16.msra.mxu0 0
        %3145 = vmatprep.subr.bf16.mxu0 0
        %3146 = vmatpush2.bf16.msra.mxu0 0
        %3147 = vmatprep.subr.bf16.mxu0 0
        %3148 = vmatpush2.bf16.msra.mxu0 0
        %3149 = vmatprep.subr.bf16.mxu0 0
        %3150 = vmatpush2.bf16.msra.mxu0 0
        %3151 = vmatprep.subr.bf16.mxu0 0
        %3152 = vmatpush2.bf16.msra.mxu0 0
        %3153 = vmatprep.subr.bf16.mxu0 0
        %3154 = vmatpush2.bf16.msra.mxu0 0
        %3155 = vmatprep.subr.bf16.mxu0 0
        %3156 = vmatpush2.bf16.msra.mxu0 0
        %3157 = vmatprep.subr.bf16.mxu0 0
        %3158 = vmatpush2.bf16.msra.mxu0 0
        %3159 = vmatprep.mubr.bf16.mxu0 0
        %3160 = vmatmul.mubr.bf16.gmra.mxu0 %v3125
        %v3161 = vpop.f32.mrf.mxu0
        %v3162 = vadd.f32 0.0, %v3161
        %v3163 = vpop.f32.mrf.mxu0
        %v3164 = vpop.f32.mrf.mxu0
        %v3165 = vadd.f32 0.0, %v3164
        %v3166 = vpop.f32.mrf.mxu0
        %3167 = vdwg.mxu0
        %3168 = vxpose.xlu0.c.b16.start [1/8] %v1756, 128
        %3169 = vxpose.xlu0.c.b16.cont [2/8] 0, 128
        %3170 = vxpose.xlu0.c.b16.cont [3/8] 0, 128
        %3171 = vxpose.xlu0.c.b16.cont [4/8] 0, 128
        %3172 = vxpose.xlu0.c.b16.cont [5/8] 0, 128
        %3173 = vxpose.xlu0.c.b16.cont [6/8] 0, 128
        %3174 = vxpose.xlu0.c.b16.cont [7/8] 0, 128
        %3175 = vxpose.xlu0.c.b16.end [8/8] 0, 128
        %v3176 = vpop.trf.xlu0
        %v3177 = vpop.trf.xlu0
        %v3178 = vpop.trf.xlu0
        %v3179 = vpop.trf.xlu0
        %v3180 = vpop.trf.xlu0
        %v3181 = vpop.trf.xlu0
        %v3182 = vpop.trf.xlu0
        %v3183 = vpop.trf.xlu0
        %v3186 = vsel %vm868, %v3176, 0
        %3188 = vmatprep.subr.bf16.mxu0 0
        %3189 = vmatpush1.bf16.msra.mxu0 0
        %3190 = vmatprep.subr.bf16.mxu0 0
        %3191 = vmatpush1.bf16.msra.mxu0 0
        %3192 = vmatprep.subr.bf16.mxu0 0
        %3193 = vmatpush1.bf16.msra.mxu0 0
        %3194 = vmatprep.subr.bf16.mxu0 0
        %3195 = vmatpush1.bf16.msra.mxu0 0
        %3196 = vmatprep.subr.bf16.mxu0 0
        %3197 = vmatpush1.bf16.msra.mxu0 0
        %3198 = vmatprep.subr.bf16.mxu0 0
        %3199 = vmatpush1.bf16.msra.mxu0 0
        %3200 = vmatprep.subr.bf16.mxu0 0
        %3201 = vmatpush1.bf16.msra.mxu0 0
        %3202 = vmatprep.subr.bf16.mxu0 0
        %3203 = vmatpush1.bf16.msra.mxu0 %v395
        %3204 = vmatprep.subr.bf16.mxu0 0
        %3205 = vmatpush2.bf16.msra.mxu0 0
        %3206 = vmatprep.subr.bf16.mxu0 0
        %3207 = vmatpush2.bf16.msra.mxu0 0
        %3208 = vmatprep.subr.bf16.mxu0 0
        %3209 = vmatpush2.bf16.msra.mxu0 0
        %3210 = vmatprep.subr.bf16.mxu0 0
        %3211 = vmatpush2.bf16.msra.mxu0 0
        %3212 = vmatprep.subr.bf16.mxu0 0
        %3213 = vmatpush2.bf16.msra.mxu0 0
        %3214 = vmatprep.subr.bf16.mxu0 0
        %3215 = vmatpush2.bf16.msra.mxu0 0
        %3216 = vmatprep.subr.bf16.mxu0 0
        %3217 = vmatpush2.bf16.msra.mxu0 0
        %3218 = vmatprep.subr.bf16.mxu0 0
        %3219 = vmatpush2.bf16.msra.mxu0 0
        %3220 = vmatprep.mubr.bf16.mxu0 0
        %3221 = vmatmul.mubr.bf16.gmra.mxu0 %v3186
        %v3222 = vpop.f32.mrf.mxu0
        %v3223 = vadd.f32 0.0, %v3222
        %v3224 = vpop.f32.mrf.mxu0
        %v3225 = vpop.f32.mrf.mxu0
        %v3226 = vadd.f32 0.0, %v3225
        %v3227 = vpop.f32.mrf.mxu0
        %3228 = vdwg.mxu0
        %3229 = vxpose.xlu0.c.b16.start [1/8] %v1757, 128
        %3230 = vxpose.xlu0.c.b16.cont [2/8] 0, 128
        %3231 = vxpose.xlu0.c.b16.cont [3/8] 0, 128
        %3232 = vxpose.xlu0.c.b16.cont [4/8] 0, 128
        %3233 = vxpose.xlu0.c.b16.cont [5/8] 0, 128
        %3234 = vxpose.xlu0.c.b16.cont [6/8] 0, 128
        %3235 = vxpose.xlu0.c.b16.cont [7/8] 0, 128
        %3236 = vxpose.xlu0.c.b16.end [8/8] 0, 128
        %v3237 = vpop.trf.xlu0
        %v3238 = vpop.trf.xlu0
        %v3239 = vpop.trf.xlu0
        %v3240 = vpop.trf.xlu0
        %v3241 = vpop.trf.xlu0
        %v3242 = vpop.trf.xlu0
        %v3243 = vpop.trf.xlu0
        %v3244 = vpop.trf.xlu0
        %v3247 = vsel %vm868, %v3237, 0
        %3249 = vmatprep.subr.bf16.mxu0 0
        %3250 = vmatpush1.bf16.msra.mxu0 0
        %3251 = vmatprep.subr.bf16.mxu0 0
        %3252 = vmatpush1.bf16.msra.mxu0 0
        %3253 = vmatprep.subr.bf16.mxu0 0
        %3254 = vmatpush1.bf16.msra.mxu0 0
        %3255 = vmatprep.subr.bf16.mxu0 0
        %3256 = vmatpush1.bf16.msra.mxu0 0
        %3257 = vmatprep.subr.bf16.mxu0 0
        %3258 = vmatpush1.bf16.msra.mxu0 0
        %3259 = vmatprep.subr.bf16.mxu0 0
        %3260 = vmatpush1.bf16.msra.mxu0 0
        %3261 = vmatprep.subr.bf16.mxu0 0
        %3262 = vmatpush1.bf16.msra.mxu0 0
        %3263 = vmatprep.subr.bf16.mxu0 0
        %3264 = vmatpush1.bf16.msra.mxu0 %v396
        %3265 = vmatprep.subr.bf16.mxu0 0
        %3266 = vmatpush2.bf16.msra.mxu0 0
        %3267 = vmatprep.subr.bf16.mxu0 0
        %3268 = vmatpush2.bf16.msra.mxu0 0
        %3269 = vmatprep.subr.bf16.mxu0 0
        %3270 = vmatpush2.bf16.msra.mxu0 0
        %3271 = vmatprep.subr.bf16.mxu0 0
        %3272 = vmatpush2.bf16.msra.mxu0 0
        %3273 = vmatprep.subr.bf16.mxu0 0
        %3274 = vmatpush2.bf16.msra.mxu0 0
        %3275 = vmatprep.subr.bf16.mxu0 0
        %3276 = vmatpush2.bf16.msra.mxu0 0
        %3277 = vmatprep.subr.bf16.mxu0 0
        %3278 = vmatpush2.bf16.msra.mxu0 0
        %3279 = vmatprep.subr.bf16.mxu0 0
        %3280 = vmatpush2.bf16.msra.mxu0 0
        %3281 = vmatprep.mubr.bf16.mxu0 0
        %3282 = vmatmul.mubr.bf16.gmra.mxu0 %v3247
        %v3283 = vpop.f32.mrf.mxu0
        %v3284 = vadd.f32 0.0, %v3283
        %v3285 = vpop.f32.mrf.mxu0
        %v3286 = vpop.f32.mrf.mxu0
        %v3287 = vadd.f32 0.0, %v3286
        %v3288 = vpop.f32.mrf.mxu0
        %3289 = vdwg.mxu0
        %3290 = vxpose.xlu0.c.b16.start [1/8] %v1758, 128
        %3291 = vxpose.xlu0.c.b16.cont [2/8] 0, 128
        %3292 = vxpose.xlu0.c.b16.cont [3/8] 0, 128
        %3293 = vxpose.xlu0.c.b16.cont [4/8] 0, 128
        %3294 = vxpose.xlu0.c.b16.cont [5/8] 0, 128
        %3295 = vxpose.xlu0.c.b16.cont [6/8] 0, 128
        %3296 = vxpose.xlu0.c.b16.cont [7/8] 0, 128
        %3297 = vxpose.xlu0.c.b16.end [8/8] 0, 128
        %v3298 = vpop.trf.xlu0
        %v3299 = vpop.trf.xlu0
        %v3300 = vpop.trf.xlu0
        %v3301 = vpop.trf.xlu0
        %v3302 = vpop.trf.xlu0
        %v3303 = vpop.trf.xlu0
        %v3304 = vpop.trf.xlu0
        %v3305 = vpop.trf.xlu0
        %v3308 = vsel %vm868, %v3298, 0
        %3310 = vmatprep.subr.bf16.mxu0 0
        %3311 = vmatpush1.bf16.msra.mxu0 0
        %3312 = vmatprep.subr.bf16.mxu0 0
        %3313 = vmatpush1.bf16.msra.mxu0 0
        %3314 = vmatprep.subr.bf16.mxu0 0
        %3315 = vmatpush1.bf16.msra.mxu0 0
        %3316 = vmatprep.subr.bf16.mxu0 0
        %3317 = vmatpush1.bf16.msra.mxu0 0
        %3318 = vmatprep.subr.bf16.mxu0 0
        %3319 = vmatpush1.bf16.msra.mxu0 0
        %3320 = vmatprep.subr.bf16.mxu0 0
        %3321 = vmatpush1.bf16.msra.mxu0 0
        %3322 = vmatprep.subr.bf16.mxu0 0
        %3323 = vmatpush1.bf16.msra.mxu0 0
        %3324 = vmatprep.subr.bf16.mxu0 0
        %3325 = vmatpush1.bf16.msra.mxu0 %v397
        %3326 = vmatprep.subr.bf16.mxu0 0
        %3327 = vmatpush2.bf16.msra.mxu0 0
        %3328 = vmatprep.subr.bf16.mxu0 0
        %3329 = vmatpush2.bf16.msra.mxu0 0
        %3330 = vmatprep.subr.bf16.mxu0 0
        %3331 = vmatpush2.bf16.msra.mxu0 0
        %3332 = vmatprep.subr.bf16.mxu0 0
        %3333 = vmatpush2.bf16.msra.mxu0 0
        %3334 = vmatprep.subr.bf16.mxu0 0
        %3335 = vmatpush2.bf16.msra.mxu0 0
        %3336 = vmatprep.subr.bf16.mxu0 0
        %3337 = vmatpush2.bf16.msra.mxu0 0
        %3338 = vmatprep.subr.bf16.mxu0 0
        %3339 = vmatpush2.bf16.msra.mxu0 0
        %3340 = vmatprep.subr.bf16.mxu0 0
        %3341 = vmatpush2.bf16.msra.mxu0 0
        %3342 = vmatprep.mubr.bf16.mxu0 0
        %3343 = vmatmul.mubr.bf16.gmra.mxu0 %v3308
        %v3344 = vpop.f32.mrf.mxu0
        %v3345 = vadd.f32 0.0, %v3344
        %v3346 = vpop.f32.mrf.mxu0
        %v3347 = vpop.f32.mrf.mxu0
        %v3348 = vadd.f32 0.0, %v3347
        %v3349 = vpop.f32.mrf.mxu0
        %3350 = vdwg.mxu0
        %3351 = vxpose.xlu0.c.b16.start [1/8] %v1759, 128
        %3352 = vxpose.xlu0.c.b16.cont [2/8] 0, 128
        %3353 = vxpose.xlu0.c.b16.cont [3/8] 0, 128
        %3354 = vxpose.xlu0.c.b16.cont [4/8] 0, 128
        %3355 = vxpose.xlu0.c.b16.cont [5/8] 0, 128
        %3356 = vxpose.xlu0.c.b16.cont [6/8] 0, 128
        %3357 = vxpose.xlu0.c.b16.cont [7/8] 0, 128
        %3358 = vxpose.xlu0.c.b16.end [8/8] 0, 128
        %v3359 = vpop.trf.xlu0
        %v3360 = vpop.trf.xlu0
        %v3361 = vpop.trf.xlu0
        %v3362 = vpop.trf.xlu0
        %v3363 = vpop.trf.xlu0
        %v3364 = vpop.trf.xlu0
        %v3365 = vpop.trf.xlu0
        %v3366 = vpop.trf.xlu0
        %v3369 = vsel %vm868, %v3359, 0
        %3371 = vmatprep.subr.bf16.mxu0 0
        %3372 = vmatpush1.bf16.msra.mxu0 0
        %3373 = vmatprep.subr.bf16.mxu0 0
        %3374 = vmatpush1.bf16.msra.mxu0 0
        %3375 = vmatprep.subr.bf16.mxu0 0
        %3376 = vmatpush1.bf16.msra.mxu0 0
        %3377 = vmatprep.subr.bf16.mxu0 0
        %3378 = vmatpush1.bf16.msra.mxu0 0
        %3379 = vmatprep.subr.bf16.mxu0 0
        %3380 = vmatpush1.bf16.msra.mxu0 0
        %3381 = vmatprep.subr.bf16.mxu0 0
        %3382 = vmatpush1.bf16.msra.mxu0 0
        %3383 = vmatprep.subr.bf16.mxu0 0
        %3384 = vmatpush1.bf16.msra.mxu0 0
        %3385 = vmatprep.subr.bf16.mxu0 0
        %3386 = vmatpush1.bf16.msra.mxu0 %v398
        %3387 = vmatprep.subr.bf16.mxu0 0
        %3388 = vmatpush2.bf16.msra.mxu0 0
        %3389 = vmatprep.subr.bf16.mxu0 0
        %3390 = vmatpush2.bf16.msra.mxu0 0
        %3391 = vmatprep.subr.bf16.mxu0 0
        %3392 = vmatpush2.bf16.msra.mxu0 0
        %3393 = vmatprep.subr.bf16.mxu0 0
        %3394 = vmatpush2.bf16.msra.mxu0 0
        %3395 = vmatprep.subr.bf16.mxu0 0
        %3396 = vmatpush2.bf16.msra.mxu0 0
        %3397 = vmatprep.subr.bf16.mxu0 0
        %3398 = vmatpush2.bf16.msra.mxu0 0
        %3399 = vmatprep.subr.bf16.mxu0 0
        %3400 = vmatpush2.bf16.msra.mxu0 0
        %3401 = vmatprep.subr.bf16.mxu0 0
        %3402 = vmatpush2.bf16.msra.mxu0 0
        %3403 = vmatprep.mubr.bf16.mxu0 0
        %3404 = vmatmul.mubr.bf16.gmra.mxu0 %v3369
        %v3405 = vpop.f32.mrf.mxu0
        %v3406 = vadd.f32 0.0, %v3405
        %v3407 = vpop.f32.mrf.mxu0
        %v3408 = vpop.f32.mrf.mxu0
        %v3409 = vadd.f32 0.0, %v3408
        %v3410 = vpop.f32.mrf.mxu0
        %3411 = vdwg.mxu0
        %3412 = vxpose.xlu0.c.b16.start [1/8] %v1760, 128
        %3413 = vxpose.xlu0.c.b16.cont [2/8] 0, 128
        %3414 = vxpose.xlu0.c.b16.cont [3/8] 0, 128
        %3415 = vxpose.xlu0.c.b16.cont [4/8] 0, 128
        %3416 = vxpose.xlu0.c.b16.cont [5/8] 0, 128
        %3417 = vxpose.xlu0.c.b16.cont [6/8] 0, 128
        %3418 = vxpose.xlu0.c.b16.cont [7/8] 0, 128
        %3419 = vxpose.xlu0.c.b16.end [8/8] 0, 128
        %v3420 = vpop.trf.xlu0
        %v3421 = vpop.trf.xlu0
        %v3422 = vpop.trf.xlu0
        %v3423 = vpop.trf.xlu0
        %v3424 = vpop.trf.xlu0
        %v3425 = vpop.trf.xlu0
        %v3426 = vpop.trf.xlu0
        %v3427 = vpop.trf.xlu0
        %v3430 = vsel %vm868, %v3420, 0
        %3432 = vmatprep.subr.bf16.mxu0 0
        %3433 = vmatpush1.bf16.msra.mxu0 0
        %3434 = vmatprep.subr.bf16.mxu0 0
        %3435 = vmatpush1.bf16.msra.mxu0 0
        %3436 = vmatprep.subr.bf16.mxu0 0
        %3437 = vmatpush1.bf16.msra.mxu0 0
        %3438 = vmatprep.subr.bf16.mxu0 0
        %3439 = vmatpush1.bf16.msra.mxu0 0
        %3440 = vmatprep.subr.bf16.mxu0 0
        %3441 = vmatpush1.bf16.msra.mxu0 0
        %3442 = vmatprep.subr.bf16.mxu0 0
        %3443 = vmatpush1.bf16.msra.mxu0 0
        %3444 = vmatprep.subr.bf16.mxu0 0
        %3445 = vmatpush1.bf16.msra.mxu0 0
        %3446 = vmatprep.subr.bf16.mxu0 0
        %3447 = vmatpush1.bf16.msra.mxu0 %v399
        %3448 = vmatprep.subr.bf16.mxu0 0
        %3449 = vmatpush2.bf16.msra.mxu0 0
        %3450 = vmatprep.subr.bf16.mxu0 0
        %3451 = vmatpush2.bf16.msra.mxu0 0
        %3452 = vmatprep.subr.bf16.mxu0 0
        %3453 = vmatpush2.bf16.msra.mxu0 0
        %3454 = vmatprep.subr.bf16.mxu0 0
        %3455 = vmatpush2.bf16.msra.mxu0 0
        %3456 = vmatprep.subr.bf16.mxu0 0
        %3457 = vmatpush2.bf16.msra.mxu0 0
        %3458 = vmatprep.subr.bf16.mxu0 0
        %3459 = vmatpush2.bf16.msra.mxu0 0
        %3460 = vmatprep.subr.bf16.mxu0 0
        %3461 = vmatpush2.bf16.msra.mxu0 0
        %3462 = vmatprep.subr.bf16.mxu0 0
        %3463 = vmatpush2.bf16.msra.mxu0 0
        %3464 = vmatprep.mubr.bf16.mxu0 0
        %3465 = vmatmul.mubr.bf16.gmra.mxu0 %v3430
        %v3466 = vpop.f32.mrf.mxu0
        %v3467 = vadd.f32 0.0, %v3466
        %v3468 = vpop.f32.mrf.mxu0
        %v3469 = vpop.f32.mrf.mxu0
        %v3470 = vadd.f32 0.0, %v3469
        %v3471 = vpop.f32.mrf.mxu0
        %3472 = vdwg.mxu0
        %3473 = vxpose.xlu0.c.b16.start [1/8] %v1761, 128
        %3474 = vxpose.xlu0.c.b16.cont [2/8] 0, 128
        %3475 = vxpose.xlu0.c.b16.cont [3/8] 0, 128
        %3476 = vxpose.xlu0.c.b16.cont [4/8] 0, 128
        %3477 = vxpose.xlu0.c.b16.cont [5/8] 0, 128
        %3478 = vxpose.xlu0.c.b16.cont [6/8] 0, 128
        %3479 = vxpose.xlu0.c.b16.cont [7/8] 0, 128
        %3480 = vxpose.xlu0.c.b16.end [8/8] 0, 128
        %v3481 = vpop.trf.xlu0
        %v3482 = vpop.trf.xlu0
        %v3483 = vpop.trf.xlu0
        %v3484 = vpop.trf.xlu0
        %v3485 = vpop.trf.xlu0
        %v3486 = vpop.trf.xlu0
        %v3487 = vpop.trf.xlu0
        %v3488 = vpop.trf.xlu0
        %v3491 = vsel %vm868, %v3481, 0
        %3493 = vmatprep.subr.bf16.mxu0 0
        %3494 = vmatpush1.bf16.msra.mxu0 0
        %3495 = vmatprep.subr.bf16.mxu0 0
        %3496 = vmatpush1.bf16.msra.mxu0 0
        %3497 = vmatprep.subr.bf16.mxu0 0
        %3498 = vmatpush1.bf16.msra.mxu0 0
        %3499 = vmatprep.subr.bf16.mxu0 0
        %3500 = vmatpush1.bf16.msra.mxu0 0
        %3501 = vmatprep.subr.bf16.mxu0 0
        %3502 = vmatpush1.bf16.msra.mxu0 0
        %3503 = vmatprep.subr.bf16.mxu0 0
        %3504 = vmatpush1.bf16.msra.mxu0 0
        %3505 = vmatprep.subr.bf16.mxu0 0
        %3506 = vmatpush1.bf16.msra.mxu0 0
        %3507 = vmatprep.subr.bf16.mxu0 0
        %3508 = vmatpush1.bf16.msra.mxu0 %v400
        %3509 = vmatprep.subr.bf16.mxu0 0
        %3510 = vmatpush2.bf16.msra.mxu0 0
        %3511 = vmatprep.subr.bf16.mxu0 0
        %3512 = vmatpush2.bf16.msra.mxu0 0
        %3513 = vmatprep.subr.bf16.mxu0 0
        %3514 = vmatpush2.bf16.msra.mxu0 0
        %3515 = vmatprep.subr.bf16.mxu0 0
        %3516 = vmatpush2.bf16.msra.mxu0 0
        %3517 = vmatprep.subr.bf16.mxu0 0
        %3518 = vmatpush2.bf16.msra.mxu0 0
        %3519 = vmatprep.subr.bf16.mxu0 0
        %3520 = vmatpush2.bf16.msra.mxu0 0
        %3521 = vmatprep.subr.bf16.mxu0 0
        %3522 = vmatpush2.bf16.msra.mxu0 0
        %3523 = vmatprep.subr.bf16.mxu0 0
        %3524 = vmatpush2.bf16.msra.mxu0 0
        %3525 = vmatprep.mubr.bf16.mxu0 0
        %3526 = vmatmul.mubr.bf16.gmra.mxu0 %v3491
        %v3527 = vpop.f32.mrf.mxu0
        %v3528 = vadd.f32 0.0, %v3527
        %v3529 = vpop.f32.mrf.mxu0
        %v3530 = vpop.f32.mrf.mxu0
        %v3531 = vadd.f32 0.0, %v3530
        %v3532 = vpop.f32.mrf.mxu0
        %3533 = vdwg.mxu0
        %3534 = vxpose.xlu0.c.b16.start [1/8] %v1762, 128
        %3535 = vxpose.xlu0.c.b16.cont [2/8] 0, 128
        %3536 = vxpose.xlu0.c.b16.cont [3/8] 0, 128
        %3537 = vxpose.xlu0.c.b16.cont [4/8] 0, 128
        %3538 = vxpose.xlu0.c.b16.cont [5/8] 0, 128
        %3539 = vxpose.xlu0.c.b16.cont [6/8] 0, 128
        %3540 = vxpose.xlu0.c.b16.cont [7/8] 0, 128
        %3541 = vxpose.xlu0.c.b16.end [8/8] 0, 128
        %v3542 = vpop.trf.xlu0
        %v3543 = vpop.trf.xlu0
        %v3544 = vpop.trf.xlu0
        %v3545 = vpop.trf.xlu0
        %v3546 = vpop.trf.xlu0
        %v3547 = vpop.trf.xlu0
        %v3548 = vpop.trf.xlu0
        %v3549 = vpop.trf.xlu0
        %v3552 = vsel %vm868, %v3542, 0
        %3554 = vmatprep.subr.bf16.mxu0 0
        %3555 = vmatpush1.bf16.msra.mxu0 0
        %3556 = vmatprep.subr.bf16.mxu0 0
        %3557 = vmatpush1.bf16.msra.mxu0 0
        %3558 = vmatprep.subr.bf16.mxu0 0
        %3559 = vmatpush1.bf16.msra.mxu0 0
        %3560 = vmatprep.subr.bf16.mxu0 0
        %3561 = vmatpush1.bf16.msra.mxu0 0
        %3562 = vmatprep.subr.bf16.mxu0 0
        %3563 = vmatpush1.bf16.msra.mxu0 0
        %3564 = vmatprep.subr.bf16.mxu0 0
        %3565 = vmatpush1.bf16.msra.mxu0 0
        %3566 = vmatprep.subr.bf16.mxu0 0
        %3567 = vmatpush1.bf16.msra.mxu0 0
        %3568 = vmatprep.subr.bf16.mxu0 0
        %3569 = vmatpush1.bf16.msra.mxu0 %v401
        %3570 = vmatprep.subr.bf16.mxu0 0
        %3571 = vmatpush2.bf16.msra.mxu0 0
        %3572 = vmatprep.subr.bf16.mxu0 0
        %3573 = vmatpush2.bf16.msra.mxu0 0
        %3574 = vmatprep.subr.bf16.mxu0 0
        %3575 = vmatpush2.bf16.msra.mxu0 0
        %3576 = vmatprep.subr.bf16.mxu0 0
        %3577 = vmatpush2.bf16.msra.mxu0 0
        %3578 = vmatprep.subr.bf16.mxu0 0
        %3579 = vmatpush2.bf16.msra.mxu0 0
        %3580 = vmatprep.subr.bf16.mxu0 0
        %3581 = vmatpush2.bf16.msra.mxu0 0
        %3582 = vmatprep.subr.bf16.mxu0 0
        %3583 = vmatpush2.bf16.msra.mxu0 0
        %3584 = vmatprep.subr.bf16.mxu0 0
        %3585 = vmatpush2.bf16.msra.mxu0 0
        %3586 = vmatprep.mubr.bf16.mxu0 0
        %3587 = vmatmul.mubr.bf16.gmra.mxu0 %v3552
        %v3588 = vpop.f32.mrf.mxu0
        %v3589 = vadd.f32 0.0, %v3588
        %v3590 = vpop.f32.mrf.mxu0
        %v3591 = vpop.f32.mrf.mxu0
        %v3592 = vadd.f32 0.0, %v3591
        %v3593 = vpop.f32.mrf.mxu0
        %3594 = vdwg.mxu0
        %3595 = vxpose.xlu0.c.b16.start [1/8] %v1763, 128
        %3596 = vxpose.xlu0.c.b16.cont [2/8] 0, 128
        %3597 = vxpose.xlu0.c.b16.cont [3/8] 0, 128
        %3598 = vxpose.xlu0.c.b16.cont [4/8] 0, 128
        %3599 = vxpose.xlu0.c.b16.cont [5/8] 0, 128
        %3600 = vxpose.xlu0.c.b16.cont [6/8] 0, 128
        %3601 = vxpose.xlu0.c.b16.cont [7/8] 0, 128
        %3602 = vxpose.xlu0.c.b16.end [8/8] 0, 128
        %v3603 = vpop.trf.xlu0
        %v3604 = vpop.trf.xlu0
        %v3605 = vpop.trf.xlu0
        %v3606 = vpop.trf.xlu0
        %v3607 = vpop.trf.xlu0
        %v3608 = vpop.trf.xlu0
        %v3609 = vpop.trf.xlu0
        %v3610 = vpop.trf.xlu0
        %v3613 = vsel %vm868, %v3603, 0
        %3615 = vmatprep.subr.bf16.mxu0 0
        %3616 = vmatpush1.bf16.msra.mxu0 0
        %3617 = vmatprep.subr.bf16.mxu0 0
        %3618 = vmatpush1.bf16.msra.mxu0 0
        %3619 = vmatprep.subr.bf16.mxu0 0
        %3620 = vmatpush1.bf16.msra.mxu0 0
        %3621 = vmatprep.subr.bf16.mxu0 0
        %3622 = vmatpush1.bf16.msra.mxu0 0
        %3623 = vmatprep.subr.bf16.mxu0 0
        %3624 = vmatpush1.bf16.msra.mxu0 0
        %3625 = vmatprep.subr.bf16.mxu0 0
        %3626 = vmatpush1.bf16.msra.mxu0 0
        %3627 = vmatprep.subr.bf16.mxu0 0
        %3628 = vmatpush1.bf16.msra.mxu0 0
        %3629 = vmatprep.subr.bf16.mxu0 0
        %3630 = vmatpush1.bf16.msra.mxu0 %v402
        %3631 = vmatprep.subr.bf16.mxu0 0
        %3632 = vmatpush2.bf16.msra.mxu0 0
        %3633 = vmatprep.subr.bf16.mxu0 0
        %3634 = vmatpush2.bf16.msra.mxu0 0
        %3635 = vmatprep.subr.bf16.mxu0 0
        %3636 = vmatpush2.bf16.msra.mxu0 0
        %3637 = vmatprep.subr.bf16.mxu0 0
        %3638 = vmatpush2.bf16.msra.mxu0 0
        %3639 = vmatprep.subr.bf16.mxu0 0
        %3640 = vmatpush2.bf16.msra.mxu0 0
        %3641 = vmatprep.subr.bf16.mxu0 0
        %3642 = vmatpush2.bf16.msra.mxu0 0
        %3643 = vmatprep.subr.bf16.mxu0 0
        %3644 = vmatpush2.bf16.msra.mxu0 0
        %3645 = vmatprep.subr.bf16.mxu0 0
        %3646 = vmatpush2.bf16.msra.mxu0 0
        %3647 = vmatprep.mubr.bf16.mxu0 0
        %3648 = vmatmul.mubr.bf16.gmra.mxu0 %v3613
        %v3649 = vpop.f32.mrf.mxu0
        %v3650 = vadd.f32 0.0, %v3649
        %v3651 = vpop.f32.mrf.mxu0
        %v3652 = vpop.f32.mrf.mxu0
        %v3653 = vadd.f32 0.0, %v3652
        %v3654 = vpop.f32.mrf.mxu0
        %3655 = vdwg.mxu0
        %3656 = vxpose.xlu0.c.b16.start [1/8] %v1764, 128
        %3657 = vxpose.xlu0.c.b16.cont [2/8] 0, 128
        %3658 = vxpose.xlu0.c.b16.cont [3/8] 0, 128
        %3659 = vxpose.xlu0.c.b16.cont [4/8] 0, 128
        %3660 = vxpose.xlu0.c.b16.cont [5/8] 0, 128
        %3661 = vxpose.xlu0.c.b16.cont [6/8] 0, 128
        %3662 = vxpose.xlu0.c.b16.cont [7/8] 0, 128
        %3663 = vxpose.xlu0.c.b16.end [8/8] 0, 128
        %v3664 = vpop.trf.xlu0
        %v3665 = vpop.trf.xlu0
        %v3666 = vpop.trf.xlu0
        %v3667 = vpop.trf.xlu0
        %v3668 = vpop.trf.xlu0
        %v3669 = vpop.trf.xlu0
        %v3670 = vpop.trf.xlu0
        %v3671 = vpop.trf.xlu0
        %v3674 = vsel %vm868, %v3664, 0
        %3676 = vmatprep.subr.bf16.mxu0 0
        %3677 = vmatpush1.bf16.msra.mxu0 0
        %3678 = vmatprep.subr.bf16.mxu0 0
        %3679 = vmatpush1.bf16.msra.mxu0 0
        %3680 = vmatprep.subr.bf16.mxu0 0
        %3681 = vmatpush1.bf16.msra.mxu0 0
        %3682 = vmatprep.subr.bf16.mxu0 0
        %3683 = vmatpush1.bf16.msra.mxu0 0
        %3684 = vmatprep.subr.bf16.mxu0 0
        %3685 = vmatpush1.bf16.msra.mxu0 0
        %3686 = vmatprep.subr.bf16.mxu0 0
        %3687 = vmatpush1.bf16.msra.mxu0 0
        %3688 = vmatprep.subr.bf16.mxu0 0
        %3689 = vmatpush1.bf16.msra.mxu0 0
        %3690 = vmatprep.subr.bf16.mxu0 0
        %3691 = vmatpush1.bf16.msra.mxu0 %v403
        %3692 = vmatprep.subr.bf16.mxu0 0
        %3693 = vmatpush2.bf16.msra.mxu0 0
        %3694 = vmatprep.subr.bf16.mxu0 0
        %3695 = vmatpush2.bf16.msra.mxu0 0
        %3696 = vmatprep.subr.bf16.mxu0 0
        %3697 = vmatpush2.bf16.msra.mxu0 0
        %3698 = vmatprep.subr.bf16.mxu0 0
        %3699 = vmatpush2.bf16.msra.mxu0 0
        %3700 = vmatprep.subr.bf16.mxu0 0
        %3701 = vmatpush2.bf16.msra.mxu0 0
        %3702 = vmatprep.subr.bf16.mxu0 0
        %3703 = vmatpush2.bf16.msra.mxu0 0
        %3704 = vmatprep.subr.bf16.mxu0 0
        %3705 = vmatpush2.bf16.msra.mxu0 0
        %3706 = vmatprep.subr.bf16.mxu0 0
        %3707 = vmatpush2.bf16.msra.mxu0 0
        %3708 = vmatprep.mubr.bf16.mxu0 0
        %3709 = vmatmul.mubr.bf16.gmra.mxu0 %v3674
        %v3710 = vpop.f32.mrf.mxu0
        %v3711 = vadd.f32 0.0, %v3710
        %v3712 = vpop.f32.mrf.mxu0
        %v3713 = vpop.f32.mrf.mxu0
        %v3714 = vadd.f32 0.0, %v3713
        %v3715 = vpop.f32.mrf.mxu0
        %3716 = vdwg.mxu0
        %v3749 = vrot.slane %v1881, 7
        %vm3750 = vcmask 1041409
        %v3751 = vsel %vm3750, %v3749, %v1820
        %v3752 = vrot.slane %v1942, 6
        %vm3753 = vcmask 1042434
        %v3754 = vsel %vm3753, %v3752, %v3751
        %v3755 = vrot.slane %v2003, 5
        %vm3756 = vcmask 1043459
        %v3757 = vsel %vm3756, %v3755, %v3754
        %v3758 = vrot.slane %v2064, 4
        %vm3759 = vcmask 1044484
        %v3760 = vsel %vm3759, %v3758, %v3757
        %v3761 = vrot.slane %v2125, 3
        %vm3762 = vcmask 1045509
        %v3763 = vsel %vm3762, %v3761, %v3760
        %v3764 = vrot.slane %v2186, 2
        %vm3765 = vcmask 1046534
        %v3766 = vsel %vm3765, %v3764, %v3763
        %v3767 = vrot.slane %v2247, 1
        %vm3768 = vcmask 1047559
        %v3769 = vsel %vm3768, %v3767, %v3766
        %v3770 = vrot.slane %v2369, 7
        %v3771 = vsel %vm3750, %v3770, %v2308
        %v3772 = vrot.slane %v2430, 6
        %v3773 = vsel %vm3753, %v3772, %v3771
        %v3774 = vrot.slane %v2491, 5
        %v3775 = vsel %vm3756, %v3774, %v3773
        %v3776 = vrot.slane %v2552, 4
        %v3777 = vsel %vm3759, %v3776, %v3775
        %v3778 = vrot.slane %v2613, 3
        %v3779 = vsel %vm3762, %v3778, %v3777
        %v3780 = vrot.slane %v2674, 2
        %v3781 = vsel %vm3765, %v3780, %v3779
        %v3782 = vrot.slane %v2735, 1
        %v3783 = vsel %vm3768, %v3782, %v3781
        %v3784 = vrot.slane %v2857, 7
        %v3785 = vsel %vm3750, %v3784, %v2796
        %v3786 = vrot.slane %v2918, 6
        %v3787 = vsel %vm3753, %v3786, %v3785
        %v3788 = vrot.slane %v2979, 5
        %v3789 = vsel %vm3756, %v3788, %v3787
        %v3790 = vrot.slane %v3040, 4
        %v3791 = vsel %vm3759, %v3790, %v3789
        %v3792 = vrot.slane %v3101, 3
        %v3793 = vsel %vm3762, %v3792, %v3791
        %v3794 = vrot.slane %v3162, 2
        %v3795 = vsel %vm3765, %v3794, %v3793
        %v3796 = vrot.slane %v3223, 1
        %v3797 = vsel %vm3768, %v3796, %v3795
        %v3798 = vrot.slane %v3345, 7
        %v3799 = vsel %vm3750, %v3798, %v3284
        %v3800 = vrot.slane %v3406, 6
        %v3801 = vsel %vm3753, %v3800, %v3799
        %v3802 = vrot.slane %v3467, 5
        %v3803 = vsel %vm3756, %v3802, %v3801
        %v3804 = vrot.slane %v3528, 4
        %v3805 = vsel %vm3759, %v3804, %v3803
        %v3806 = vrot.slane %v3589, 3
        %v3807 = vsel %vm3762, %v3806, %v3805
        %v3808 = vrot.slane %v3650, 2
        %v3809 = vsel %vm3765, %v3808, %v3807
        %v3810 = vrot.slane %v3711, 1
        %v3811 = vsel %vm3768, %v3810, %v3809
        %3816 = vst.msk [vmem:[%s166] sm:$0xff] %vm416, %v3769
        %3817 = vst.msk [vmem:[%s166 + $0x20] sm:$0xff] %vm416, %v3783
        %3818 = vst.msk [vmem:[%s166 + $0x40] sm:$0xff] %vm416, %v3797
        %3819 = vst.msk [vmem:[%s166 + $0x60] sm:$0xff] %vm416, %v3811
        %v3820 = vrot.slane %v1820, 1
        %v3821 = vsel %vm3750, %v1881, %v3820
        %v3822 = vrot.slane %v1942, 7
        %v3823 = vsel %vm3753, %v3822, %v3821
        %v3824 = vrot.slane %v2003, 6
        %v3825 = vsel %vm3756, %v3824, %v3823
        %v3826 = vrot.slane %v2064, 5
        %v3827 = vsel %vm3759, %v3826, %v3825
        %v3828 = vrot.slane %v2125, 4
        %v3829 = vsel %vm3762, %v3828, %v3827
        %v3830 = vrot.slane %v2186, 3
        %v3831 = vsel %vm3765, %v3830, %v3829
        %v3832 = vrot.slane %v2247, 2
        %v3833 = vsel %vm3768, %v3832, %v3831
        %v3834 = vrot.slane %v2308, 1
        %v3835 = vsel %vm3750, %v2369, %v3834
        %v3836 = vrot.slane %v2430, 7
        %v3837 = vsel %vm3753, %v3836, %v3835
        %v3838 = vrot.slane %v2491, 6
        %v3839 = vsel %vm3756, %v3838, %v3837
        %v3840 = vrot.slane %v2552, 5
        %v3841 = vsel %vm3759, %v3840, %v3839
        %v3842 = vrot.slane %v2613, 4
        %v3843 = vsel %vm3762, %v3842, %v3841
        %v3844 = vrot.slane %v2674, 3
        %v3845 = vsel %vm3765, %v3844, %v3843
        %v3846 = vrot.slane %v2735, 2
        %v3847 = vsel %vm3768, %v3846, %v3845
        %v3848 = vrot.slane %v2796, 1
        %v3849 = vsel %vm3750, %v2857, %v3848
        %v3850 = vrot.slane %v2918, 7
        %v3851 = vsel %vm3753, %v3850, %v3849
        %v3852 = vrot.slane %v2979, 6
        %v3853 = vsel %vm3756, %v3852, %v3851
        %v3854 = vrot.slane %v3040, 5
        %v3855 = vsel %vm3759, %v3854, %v3853
        %v3856 = vrot.slane %v3101, 4
        %v3857 = vsel %vm3762, %v3856, %v3855
        %v3858 = vrot.slane %v3162, 3
        %v3859 = vsel %vm3765, %v3858, %v3857
        %v3860 = vrot.slane %v3223, 2
        %v3861 = vsel %vm3768, %v3860, %v3859
        %v3862 = vrot.slane %v3284, 1
        %v3863 = vsel %vm3750, %v3345, %v3862
        %v3864 = vrot.slane %v3406, 7
        %v3865 = vsel %vm3753, %v3864, %v3863
        %v3866 = vrot.slane %v3467, 6
        %v3867 = vsel %vm3756, %v3866, %v3865
        %v3868 = vrot.slane %v3528, 5
        %v3869 = vsel %vm3759, %v3868, %v3867
        %v3870 = vrot.slane %v3589, 4
        %v3871 = vsel %vm3762, %v3870, %v3869
        %v3872 = vrot.slane %v3650, 3
        %v3873 = vsel %vm3765, %v3872, %v3871
        %v3874 = vrot.slane %v3711, 2
        %v3875 = vsel %vm3768, %v3874, %v3873
        %3876 = vrot.lane.b32.xlu0 %v3833, 32
        %v3877 = vpop.permute.xlu0 %3876
        %3878 = vrot.lane.b32.xlu0 %v3847, 32
        %v3879 = vpop.permute.xlu0 %3878
        %3880 = vrot.lane.b32.xlu0 %v3861, 32
        %v3881 = vpop.permute.xlu0 %3880
        %3882 = vrot.lane.b32.xlu0 %v3875, 32
        %v3883 = vpop.permute.xlu0 %3882
        %vm3888 = vcmask 523520
        %3889 = vst.msk [vmem:[%s166] sm:$0xff] %vm3888, %v3877
        %3890 = vst.msk [vmem:[%s166 + $0x20] sm:$0xff] %vm3888, %v3879
        %3891 = vst.msk [vmem:[%s166 + $0x40] sm:$0xff] %vm3888, %v3881
        %3892 = vst.msk [vmem:[%s166 + $0x60] sm:$0xff] %vm3888, %v3883
        %v3893 = vrot.slane %v1820, 2
        %v3894 = vrot.slane %v1881, 1
        %v3895 = vsel %vm3750, %v3894, %v3893
        %v3896 = vsel %vm3753, %v1942, %v3895
        %v3897 = vrot.slane %v2003, 7
        %v3898 = vsel %vm3756, %v3897, %v3896
        %v3899 = vrot.slane %v2064, 6
        %v3900 = vsel %vm3759, %v3899, %v3898
        %v3901 = vrot.slane %v2125, 5
        %v3902 = vsel %vm3762, %v3901, %v3900
        %v3903 = vrot.slane %v2186, 4
        %v3904 = vsel %vm3765, %v3903, %v3902
        %v3905 = vrot.slane %v2247, 3
        %v3906 = vsel %vm3768, %v3905, %v3904
        %v3907 = vrot.slane %v2308, 2
        %v3908 = vrot.slane %v2369, 1
        %v3909 = vsel %vm3750, %v3908, %v3907
        %v3910 = vsel %vm3753, %v2430, %v3909
        %v3911 = vrot.slane %v2491, 7
        %v3912 = vsel %vm3756, %v3911, %v3910
        %v3913 = vrot.slane %v2552, 6
        %v3914 = vsel %vm3759, %v3913, %v3912
        %v3915 = vrot.slane %v2613, 5
        %v3916 = vsel %vm3762, %v3915, %v3914
        %v3917 = vrot.slane %v2674, 4
        %v3918 = vsel %vm3765, %v3917, %v3916
        %v3919 = vrot.slane %v2735, 3
        %v3920 = vsel %vm3768, %v3919, %v3918
        %v3921 = vrot.slane %v2796, 2
        %v3922 = vrot.slane %v2857, 1
        %v3923 = vsel %vm3750, %v3922, %v3921
        %v3924 = vsel %vm3753, %v2918, %v3923
        %v3925 = vrot.slane %v2979, 7
        %v3926 = vsel %vm3756, %v3925, %v3924
        %v3927 = vrot.slane %v3040, 6
        %v3928 = vsel %vm3759, %v3927, %v3926
        %v3929 = vrot.slane %v3101, 5
        %v3930 = vsel %vm3762, %v3929, %v3928
        %v3931 = vrot.slane %v3162, 4
        %v3932 = vsel %vm3765, %v3931, %v3930
        %v3933 = vrot.slane %v3223, 3
        %v3934 = vsel %vm3768, %v3933, %v3932
        %v3935 = vrot.slane %v3284, 2
        %v3936 = vrot.slane %v3345, 1
        %v3937 = vsel %vm3750, %v3936, %v3935
        %v3938 = vsel %vm3753, %v3406, %v3937
        %v3939 = vrot.slane %v3467, 7
        %v3940 = vsel %vm3756, %v3939, %v3938
        %v3941 = vrot.slane %v3528, 6
        %v3942 = vsel %vm3759, %v3941, %v3940
        %v3943 = vrot.slane %v3589, 5
        %v3944 = vsel %vm3762, %v3943, %v3942
        %v3945 = vrot.slane %v3650, 4
        %v3946 = vsel %vm3765, %v3945, %v3944
        %v3947 = vrot.slane %v3711, 3
        %v3948 = vsel %vm3768, %v3947, %v3946
        %3949 = vrot.lane.b32.xlu0 %v3906, 64
        %v3950 = vpop.permute.xlu0 %3949
        %3951 = vrot.lane.b32.xlu0 %v3920, 64
        %v3952 = vpop.permute.xlu0 %3951
        %3953 = vrot.lane.b32.xlu0 %v3934, 64
        %v3954 = vpop.permute.xlu0 %3953
        %3955 = vrot.lane.b32.xlu0 %v3948, 64
        %v3956 = vpop.permute.xlu0 %3955
        %vm3961 = vcmask 785920
        %3962 = vst.msk [vmem:[%s166] sm:$0xff] %vm3961, %v3950
        %3963 = vst.msk [vmem:[%s166 + $0x20] sm:$0xff] %vm3961, %v3952
        %3964 = vst.msk [vmem:[%s166 + $0x40] sm:$0xff] %vm3961, %v3954
        %3965 = vst.msk [vmem:[%s166 + $0x60] sm:$0xff] %vm3961, %v3956
        %v3966 = vrot.slane %v1820, 3
        %v3967 = vrot.slane %v1881, 2
        %v3968 = vsel %vm3750, %v3967, %v3966
        %v3969 = vrot.slane %v1942, 1
        %v3970 = vsel %vm3753, %v3969, %v3968
        %v3971 = vsel %vm3756, %v2003, %v3970
        %v3972 = vrot.slane %v2064, 7
        %v3973 = vsel %vm3759, %v3972, %v3971
        %v3974 = vrot.slane %v2125, 6
        %v3975 = vsel %vm3762, %v3974, %v3973
        %v3976 = vrot.slane %v2186, 5
        %v3977 = vsel %vm3765, %v3976, %v3975
        %v3978 = vrot.slane %v2247, 4
        %v3979 = vsel %vm3768, %v3978, %v3977
        %v3980 = vrot.slane %v2308, 3
        %v3981 = vrot.slane %v2369, 2
        %v3982 = vsel %vm3750, %v3981, %v3980
        %v3983 = vrot.slane %v2430, 1
        %v3984 = vsel %vm3753, %v3983, %v3982
        %v3985 = vsel %vm3756, %v2491, %v3984
        %v3986 = vrot.slane %v2552, 7
        %v3987 = vsel %vm3759, %v3986, %v3985
        %v3988 = vrot.slane %v2613, 6
        %v3989 = vsel %vm3762, %v3988, %v3987
        %v3990 = vrot.slane %v2674, 5
        %v3991 = vsel %vm3765, %v3990, %v3989
        %v3992 = vrot.slane %v2735, 4
        %v3993 = vsel %vm3768, %v3992, %v3991
        %v3994 = vrot.slane %v2796, 3
        %v3995 = vrot.slane %v2857, 2
        %v3996 = vsel %vm3750, %v3995, %v3994
        %v3997 = vrot.slane %v2918, 1
        %v3998 = vsel %vm3753, %v3997, %v3996
        %v3999 = vsel %vm3756, %v2979, %v3998
        %v4000 = vrot.slane %v3040, 7
        %v4001 = vsel %vm3759, %v4000, %v3999
        %v4002 = vrot.slane %v3101, 6
        %v4003 = vsel %vm3762, %v4002, %v4001
        %v4004 = vrot.slane %v3162, 5
        %v4005 = vsel %vm3765, %v4004, %v4003
        %v4006 = vrot.slane %v3223, 4
        %v4007 = vsel %vm3768, %v4006, %v4005
        %v4008 = vrot.slane %v3284, 3
        %v4009 = vrot.slane %v3345, 2
        %v4010 = vsel %vm3750, %v4009, %v4008
        %v4011 = vrot.slane %v3406, 1
        %v4012 = vsel %vm3753, %v4011, %v4010
        %v4013 = vsel %vm3756, %v3467, %v4012
        %v4014 = vrot.slane %v3528, 7
        %v4015 = vsel %vm3759, %v4014, %v4013
        %v4016 = vrot.slane %v3589, 6
        %v4017 = vsel %vm3762, %v4016, %v4015
        %v4018 = vrot.slane %v3650, 5
        %v4019 = vsel %vm3765, %v4018, %v4017
        %v4020 = vrot.slane %v3711, 4
        %v4021 = vsel %vm3768, %v4020, %v4019
        %4022 = vrot.lane.b32.xlu0 %v3979, 96
        %v4023 = vpop.permute.xlu0 %4022
        %4024 = vrot.lane.b32.xlu0 %v3993, 96
        %v4025 = vpop.permute.xlu0 %4024
        %4026 = vrot.lane.b32.xlu0 %v4007, 96
        %v4027 = vpop.permute.xlu0 %4026
        %4028 = vrot.lane.b32.xlu0 %v4021, 96
        %v4029 = vpop.permute.xlu0 %4028
        %vm4034 = vcmask 1048320
        %4035 = vst.msk [vmem:[%s166] sm:$0xff] %vm4034, %v4023
        %4036 = vst.msk [vmem:[%s166 + $0x20] sm:$0xff] %vm4034, %v4025
        %4037 = vst.msk [vmem:[%s166 + $0x40] sm:$0xff] %vm4034, %v4027
        %4038 = vst.msk [vmem:[%s166 + $0x60] sm:$0xff] %vm4034, %v4029
        %v4039 = vrot.slane %v1820, 4
        %v4040 = vrot.slane %v1881, 3
        %v4041 = vsel %vm3750, %v4040, %v4039
        %v4042 = vrot.slane %v1942, 2
        %v4043 = vsel %vm3753, %v4042, %v4041
        %v4044 = vrot.slane %v2003, 1
        %v4045 = vsel %vm3756, %v4044, %v4043
        %v4046 = vsel %vm3759, %v2064, %v4045
        %v4047 = vrot.slane %v2125, 7
        %v4048 = vsel %vm3762, %v4047, %v4046
        %v4049 = vrot.slane %v2186, 6
        %v4050 = vsel %vm3765, %v4049, %v4048
        %v4051 = vrot.slane %v2247, 5
        %v4052 = vsel %vm3768, %v4051, %v4050
        %v4053 = vrot.slane %v2308, 4
        %v4054 = vrot.slane %v2369, 3
        %v4055 = vsel %vm3750, %v4054, %v4053
        %v4056 = vrot.slane %v2430, 2
        %v4057 = vsel %vm3753, %v4056, %v4055
        %v4058 = vrot.slane %v2491, 1
        %v4059 = vsel %vm3756, %v4058, %v4057
        %v4060 = vsel %vm3759, %v2552, %v4059
        %v4061 = vrot.slane %v2613, 7
        %v4062 = vsel %vm3762, %v4061, %v4060
        %v4063 = vrot.slane %v2674, 6
        %v4064 = vsel %vm3765, %v4063, %v4062
        %v4065 = vrot.slane %v2735, 5
        %v4066 = vsel %vm3768, %v4065, %v4064
        %v4067 = vrot.slane %v2796, 4
        %v4068 = vrot.slane %v2857, 3
        %v4069 = vsel %vm3750, %v4068, %v4067
        %v4070 = vrot.slane %v2918, 2
        %v4071 = vsel %vm3753, %v4070, %v4069
        %v4072 = vrot.slane %v2979, 1
        %v4073 = vsel %vm3756, %v4072, %v4071
        %v4074 = vsel %vm3759, %v3040, %v4073
        %v4075 = vrot.slane %v3101, 7
        %v4076 = vsel %vm3762, %v4075, %v4074
        %v4077 = vrot.slane %v3162, 6
        %v4078 = vsel %vm3765, %v4077, %v4076
        %v4079 = vrot.slane %v3223, 5
        %v4080 = vsel %vm3768, %v4079, %v4078
        %v4081 = vrot.slane %v3284, 4
        %v4082 = vrot.slane %v3345, 3
        %v4083 = vsel %vm3750, %v4082, %v4081
        %v4084 = vrot.slane %v3406, 2
        %v4085 = vsel %vm3753, %v4084, %v4083
        %v4086 = vrot.slane %v3467, 1
        %v4087 = vsel %vm3756, %v4086, %v4085
        %v4088 = vsel %vm3759, %v3528, %v4087
        %v4089 = vrot.slane %v3589, 7
        %v4090 = vsel %vm3762, %v4089, %v4088
        %v4091 = vrot.slane %v3650, 6
        %v4092 = vsel %vm3765, %v4091, %v4090
        %v4093 = vrot.slane %v3711, 5
        %v4094 = vsel %vm3768, %v4093, %v4092
        %4099 = vst.msk [vmem:[%s166 + $0x8] sm:$0xff] %vm416, %v4052
        %4100 = vst.msk [vmem:[%s166 + $0x28] sm:$0xff] %vm416, %v4066
        %4101 = vst.msk [vmem:[%s166 + $0x48] sm:$0xff] %vm416, %v4080
        %4102 = vst.msk [vmem:[%s166 + $0x68] sm:$0xff] %vm416, %v4094
        %v4103 = vrot.slane %v1820, 5
        %v4104 = vrot.slane %v1881, 4
        %v4105 = vsel %vm3750, %v4104, %v4103
        %v4106 = vrot.slane %v1942, 3
        %v4107 = vsel %vm3753, %v4106, %v4105
        %v4108 = vrot.slane %v2003, 2
        %v4109 = vsel %vm3756, %v4108, %v4107
        %v4110 = vrot.slane %v2064, 1
        %v4111 = vsel %vm3759, %v4110, %v4109
        %v4112 = vsel %vm3762, %v2125, %v4111
        %v4113 = vrot.slane %v2186, 7
        %v4114 = vsel %vm3765, %v4113, %v4112
        %v4115 = vrot.slane %v2247, 6
        %v4116 = vsel %vm3768, %v4115, %v4114
        %v4117 = vrot.slane %v2308, 5
        %v4118 = vrot.slane %v2369, 4
        %v4119 = vsel %vm3750, %v4118, %v4117
        %v4120 = vrot.slane %v2430, 3
        %v4121 = vsel %vm3753, %v4120, %v4119
        %v4122 = vrot.slane %v2491, 2
        %v4123 = vsel %vm3756, %v4122, %v4121
        %v4124 = vrot.slane %v2552, 1
        %v4125 = vsel %vm3759, %v4124, %v4123
        %v4126 = vsel %vm3762, %v2613, %v4125
        %v4127 = vrot.slane %v2674, 7
        %v4128 = vsel %vm3765, %v4127, %v4126
        %v4129 = vrot.slane %v2735, 6
        %v4130 = vsel %vm3768, %v4129, %v4128
        %v4131 = vrot.slane %v2796, 5
        %v4132 = vrot.slane %v2857, 4
        %v4133 = vsel %vm3750, %v4132, %v4131
        %v4134 = vrot.slane %v2918, 3
        %v4135 = vsel %vm3753, %v4134, %v4133
        %v4136 = vrot.slane %v2979, 2
        %v4137 = vsel %vm3756, %v4136, %v4135
        %v4138 = vrot.slane %v3040, 1
        %v4139 = vsel %vm3759, %v4138, %v4137
        %v4140 = vsel %vm3762, %v3101, %v4139
        %v4141 = vrot.slane %v3162, 7
        %v4142 = vsel %vm3765, %v4141, %v4140
        %v4143 = vrot.slane %v3223, 6
        %v4144 = vsel %vm3768, %v4143, %v4142
        %v4145 = vrot.slane %v3284, 5
        %v4146 = vrot.slane %v3345, 4
        %v4147 = vsel %vm3750, %v4146, %v4145
        %v4148 = vrot.slane %v3406, 3
        %v4149 = vsel %vm3753, %v4148, %v4147
        %v4150 = vrot.slane %v3467, 2
        %v4151 = vsel %vm3756, %v4150, %v4149
        %v4152 = vrot.slane %v3528, 1
        %v4153 = vsel %vm3759, %v4152, %v4151
        %v4154 = vsel %vm3762, %v3589, %v4153
        %v4155 = vrot.slane %v3650, 7
        %v4156 = vsel %vm3765, %v4155, %v4154
        %v4157 = vrot.slane %v3711, 6
        %v4158 = vsel %vm3768, %v4157, %v4156
        %4159 = vrot.lane.b32.xlu0 %v4116, 32
        %v4160 = vpop.permute.xlu0 %4159
        %4161 = vrot.lane.b32.xlu0 %v4130, 32
        %v4162 = vpop.permute.xlu0 %4161
        %4163 = vrot.lane.b32.xlu0 %v4144, 32
        %v4164 = vpop.permute.xlu0 %4163
        %4165 = vrot.lane.b32.xlu0 %v4158, 32
        %v4166 = vpop.permute.xlu0 %4165
        %4171 = vst.msk [vmem:[%s166 + $0x8] sm:$0xff] %vm3888, %v4160
        %4172 = vst.msk [vmem:[%s166 + $0x28] sm:$0xff] %vm3888, %v4162
        %4173 = vst.msk [vmem:[%s166 + $0x48] sm:$0xff] %vm3888, %v4164
        %4174 = vst.msk [vmem:[%s166 + $0x68] sm:$0xff] %vm3888, %v4166
        %v4175 = vrot.slane %v1820, 6
        %v4176 = vrot.slane %v1881, 5
        %v4177 = vsel %vm3750, %v4176, %v4175
        %v4178 = vrot.slane %v1942, 4
        %v4179 = vsel %vm3753, %v4178, %v4177
        %v4180 = vrot.slane %v2003, 3
        %v4181 = vsel %vm3756, %v4180, %v4179
        %v4182 = vrot.slane %v2064, 2
        %v4183 = vsel %vm3759, %v4182, %v4181
        %v4184 = vrot.slane %v2125, 1
        %v4185 = vsel %vm3762, %v4184, %v4183
        %v4186 = vsel %vm3765, %v2186, %v4185
        %v4187 = vrot.slane %v2247, 7
        %v4188 = vsel %vm3768, %v4187, %v4186
        %v4189 = vrot.slane %v2308, 6
        %v4190 = vrot.slane %v2369, 5
        %v4191 = vsel %vm3750, %v4190, %v4189
        %v4192 = vrot.slane %v2430, 4
        %v4193 = vsel %vm3753, %v4192, %v4191
        %v4194 = vrot.slane %v2491, 3
        %v4195 = vsel %vm3756, %v4194, %v4193
        %v4196 = vrot.slane %v2552, 2
        %v4197 = vsel %vm3759, %v4196, %v4195
        %v4198 = vrot.slane %v2613, 1
        %v4199 = vsel %vm3762, %v4198, %v4197
        %v4200 = vsel %vm3765, %v2674, %v4199
        %v4201 = vrot.slane %v2735, 7
        %v4202 = vsel %vm3768, %v4201, %v4200
        %v4203 = vrot.slane %v2796, 6
        %v4204 = vrot.slane %v2857, 5
        %v4205 = vsel %vm3750, %v4204, %v4203
        %v4206 = vrot.slane %v2918, 4
        %v4207 = vsel %vm3753, %v4206, %v4205
        %v4208 = vrot.slane %v2979, 3
        %v4209 = vsel %vm3756, %v4208, %v4207
        %v4210 = vrot.slane %v3040, 2
        %v4211 = vsel %vm3759, %v4210, %v4209
        %v4212 = vrot.slane %v3101, 1
        %v4213 = vsel %vm3762, %v4212, %v4211
        %v4214 = vsel %vm3765, %v3162, %v4213
        %v4215 = vrot.slane %v3223, 7
        %v4216 = vsel %vm3768, %v4215, %v4214
        %v4217 = vrot.slane %v3284, 6
        %v4218 = vrot.slane %v3345, 5
        %v4219 = vsel %vm3750, %v4218, %v4217
        %v4220 = vrot.slane %v3406, 4
        %v4221 = vsel %vm3753, %v4220, %v4219
        %v4222 = vrot.slane %v3467, 3
        %v4223 = vsel %vm3756, %v4222, %v4221
        %v4224 = vrot.slane %v3528, 2
        %v4225 = vsel %vm3759, %v4224, %v4223
        %v4226 = vrot.slane %v3589, 1
        %v4227 = vsel %vm3762, %v4226, %v4225
        %v4228 = vsel %vm3765, %v3650, %v4227
        %v4229 = vrot.slane %v3711, 7
        %v4230 = vsel %vm3768, %v4229, %v4228
        %4231 = vrot.lane.b32.xlu0 %v4188, 64
        %v4232 = vpop.permute.xlu0 %4231
        %4233 = vrot.lane.b32.xlu0 %v4202, 64
        %v4234 = vpop.permute.xlu0 %4233
        %4235 = vrot.lane.b32.xlu0 %v4216, 64
        %v4236 = vpop.permute.xlu0 %4235
        %4237 = vrot.lane.b32.xlu0 %v4230, 64
        %v4238 = vpop.permute.xlu0 %4237
        %4243 = vst.msk [vmem:[%s166 + $0x8] sm:$0xff] %vm3961, %v4232
        %4244 = vst.msk [vmem:[%s166 + $0x28] sm:$0xff] %vm3961, %v4234
        %4245 = vst.msk [vmem:[%s166 + $0x48] sm:$0xff] %vm3961, %v4236
        %4246 = vst.msk [vmem:[%s166 + $0x68] sm:$0xff] %vm3961, %v4238
        %v4247 = vrot.slane %v1820, 7
        %v4248 = vrot.slane %v1881, 6
        %v4249 = vsel %vm3750, %v4248, %v4247
        %v4250 = vrot.slane %v1942, 5
        %v4251 = vsel %vm3753, %v4250, %v4249
        %v4252 = vrot.slane %v2003, 4
        %v4253 = vsel %vm3756, %v4252, %v4251
        %v4254 = vrot.slane %v2064, 3
        %v4255 = vsel %vm3759, %v4254, %v4253
        %v4256 = vrot.slane %v2125, 2
        %v4257 = vsel %vm3762, %v4256, %v4255
        %v4258 = vrot.slane %v2186, 1
        %v4259 = vsel %vm3765, %v4258, %v4257
        %v4260 = vsel %vm3768, %v2247, %v4259
        %v4261 = vrot.slane %v2308, 7
        %v4262 = vrot.slane %v2369, 6
        %v4263 = vsel %vm3750, %v4262, %v4261
        %v4264 = vrot.slane %v2430, 5
        %v4265 = vsel %vm3753, %v4264, %v4263
        %v4266 = vrot.slane %v2491, 4
        %v4267 = vsel %vm3756, %v4266, %v4265
        %v4268 = vrot.slane %v2552, 3
        %v4269 = vsel %vm3759, %v4268, %v4267
        %v4270 = vrot.slane %v2613, 2
        %v4271 = vsel %vm3762, %v4270, %v4269
        %v4272 = vrot.slane %v2674, 1
        %v4273 = vsel %vm3765, %v4272, %v4271
        %v4274 = vsel %vm3768, %v2735, %v4273
        %v4275 = vrot.slane %v2796, 7
        %v4276 = vrot.slane %v2857, 6
        %v4277 = vsel %vm3750, %v4276, %v4275
        %v4278 = vrot.slane %v2918, 5
        %v4279 = vsel %vm3753, %v4278, %v4277
        %v4280 = vrot.slane %v2979, 4
        %v4281 = vsel %vm3756, %v4280, %v4279
        %v4282 = vrot.slane %v3040, 3
        %v4283 = vsel %vm3759, %v4282, %v4281
        %v4284 = vrot.slane %v3101, 2
        %v4285 = vsel %vm3762, %v4284, %v4283
        %v4286 = vrot.slane %v3162, 1
        %v4287 = vsel %vm3765, %v4286, %v4285
        %v4288 = vsel %vm3768, %v3223, %v4287
        %v4289 = vrot.slane %v3284, 7
        %v4290 = vrot.slane %v3345, 6
        %v4291 = vsel %vm3750, %v4290, %v4289
        %v4292 = vrot.slane %v3406, 5
        %v4293 = vsel %vm3753, %v4292, %v4291
        %v4294 = vrot.slane %v3467, 4
        %v4295 = vsel %vm3756, %v4294, %v4293
        %v4296 = vrot.slane %v3528, 3
        %v4297 = vsel %vm3759, %v4296, %v4295
        %v4298 = vrot.slane %v3589, 2
        %v4299 = vsel %vm3762, %v4298, %v4297
        %v4300 = vrot.slane %v3650, 1
        %v4301 = vsel %vm3765, %v4300, %v4299
        %v4302 = vsel %vm3768, %v3711, %v4301
        %4303 = vrot.lane.b32.xlu0 %v4260, 96
        %v4304 = vpop.permute.xlu0 %4303
        %4305 = vrot.lane.b32.xlu0 %v4274, 96
        %v4306 = vpop.permute.xlu0 %4305
        %4307 = vrot.lane.b32.xlu0 %v4288, 96
        %v4308 = vpop.permute.xlu0 %4307
        %4309 = vrot.lane.b32.xlu0 %v4302, 96
        %v4310 = vpop.permute.xlu0 %4309
        %4315 = vst.msk [vmem:[%s166 + $0x8] sm:$0xff] %vm4034, %v4304
        %4316 = vst.msk [vmem:[%s166 + $0x28] sm:$0xff] %vm4034, %v4306
        %4317 = vst.msk [vmem:[%s166 + $0x48] sm:$0xff] %vm4034, %v4308
        %4318 = vst.msk [vmem:[%s166 + $0x68] sm:$0xff] %vm4034, %v4310
        %v4351 = vrot.slane %v1884, 7
        %v4352 = vsel %vm3750, %v4351, %v1823
        %v4353 = vrot.slane %v1945, 6
        %v4354 = vsel %vm3753, %v4353, %v4352
        %v4355 = vrot.slane %v2006, 5
        %v4356 = vsel %vm3756, %v4355, %v4354
        %v4357 = vrot.slane %v2067, 4
        %v4358 = vsel %vm3759, %v4357, %v4356
        %v4359 = vrot.slane %v2128, 3
        %v4360 = vsel %vm3762, %v4359, %v4358
        %v4361 = vrot.slane %v2189, 2
        %v4362 = vsel %vm3765, %v4361, %v4360
        %v4363 = vrot.slane %v2250, 1
        %v4364 = vsel %vm3768, %v4363, %v4362
        %v4365 = vrot.slane %v2372, 7
        %v4366 = vsel %vm3750, %v4365, %v2311
        %v4367 = vrot.slane %v2433, 6
        %v4368 = vsel %vm3753, %v4367, %v4366
        %v4369 = vrot.slane %v2494, 5
        %v4370 = vsel %vm3756, %v4369, %v4368
        %v4371 = vrot.slane %v2555, 4
        %v4372 = vsel %vm3759, %v4371, %v4370
        %v4373 = vrot.slane %v2616, 3
        %v4374 = vsel %vm3762, %v4373, %v4372
        %v4375 = vrot.slane %v2677, 2
        %v4376 = vsel %vm3765, %v4375, %v4374
        %v4377 = vrot.slane %v2738, 1
        %v4378 = vsel %vm3768, %v4377, %v4376
        %v4379 = vrot.slane %v2860, 7
        %v4380 = vsel %vm3750, %v4379, %v2799
        %v4381 = vrot.slane %v2921, 6
        %v4382 = vsel %vm3753, %v4381, %v4380
        %v4383 = vrot.slane %v2982, 5
        %v4384 = vsel %vm3756, %v4383, %v4382
        %v4385 = vrot.slane %v3043, 4
        %v4386 = vsel %vm3759, %v4385, %v4384
        %v4387 = vrot.slane %v3104, 3
        %v4388 = vsel %vm3762, %v4387, %v4386
        %v4389 = vrot.slane %v3165, 2
        %v4390 = vsel %vm3765, %v4389, %v4388
        %v4391 = vrot.slane %v3226, 1
        %v4392 = vsel %vm3768, %v4391, %v4390
        %v4393 = vrot.slane %v3348, 7
        %v4394 = vsel %vm3750, %v4393, %v3287
        %v4395 = vrot.slane %v3409, 6
        %v4396 = vsel %vm3753, %v4395, %v4394
        %v4397 = vrot.slane %v3470, 5
        %v4398 = vsel %vm3756, %v4397, %v4396
        %v4399 = vrot.slane %v3531, 4
        %v4400 = vsel %vm3759, %v4399, %v4398
        %v4401 = vrot.slane %v3592, 3
        %v4402 = vsel %vm3762, %v4401, %v4400
        %v4403 = vrot.slane %v3653, 2
        %v4404 = vsel %vm3765, %v4403, %v4402
        %v4405 = vrot.slane %v3714, 1
        %v4406 = vsel %vm3768, %v4405, %v4404
        %4411 = vst.msk [vmem:[%s166 + $0x10] sm:$0xff] %vm416, %v4364
        %4412 = vst.msk [vmem:[%s166 + $0x30] sm:$0xff] %vm416, %v4378
        %4413 = vst.msk [vmem:[%s166 + $0x50] sm:$0xff] %vm416, %v4392
        %4414 = vst.msk [vmem:[%s166 + $0x70] sm:$0xff] %vm416, %v4406
        %v4415 = vrot.slane %v1823, 1
        %v4416 = vsel %vm3750, %v1884, %v4415
        %v4417 = vrot.slane %v1945, 7
        %v4418 = vsel %vm3753, %v4417, %v4416
        %v4419 = vrot.slane %v2006, 6
        %v4420 = vsel %vm3756, %v4419, %v4418
        %v4421 = vrot.slane %v2067, 5
        %v4422 = vsel %vm3759, %v4421, %v4420
        %v4423 = vrot.slane %v2128, 4
        %v4424 = vsel %vm3762, %v4423, %v4422
        %v4425 = vrot.slane %v2189, 3
        %v4426 = vsel %vm3765, %v4425, %v4424
        %v4427 = vrot.slane %v2250, 2
        %v4428 = vsel %vm3768, %v4427, %v4426
        %v4429 = vrot.slane %v2311, 1
        %v4430 = vsel %vm3750, %v2372, %v4429
        %v4431 = vrot.slane %v2433, 7
        %v4432 = vsel %vm3753, %v4431, %v4430
        %v4433 = vrot.slane %v2494, 6
        %v4434 = vsel %vm3756, %v4433, %v4432
        %v4435 = vrot.slane %v2555, 5
        %v4436 = vsel %vm3759, %v4435, %v4434
        %v4437 = vrot.slane %v2616, 4
        %v4438 = vsel %vm3762, %v4437, %v4436
        %v4439 = vrot.slane %v2677, 3
        %v4440 = vsel %vm3765, %v4439, %v4438
        %v4441 = vrot.slane %v2738, 2
        %v4442 = vsel %vm3768, %v4441, %v4440
        %v4443 = vrot.slane %v2799, 1
        %v4444 = vsel %vm3750, %v2860, %v4443
        %v4445 = vrot.slane %v2921, 7
        %v4446 = vsel %vm3753, %v4445, %v4444
        %v4447 = vrot.slane %v2982, 6
        %v4448 = vsel %vm3756, %v4447, %v4446
        %v4449 = vrot.slane %v3043, 5
        %v4450 = vsel %vm3759, %v4449, %v4448
        %v4451 = vrot.slane %v3104, 4
        %v4452 = vsel %vm3762, %v4451, %v4450
        %v4453 = vrot.slane %v3165, 3
        %v4454 = vsel %vm3765, %v4453, %v4452
        %v4455 = vrot.slane %v3226, 2
        %v4456 = vsel %vm3768, %v4455, %v4454
        %v4457 = vrot.slane %v3287, 1
        %v4458 = vsel %vm3750, %v3348, %v4457
        %v4459 = vrot.slane %v3409, 7
        %v4460 = vsel %vm3753, %v4459, %v4458
        %v4461 = vrot.slane %v3470, 6
        %v4462 = vsel %vm3756, %v4461, %v4460
        %v4463 = vrot.slane %v3531, 5
        %v4464 = vsel %vm3759, %v4463, %v4462
        %v4465 = vrot.slane %v3592, 4
        %v4466 = vsel %vm3762, %v4465, %v4464
        %v4467 = vrot.slane %v3653, 3
        %v4468 = vsel %vm3765, %v4467, %v4466
        %v4469 = vrot.slane %v3714, 2
        %v4470 = vsel %vm3768, %v4469, %v4468
        %4471 = vrot.lane.b32.xlu0 %v4428, 32
        %v4472 = vpop.permute.xlu0 %4471
        %4473 = vrot.lane.b32.xlu0 %v4442, 32
        %v4474 = vpop.permute.xlu0 %4473
        %4475 = vrot.lane.b32.xlu0 %v4456, 32
        %v4476 = vpop.permute.xlu0 %4475
        %4477 = vrot.lane.b32.xlu0 %v4470, 32
        %v4478 = vpop.permute.xlu0 %4477
        %4483 = vst.msk [vmem:[%s166 + $0x10] sm:$0xff] %vm3888, %v4472
        %4484 = vst.msk [vmem:[%s166 + $0x30] sm:$0xff] %vm3888, %v4474
        %4485 = vst.msk [vmem:[%s166 + $0x50] sm:$0xff] %vm3888, %v4476
        %4486 = vst.msk [vmem:[%s166 + $0x70] sm:$0xff] %vm3888, %v4478
        %v4487 = vrot.slane %v1823, 2
        %v4488 = vrot.slane %v1884, 1
        %v4489 = vsel %vm3750, %v4488, %v4487
        %v4490 = vsel %vm3753, %v1945, %v4489
        %v4491 = vrot.slane %v2006, 7
        %v4492 = vsel %vm3756, %v4491, %v4490
        %v4493 = vrot.slane %v2067, 6
        %v4494 = vsel %vm3759, %v4493, %v4492
        %v4495 = vrot.slane %v2128, 5
        %v4496 = vsel %vm3762, %v4495, %v4494
        %v4497 = vrot.slane %v2189, 4
        %v4498 = vsel %vm3765, %v4497, %v4496
        %v4499 = vrot.slane %v2250, 3
        %v4500 = vsel %vm3768, %v4499, %v4498
        %v4501 = vrot.slane %v2311, 2
        %v4502 = vrot.slane %v2372, 1
        %v4503 = vsel %vm3750, %v4502, %v4501
        %v4504 = vsel %vm3753, %v2433, %v4503
        %v4505 = vrot.slane %v2494, 7
        %v4506 = vsel %vm3756, %v4505, %v4504
        %v4507 = vrot.slane %v2555, 6
        %v4508 = vsel %vm3759, %v4507, %v4506
        %v4509 = vrot.slane %v2616, 5
        %v4510 = vsel %vm3762, %v4509, %v4508
        %v4511 = vrot.slane %v2677, 4
        %v4512 = vsel %vm3765, %v4511, %v4510
        %v4513 = vrot.slane %v2738, 3
        %v4514 = vsel %vm3768, %v4513, %v4512
        %v4515 = vrot.slane %v2799, 2
        %v4516 = vrot.slane %v2860, 1
        %v4517 = vsel %vm3750, %v4516, %v4515
        %v4518 = vsel %vm3753, %v2921, %v4517
        %v4519 = vrot.slane %v2982, 7
        %v4520 = vsel %vm3756, %v4519, %v4518
        %v4521 = vrot.slane %v3043, 6
        %v4522 = vsel %vm3759, %v4521, %v4520
        %v4523 = vrot.slane %v3104, 5
        %v4524 = vsel %vm3762, %v4523, %v4522
        %v4525 = vrot.slane %v3165, 4
        %v4526 = vsel %vm3765, %v4525, %v4524
        %v4527 = vrot.slane %v3226, 3
        %v4528 = vsel %vm3768, %v4527, %v4526
        %v4529 = vrot.slane %v3287, 2
        %v4530 = vrot.slane %v3348, 1
        %v4531 = vsel %vm3750, %v4530, %v4529
        %v4532 = vsel %vm3753, %v3409, %v4531
        %v4533 = vrot.slane %v3470, 7
        %v4534 = vsel %vm3756, %v4533, %v4532
        %v4535 = vrot.slane %v3531, 6
        %v4536 = vsel %vm3759, %v4535, %v4534
        %v4537 = vrot.slane %v3592, 5
        %v4538 = vsel %vm3762, %v4537, %v4536
        %v4539 = vrot.slane %v3653, 4
        %v4540 = vsel %vm3765, %v4539, %v4538
        %v4541 = vrot.slane %v3714, 3
        %v4542 = vsel %vm3768, %v4541, %v4540
        %4543 = vrot.lane.b32.xlu0 %v4500, 64
        %v4544 = vpop.permute.xlu0 %4543
        %4545 = vrot.lane.b32.xlu0 %v4514, 64
        %v4546 = vpop.permute.xlu0 %4545
        %4547 = vrot.lane.b32.xlu0 %v4528, 64
        %v4548 = vpop.permute.xlu0 %4547
        %4549 = vrot.lane.b32.xlu0 %v4542, 64
        %v4550 = vpop.permute.xlu0 %4549
        %4555 = vst.msk [vmem:[%s166 + $0x10] sm:$0xff] %vm3961, %v4544
        %4556 = vst.msk [vmem:[%s166 + $0x30] sm:$0xff] %vm3961, %v4546
        %4557 = vst.msk [vmem:[%s166 + $0x50] sm:$0xff] %vm3961, %v4548
        %4558 = vst.msk [vmem:[%s166 + $0x70] sm:$0xff] %vm3961, %v4550
        %v4559 = vrot.slane %v1823, 3
        %v4560 = vrot.slane %v1884, 2
        %v4561 = vsel %vm3750, %v4560, %v4559
        %v4562 = vrot.slane %v1945, 1
        %v4563 = vsel %vm3753, %v4562, %v4561
        %v4564 = vsel %vm3756, %v2006, %v4563
        %v4565 = vrot.slane %v2067, 7
        %v4566 = vsel %vm3759, %v4565, %v4564
        %v4567 = vrot.slane %v2128, 6
        %v4568 = vsel %vm3762, %v4567, %v4566
        %v4569 = vrot.slane %v2189, 5
        %v4570 = vsel %vm3765, %v4569, %v4568
        %v4571 = vrot.slane %v2250, 4
        %v4572 = vsel %vm3768, %v4571, %v4570
        %v4573 = vrot.slane %v2311, 3
        %v4574 = vrot.slane %v2372, 2
        %v4575 = vsel %vm3750, %v4574, %v4573
        %v4576 = vrot.slane %v2433, 1
        %v4577 = vsel %vm3753, %v4576, %v4575
        %v4578 = vsel %vm3756, %v2494, %v4577
        %v4579 = vrot.slane %v2555, 7
        %v4580 = vsel %vm3759, %v4579, %v4578
        %v4581 = vrot.slane %v2616, 6
        %v4582 = vsel %vm3762, %v4581, %v4580
        %v4583 = vrot.slane %v2677, 5
        %v4584 = vsel %vm3765, %v4583, %v4582
        %v4585 = vrot.slane %v2738, 4
        %v4586 = vsel %vm3768, %v4585, %v4584
        %v4587 = vrot.slane %v2799, 3
        %v4588 = vrot.slane %v2860, 2
        %v4589 = vsel %vm3750, %v4588, %v4587
        %v4590 = vrot.slane %v2921, 1
        %v4591 = vsel %vm3753, %v4590, %v4589
        %v4592 = vsel %vm3756, %v2982, %v4591
        %v4593 = vrot.slane %v3043, 7
        %v4594 = vsel %vm3759, %v4593, %v4592
        %v4595 = vrot.slane %v3104, 6
        %v4596 = vsel %vm3762, %v4595, %v4594
        %v4597 = vrot.slane %v3165, 5
        %v4598 = vsel %vm3765, %v4597, %v4596
        %v4599 = vrot.slane %v3226, 4
        %v4600 = vsel %vm3768, %v4599, %v4598
        %v4601 = vrot.slane %v3287, 3
        %v4602 = vrot.slane %v3348, 2
        %v4603 = vsel %vm3750, %v4602, %v4601
        %v4604 = vrot.slane %v3409, 1
        %v4605 = vsel %vm3753, %v4604, %v4603
        %v4606 = vsel %vm3756, %v3470, %v4605
        %v4607 = vrot.slane %v3531, 7
        %v4608 = vsel %vm3759, %v4607, %v4606
        %v4609 = vrot.slane %v3592, 6
        %v4610 = vsel %vm3762, %v4609, %v4608
        %v4611 = vrot.slane %v3653, 5
        %v4612 = vsel %vm3765, %v4611, %v4610
        %v4613 = vrot.slane %v3714, 4
        %v4614 = vsel %vm3768, %v4613, %v4612
        %4615 = vrot.lane.b32.xlu0 %v4572, 96
        %v4616 = vpop.permute.xlu0 %4615
        %4617 = vrot.lane.b32.xlu0 %v4586, 96
        %v4618 = vpop.permute.xlu0 %4617
        %4619 = vrot.lane.b32.xlu0 %v4600, 96
        %v4620 = vpop.permute.xlu0 %4619
        %4621 = vrot.lane.b32.xlu0 %v4614, 96
        %v4622 = vpop.permute.xlu0 %4621
        %4627 = vst.msk [vmem:[%s166 + $0x10] sm:$0xff] %vm4034, %v4616
        %4628 = vst.msk [vmem:[%s166 + $0x30] sm:$0xff] %vm4034, %v4618
        %4629 = vst.msk [vmem:[%s166 + $0x50] sm:$0xff] %vm4034, %v4620
        %4630 = vst.msk [vmem:[%s166 + $0x70] sm:$0xff] %vm4034, %v4622
        %v4631 = vrot.slane %v1823, 4
        %v4632 = vrot.slane %v1884, 3
        %v4633 = vsel %vm3750, %v4632, %v4631
        %v4634 = vrot.slane %v1945, 2
        %v4635 = vsel %vm3753, %v4634, %v4633
        %v4636 = vrot.slane %v2006, 1
        %v4637 = vsel %vm3756, %v4636, %v4635
        %v4638 = vsel %vm3759, %v2067, %v4637
        %v4639 = vrot.slane %v2128, 7
        %v4640 = vsel %vm3762, %v4639, %v4638
        %v4641 = vrot.slane %v2189, 6
        %v4642 = vsel %vm3765, %v4641, %v4640
        %v4643 = vrot.slane %v2250, 5
        %v4644 = vsel %vm3768, %v4643, %v4642
        %v4645 = vrot.slane %v2311, 4
        %v4646 = vrot.slane %v2372, 3
        %v4647 = vsel %vm3750, %v4646, %v4645
        %v4648 = vrot.slane %v2433, 2
        %v4649 = vsel %vm3753, %v4648, %v4647
        %v4650 = vrot.slane %v2494, 1
        %v4651 = vsel %vm3756, %v4650, %v4649
        %v4652 = vsel %vm3759, %v2555, %v4651
        %v4653 = vrot.slane %v2616, 7
        %v4654 = vsel %vm3762, %v4653, %v4652
        %v4655 = vrot.slane %v2677, 6
        %v4656 = vsel %vm3765, %v4655, %v4654
        %v4657 = vrot.slane %v2738, 5
        %v4658 = vsel %vm3768, %v4657, %v4656
        %v4659 = vrot.slane %v2799, 4
        %v4660 = vrot.slane %v2860, 3
        %v4661 = vsel %vm3750, %v4660, %v4659
        %v4662 = vrot.slane %v2921, 2
        %v4663 = vsel %vm3753, %v4662, %v4661
        %v4664 = vrot.slane %v2982, 1
        %v4665 = vsel %vm3756, %v4664, %v4663
        %v4666 = vsel %vm3759, %v3043, %v4665
        %v4667 = vrot.slane %v3104, 7
        %v4668 = vsel %vm3762, %v4667, %v4666
        %v4669 = vrot.slane %v3165, 6
        %v4670 = vsel %vm3765, %v4669, %v4668
        %v4671 = vrot.slane %v3226, 5
        %v4672 = vsel %vm3768, %v4671, %v4670
        %v4673 = vrot.slane %v3287, 4
        %v4674 = vrot.slane %v3348, 3
        %v4675 = vsel %vm3750, %v4674, %v4673
        %v4676 = vrot.slane %v3409, 2
        %v4677 = vsel %vm3753, %v4676, %v4675
        %v4678 = vrot.slane %v3470, 1
        %v4679 = vsel %vm3756, %v4678, %v4677
        %v4680 = vsel %vm3759, %v3531, %v4679
        %v4681 = vrot.slane %v3592, 7
        %v4682 = vsel %vm3762, %v4681, %v4680
        %v4683 = vrot.slane %v3653, 6
        %v4684 = vsel %vm3765, %v4683, %v4682
        %v4685 = vrot.slane %v3714, 5
        %v4686 = vsel %vm3768, %v4685, %v4684
        %4691 = vst.msk [vmem:[%s166 + $0x18] sm:$0xff] %vm416, %v4644
        %4692 = vst.msk [vmem:[%s166 + $0x38] sm:$0xff] %vm416, %v4658
        %4693 = vst.msk [vmem:[%s166 + $0x58] sm:$0xff] %vm416, %v4672
        %4694 = vst.msk [vmem:[%s166 + $0x78] sm:$0xff] %vm416, %v4686
        %v4695 = vrot.slane %v1823, 5
        %v4696 = vrot.slane %v1884, 4
        %v4697 = vsel %vm3750, %v4696, %v4695
        %v4698 = vrot.slane %v1945, 3
        %v4699 = vsel %vm3753, %v4698, %v4697
        %v4700 = vrot.slane %v2006, 2
        %v4701 = vsel %vm3756, %v4700, %v4699
        %v4702 = vrot.slane %v2067, 1
        %v4703 = vsel %vm3759, %v4702, %v4701
        %v4704 = vsel %vm3762, %v2128, %v4703
        %v4705 = vrot.slane %v2189, 7
        %v4706 = vsel %vm3765, %v4705, %v4704
        %v4707 = vrot.slane %v2250, 6
        %v4708 = vsel %vm3768, %v4707, %v4706
        %v4709 = vrot.slane %v2311, 5
        %v4710 = vrot.slane %v2372, 4
        %v4711 = vsel %vm3750, %v4710, %v4709
        %v4712 = vrot.slane %v2433, 3
        %v4713 = vsel %vm3753, %v4712, %v4711
        %v4714 = vrot.slane %v2494, 2
        %v4715 = vsel %vm3756, %v4714, %v4713
        %v4716 = vrot.slane %v2555, 1
        %v4717 = vsel %vm3759, %v4716, %v4715
        %v4718 = vsel %vm3762, %v2616, %v4717
        %v4719 = vrot.slane %v2677, 7
        %v4720 = vsel %vm3765, %v4719, %v4718
        %v4721 = vrot.slane %v2738, 6
        %v4722 = vsel %vm3768, %v4721, %v4720
        %v4723 = vrot.slane %v2799, 5
        %v4724 = vrot.slane %v2860, 4
        %v4725 = vsel %vm3750, %v4724, %v4723
        %v4726 = vrot.slane %v2921, 3
        %v4727 = vsel %vm3753, %v4726, %v4725
        %v4728 = vrot.slane %v2982, 2
        %v4729 = vsel %vm3756, %v4728, %v4727
        %v4730 = vrot.slane %v3043, 1
        %v4731 = vsel %vm3759, %v4730, %v4729
        %v4732 = vsel %vm3762, %v3104, %v4731
        %v4733 = vrot.slane %v3165, 7
        %v4734 = vsel %vm3765, %v4733, %v4732
        %v4735 = vrot.slane %v3226, 6
        %v4736 = vsel %vm3768, %v4735, %v4734
        %v4737 = vrot.slane %v3287, 5
        %v4738 = vrot.slane %v3348, 4
        %v4739 = vsel %vm3750, %v4738, %v4737
        %v4740 = vrot.slane %v3409, 3
        %v4741 = vsel %vm3753, %v4740, %v4739
        %v4742 = vrot.slane %v3470, 2
        %v4743 = vsel %vm3756, %v4742, %v4741
        %v4744 = vrot.slane %v3531, 1
        %v4745 = vsel %vm3759, %v4744, %v4743
        %v4746 = vsel %vm3762, %v3592, %v4745
        %v4747 = vrot.slane %v3653, 7
        %v4748 = vsel %vm3765, %v4747, %v4746
        %v4749 = vrot.slane %v3714, 6
        %v4750 = vsel %vm3768, %v4749, %v4748
        %4751 = vrot.lane.b32.xlu0 %v4708, 32
        %v4752 = vpop.permute.xlu0 %4751
        %4753 = vrot.lane.b32.xlu0 %v4722, 32
        %v4754 = vpop.permute.xlu0 %4753
        %4755 = vrot.lane.b32.xlu0 %v4736, 32
        %v4756 = vpop.permute.xlu0 %4755
        %4757 = vrot.lane.b32.xlu0 %v4750, 32
        %v4758 = vpop.permute.xlu0 %4757
        %4763 = vst.msk [vmem:[%s166 + $0x18] sm:$0xff] %vm3888, %v4752
        %4764 = vst.msk [vmem:[%s166 + $0x38] sm:$0xff] %vm3888, %v4754
        %4765 = vst.msk [vmem:[%s166 + $0x58] sm:$0xff] %vm3888, %v4756
        %4766 = vst.msk [vmem:[%s166 + $0x78] sm:$0xff] %vm3888, %v4758
        %v4767 = vrot.slane %v1823, 6
        %v4768 = vrot.slane %v1884, 5
        %v4769 = vsel %vm3750, %v4768, %v4767
        %v4770 = vrot.slane %v1945, 4
        %v4771 = vsel %vm3753, %v4770, %v4769
        %v4772 = vrot.slane %v2006, 3
        %v4773 = vsel %vm3756, %v4772, %v4771
        %v4774 = vrot.slane %v2067, 2
        %v4775 = vsel %vm3759, %v4774, %v4773
        %v4776 = vrot.slane %v2128, 1
        %v4777 = vsel %vm3762, %v4776, %v4775
        %v4778 = vsel %vm3765, %v2189, %v4777
        %v4779 = vrot.slane %v2250, 7
        %v4780 = vsel %vm3768, %v4779, %v4778
        %v4781 = vrot.slane %v2311, 6
        %v4782 = vrot.slane %v2372, 5
        %v4783 = vsel %vm3750, %v4782, %v4781
        %v4784 = vrot.slane %v2433, 4
        %v4785 = vsel %vm3753, %v4784, %v4783
        %v4786 = vrot.slane %v2494, 3
        %v4787 = vsel %vm3756, %v4786, %v4785
        %v4788 = vrot.slane %v2555, 2
        %v4789 = vsel %vm3759, %v4788, %v4787
        %v4790 = vrot.slane %v2616, 1
        %v4791 = vsel %vm3762, %v4790, %v4789
        %v4792 = vsel %vm3765, %v2677, %v4791
        %v4793 = vrot.slane %v2738, 7
        %v4794 = vsel %vm3768, %v4793, %v4792
        %v4795 = vrot.slane %v2799, 6
        %v4796 = vrot.slane %v2860, 5
        %v4797 = vsel %vm3750, %v4796, %v4795
        %v4798 = vrot.slane %v2921, 4
        %v4799 = vsel %vm3753, %v4798, %v4797
        %v4800 = vrot.slane %v2982, 3
        %v4801 = vsel %vm3756, %v4800, %v4799
        %v4802 = vrot.slane %v3043, 2
        %v4803 = vsel %vm3759, %v4802, %v4801
        %v4804 = vrot.slane %v3104, 1
        %v4805 = vsel %vm3762, %v4804, %v4803
        %v4806 = vsel %vm3765, %v3165, %v4805
        %v4807 = vrot.slane %v3226, 7
        %v4808 = vsel %vm3768, %v4807, %v4806
        %v4809 = vrot.slane %v3287, 6
        %v4810 = vrot.slane %v3348, 5
        %v4811 = vsel %vm3750, %v4810, %v4809
        %v4812 = vrot.slane %v3409, 4
        %v4813 = vsel %vm3753, %v4812, %v4811
        %v4814 = vrot.slane %v3470, 3
        %v4815 = vsel %vm3756, %v4814, %v4813
        %v4816 = vrot.slane %v3531, 2
        %v4817 = vsel %vm3759, %v4816, %v4815
        %v4818 = vrot.slane %v3592, 1
        %v4819 = vsel %vm3762, %v4818, %v4817
        %v4820 = vsel %vm3765, %v3653, %v4819
        %v4821 = vrot.slane %v3714, 7
        %v4822 = vsel %vm3768, %v4821, %v4820
        %4823 = vrot.lane.b32.xlu0 %v4780, 64
        %v4824 = vpop.permute.xlu0 %4823
        %4825 = vrot.lane.b32.xlu0 %v4794, 64
        %v4826 = vpop.permute.xlu0 %4825
        %4827 = vrot.lane.b32.xlu0 %v4808, 64
        %v4828 = vpop.permute.xlu0 %4827
        %4829 = vrot.lane.b32.xlu0 %v4822, 64
        %v4830 = vpop.permute.xlu0 %4829
        %4835 = vst.msk [vmem:[%s166 + $0x18] sm:$0xff] %vm3961, %v4824
        %4836 = vst.msk [vmem:[%s166 + $0x38] sm:$0xff] %vm3961, %v4826
        %4837 = vst.msk [vmem:[%s166 + $0x58] sm:$0xff] %vm3961, %v4828
        %4838 = vst.msk [vmem:[%s166 + $0x78] sm:$0xff] %vm3961, %v4830
        %v4839 = vrot.slane %v1823, 7
        %v4840 = vrot.slane %v1884, 6
        %v4841 = vsel %vm3750, %v4840, %v4839
        %v4842 = vrot.slane %v1945, 5
        %v4843 = vsel %vm3753, %v4842, %v4841
        %v4844 = vrot.slane %v2006, 4
        %v4845 = vsel %vm3756, %v4844, %v4843
        %v4846 = vrot.slane %v2067, 3
        %v4847 = vsel %vm3759, %v4846, %v4845
        %v4848 = vrot.slane %v2128, 2
        %v4849 = vsel %vm3762, %v4848, %v4847
        %v4850 = vrot.slane %v2189, 1
        %v4851 = vsel %vm3765, %v4850, %v4849
        %v4852 = vsel %vm3768, %v2250, %v4851
        %v4853 = vrot.slane %v2311, 7
        %v4854 = vrot.slane %v2372, 6
        %v4855 = vsel %vm3750, %v4854, %v4853
        %v4856 = vrot.slane %v2433, 5
        %v4857 = vsel %vm3753, %v4856, %v4855
        %v4858 = vrot.slane %v2494, 4
        %v4859 = vsel %vm3756, %v4858, %v4857
        %v4860 = vrot.slane %v2555, 3
        %v4861 = vsel %vm3759, %v4860, %v4859
        %v4862 = vrot.slane %v2616, 2
        %v4863 = vsel %vm3762, %v4862, %v4861
        %v4864 = vrot.slane %v2677, 1
        %v4865 = vsel %vm3765, %v4864, %v4863
        %v4866 = vsel %vm3768, %v2738, %v4865
        %v4867 = vrot.slane %v2799, 7
        %v4868 = vrot.slane %v2860, 6
        %v4869 = vsel %vm3750, %v4868, %v4867
        %v4870 = vrot.slane %v2921, 5
        %v4871 = vsel %vm3753, %v4870, %v4869
        %v4872 = vrot.slane %v2982, 4
        %v4873 = vsel %vm3756, %v4872, %v4871
        %v4874 = vrot.slane %v3043, 3
        %v4875 = vsel %vm3759, %v4874, %v4873
        %v4876 = vrot.slane %v3104, 2
        %v4877 = vsel %vm3762, %v4876, %v4875
        %v4878 = vrot.slane %v3165, 1
        %v4879 = vsel %vm3765, %v4878, %v4877
        %v4880 = vsel %vm3768, %v3226, %v4879
        %v4881 = vrot.slane %v3287, 7
        %v4882 = vrot.slane %v3348, 6
        %v4883 = vsel %vm3750, %v4882, %v4881
        %v4884 = vrot.slane %v3409, 5
        %v4885 = vsel %vm3753, %v4884, %v4883
        %v4886 = vrot.slane %v3470, 4
        %v4887 = vsel %vm3756, %v4886, %v4885
        %v4888 = vrot.slane %v3531, 3
        %v4889 = vsel %vm3759, %v4888, %v4887
        %v4890 = vrot.slane %v3592, 2
        %v4891 = vsel %vm3762, %v4890, %v4889
        %v4892 = vrot.slane %v3653, 1
        %v4893 = vsel %vm3765, %v4892, %v4891
        %v4894 = vsel %vm3768, %v3714, %v4893
        %4895 = vrot.lane.b32.xlu0 %v4852, 96
        %v4896 = vpop.permute.xlu0 %4895
        %4897 = vrot.lane.b32.xlu0 %v4866, 96
        %v4898 = vpop.permute.xlu0 %4897
        %4899 = vrot.lane.b32.xlu0 %v4880, 96
        %v4900 = vpop.permute.xlu0 %4899
        %4901 = vrot.lane.b32.xlu0 %v4894, 96
        %v4902 = vpop.permute.xlu0 %4901
        %4907 = vst.msk [vmem:[%s166 + $0x18] sm:$0xff] %vm4034, %v4896
        %4908 = vst.msk [vmem:[%s166 + $0x38] sm:$0xff] %vm4034, %v4898
        %4909 = vst.msk [vmem:[%s166 + $0x58] sm:$0xff] %vm4034, %v4900
        %4910 = vst.msk [vmem:[%s166 + $0x78] sm:$0xff] %vm4034, %v4902
        %s4911 = sand.u32 %s93, 1
        %s4912 = scalar_lea.sflag [#allocation3], %s4911
        %s4913 = sand.u32 %s93, 1
        %s4914 = smul.addr %s4913, 128
        %s4915 = scalar_lea.vmem [#allocation2], %s4914
        // Predicated region
        $region33: #{tpu_custom_call.1} parent=31 // pred_check
          %p4916 = pneg %p103
        $region34: #{tpu_custom_call.1} parent=31 // pred_check_branch
          %4918 = sbr.rel (%p4916) target = $region36
        $region35: #{tpu_custom_call.1} parent=31 // pred_region
          %s4919 = smul.u32 4, %s17
          %s4921 = ssub.s32 2048, 2048
          %4922 = vsyncadd %s4912, %s4921
          %s4923 = smul.addr %s4919, 4
          %s4924 = smul.addr %s4923, 128
          %s4925 = scalar_lea.hbm %s3, %s4924
          %s4926 = sshll.u32 %s4915, 4
          %s4927 = int_to_ptr.vmem [resolvable:$true] %s4926
          %4932 = dma.vmem_to_hbm [thread:$0]  %s4927, 2048, %s4925, %s4912, 512, 512, 32
        $region36: #{tpu_custom_call.1} parent=31 // pred_fallthru
          _
      $region32: #{tpu_custom_call.1} parent=5 // pred_fallthru
        _
      %p4933 = scmp.le.s32.totalorder 2, %s12
      // Predicated region
      $region37: #{tpu_custom_call.1} parent=5 // pred_check
        %p4934 = pneg %p4933
      $region38: #{tpu_custom_call.1} parent=5 // pred_check_branch
        %4936 = sbr.rel (%p4934) target = $region40
      $region39: #{tpu_custom_call.1} parent=5 // pred_region
        %s4937 = ssub.s32 %s12, 2
        // Predicated region
        $region41: #{tpu_custom_call.1} parent=39 // pred_check
          %p4938 = pneg %p109
        $region42: #{tpu_custom_call.1} parent=39 // pred_check_branch
          %4940 = sbr.rel (%p4938) target = $region44
        $region43: #{tpu_custom_call.1} parent=39 // pred_region
          %s4941 = sand.u32 %s94, 1
          %s4942 = scalar_lea.sflag [#allocation3], %s4941
          %s4943 = sand.u32 %s94, 1
          %s4944 = smul.addr %s4943, 128
          %s4945 = scalar_lea.vmem [#allocation2], %s4944
          %4946 = dma.done %s4942, 2048
        $region44: #{tpu_custom_call.1} parent=39 // pred_fallthru
          _
      $region40: #{tpu_custom_call.1} parent=5 // pred_fallthru
        _
    $region6: #{tpu_custom_call.1} parent=1 // loop_footer
      %s16 = sadd.s32 1, %s12
    $region7: #{tpu_custom_call.1} parent=1 // loop_footer_branch
      %11 = sbr.rel target = $region3
    $region8: #{tpu_custom_call.1} parent=1 // loop_exit
      _
    %4947 = vsyncpa [#allocation3], 1
    %s4948 = scalar_lea.sflag [#allocation3], 1
    %4949 = vsyncpa %s4948, 1

</llo_original>
